<compile_context>
chip_gen: v5e
topology: v5e:2x2
jax: 0.10.0
libtpu: 0.0.40
codegen_flags: <defaults>
</compile_context>

<pallas_src>
import math

import jax
import jax.numpy as jnp
from jax import lax
from jax.experimental import pallas as pl
from jax.experimental.pallas import tpu as pltpu

# ---- toy config consistent with the module -----------------------------------
B = 2          # batch
T = 8          # sequence length (<= block_size)
C = 32         # n_embd
N_HEAD = 4     # n_head
DROPOUT = 0.0  # inference: dropout layers are identity

_LANE = 128
_SUBLANE = 8


def _num_row_blocks(batch, seq_len):
    """Grid steps over the (batch*seq) token rows.

    One step on v5e/v6e (single TensorCore) and on v7x when the per-core work is
    too small to amortise per-step overhead + duplicated weight DMA (perf
    feedback: require >= 256 rows per core before splitting across the 2 cores).
    """
    rows_total = batch * seq_len
    try:
        kind = jax.devices()[0].device_kind.lower()
    except Exception:
        kind = ""
    if ("v7" in kind and batch % 2 == 0
            and (rows_total // 2) % _SUBLANE == 0
            and (rows_total // 2) >= 256):
        return 2
    return 1


def causal_self_attention(x, w_attn, b_attn, w_proj, b_proj, *,
                          n_head=N_HEAD,
                          compute_dtype=jnp.float32,
                          num_row_blocks=None):
    """CausalSelfAttention.forward (eval mode) as a single Pallas TPU kernel.

    x       : (B, T, C) float32
    w_attn  : (3C, C)   nn.Linear weight (out, in)
    b_attn  : (3C,)
    w_proj  : (C, C)
    b_proj  : (C,)
    returns : (B, T, C) float32
    """
    Bx, Tx, Cx = x.shape
    assert Cx % n_head == 0
    hd = Cx // n_head
    scale = 1.0 / math.sqrt(hd)
    rows_total = Bx * Tx
    assert rows_total % _SUBLANE == 0, "B*T must be a multiple of 8 for this kernel"

    # Lane-dense padded channel dim with at least one spare lane for the folded biases.
    c_pad = ((Cx + _LANE) // _LANE) * _LANE
    assert c_pad % hd == 0
    nhp = c_pad // hd          # number of heads after padding (extra heads are all-zero)

    f32 = jnp.float32

    # ---- wrapper-side layout plumbing (free for the kernel) --------------------
    # x2: tokens x padded channels; lane Cx carries a constant 1.0 so both linear
    # biases can be folded into the weight matrices (drops 2 bias inputs / DMAs).
    x2 = jnp.zeros((rows_total, c_pad), f32)
    x2 = x2.at[:, :Cx].set(x.reshape(rows_total, Cx).astype(f32))
    x2 = x2.at[:, Cx].set(1.0)

    # Fused QKV weight, (in, out) layout; Q/K/V each padded to their own full
    # 128-lane segment (so the in-kernel splits are vreg-aligned).  Row Cx is the
    # bias row (multiplied by x2's constant-1 lane); the 1/sqrt(hd) scale is folded
    # into the Q columns; the extra 1.0 at (Cx, 2*c_pad + Cx) creates a constant-1
    # V lane that carries the projection bias through the attention weights.
    wq, wk, wv = w_attn[:Cx], w_attn[Cx:2 * Cx], w_attn[2 * Cx:]
    bq, bk, bv = b_attn[:Cx], b_attn[Cx:2 * Cx], b_attn[2 * Cx:]
    wqkv = jnp.zeros((c_pad, 3 * c_pad), f32)
    wqkv = wqkv.at[:Cx, 0 * c_pad:0 * c_pad + Cx].set(wq.T.astype(f32) * scale)
    wqkv = wqkv.at[Cx, 0 * c_pad:0 * c_pad + Cx].set(bq.astype(f32) * scale)
    wqkv = wqkv.at[:Cx, 1 * c_pad:1 * c_pad + Cx].set(wk.T.astype(f32))
    wqkv = wqkv.at[Cx, 1 * c_pad:1 * c_pad + Cx].set(bk.astype(f32))
    wqkv = wqkv.at[:Cx, 2 * c_pad:2 * c_pad + Cx].set(wv.T.astype(f32))
    wqkv = wqkv.at[Cx, 2 * c_pad:2 * c_pad + Cx].set(bv.astype(f32))
    wqkv = wqkv.at[Cx, 2 * c_pad + Cx].set(1.0)
    wqkv = wqkv.astype(compute_dtype)

    # Output projection weight, (in, out) layout, with the bias in row Cx (picked
    # up by the constant-1 attention-output lane).
    wproj = jnp.zeros((c_pad, c_pad), f32)
    wproj = wproj.at[:Cx, :Cx].set(w_proj.T.astype(f32))
    wproj = wproj.at[Cx, :Cx].set(b_proj.astype(f32))
    wproj = wproj.astype(compute_dtype)

    nblk = num_row_blocks if num_row_blocks is not None else _num_row_blocks(Bx, Tx)
    if Bx % nblk != 0 or ((Bx // nblk) * Tx) % _SUBLANE != 0:
        nblk = 1
    bb = Bx // nblk            # batch elements per grid step
    rows = bb * Tx             # token rows per grid step

    exact_softmax = compute_dtype == jnp.float32

    def kernel(x_ref, wqkv_ref, wproj_ref, o_ref):
        cd = compute_dtype
        x_blk = x_ref[...].astype(cd)                                  # (rows, c_pad)

        # Fused QKV projection (scale + biases already folded into the weights);
        # output is lane-dense, Q/K/V each in their own 128-lane segment.
        qkv = jnp.dot(x_blk, wqkv_ref[...],
                      preferred_element_type=jnp.float32)              # (rows, 3*c_pad) f32

        # Move the head axis to a leading batch axis with layout-friendly ops only:
        # one 2-D transpose, 128-row slices, vreg-aligned reshapes and a batched
        # minor-dim swap.  All heads then share ONE batched einsum pair (no
        # per-head Python loop, no 8-lane slices).
        qkv_t = jnp.transpose(qkv)                                     # (3*c_pad, rows)

        def heads_leading(seg):                                        # (c_pad, rows)
            t = seg.reshape(nhp, hd, rows)                             # vreg-aligned split
            return jnp.transpose(t, (0, 2, 1))                         # (nhp, rows, hd)

        qh = heads_leading(qkv_t[0 * c_pad:1 * c_pad])
        kh = heads_leading(qkv_t[1 * c_pad:2 * c_pad])
        vh = heads_leading(qkv_t[2 * c_pad:3 * c_pad])

        # Block-diagonal causal mask over the flattened (batch, time) row axis:
        # key row j is visible from query row (b, t) iff  b*T <= j <= b*T + t.
        # Built once, broadcast over all heads.
        b_idx = lax.broadcasted_iota(jnp.int32, (bb, Tx, rows), 0)
        t_idx = lax.broadcasted_iota(jnp.int32, (bb, Tx, rows), 1)
        j_idx = lax.broadcasted_iota(jnp.int32, (bb, Tx, rows), 2)
        visible = (j_idx >= b_idx * Tx) & (j_idx <= b_idx * Tx + t_idx)
        mask_add = jnp.where(visible, 0.0, -1e30).astype(jnp.float32)
        mask_add = mask_add.reshape(1, rows, rows)

        # Scores / softmax / weighted values for all heads at once (fp32 throughout;
        # bf16 casts here only add VPU work, especially on v5e).
        s = jnp.einsum('hqd,hkd->hqk', qh, kh,
                       preferred_element_type=jnp.float32) + mask_add  # (nhp, rows, rows)
        s = s - jnp.max(s, axis=-1, keepdims=True)
        p = jnp.exp(s)
        denom = jnp.sum(p, axis=-1, keepdims=True)
        if exact_softmax:
            p = p / denom                                  # exact softmax (module parity)
        else:
            p = p * pl.reciprocal(denom, approx=True)      # EUP slot, bf16 path only
        # TODO(synk): attention dropout omitted (inference mode, p = 0).
        y = jnp.einsum('hqk,hkd->hqd', p, vh,
                       preferred_element_type=jnp.float32)             # (nhp, rows, hd)

        # Back to token-major (rows, c_pad).  Pad head Cx//hd, dim 0 is exactly 1.0
        # (constant V lane x row-stochastic attention), which multiplies the bproj
        # row of wproj in the merged projection below.
        y2 = jnp.transpose(jnp.transpose(y, (0, 2, 1)).reshape(c_pad, rows))

        # Single merged output projection for all heads (K = c_pad), bias folded.
        out = jnp.dot(y2.astype(cd), wproj_ref[...],
                      preferred_element_type=jnp.float32)              # (rows, c_pad)
        # TODO(synk): projection dropout omitted (inference mode, p = 0).
        o_ref[...] = out.astype(o_ref.dtype)

    # Advisory cost estimate for XLA's scheduler.
    itm = jnp.finfo(compute_dtype).bits // 8
    flops = (2 * rows_total * c_pad * 3 * c_pad            # QKV projection
             + 4 * nhp * rows_total * rows * hd            # QK^T and PV
             + 2 * rows_total * c_pad * c_pad)             # output projection
    transcendentals = nhp * rows_total * rows              # exp in softmax
    bytes_accessed = (2 * rows_total * c_pad * 4           # x in, out
                      + (3 * c_pad + c_pad) * c_pad * itm)  # weights

    # NOTE on scaling beyond this toy config (per review): tile the token rows
    # (256-1024 rows per step, multiple of 8) instead of one collapsed step, keep
    # the weight specs' constant index_maps so they stay VMEM-resident, set
    # vmem_limit_bytes explicitly (v7x has only 64 MiB VMEM), and choose c_pad /
    # projection N tiles as multiples of 256 for the 256-wide MXUs of v6e/v7x.
    out_pad = pl.pallas_call(
        kernel,
        out_shape=jax.ShapeDtypeStruct((rows_total, c_pad), jnp.float32),
        grid_spec=pltpu.PrefetchScalarGridSpec(
            num_scalar_prefetch=0,
            grid=(nblk,),
            in_specs=[
                pl.BlockSpec((rows, c_pad), lambda g: (g, 0)),         # x (lane-dense)
                pl.BlockSpec((c_pad, 3 * c_pad), lambda g: (0, 0)),    # Wqkv (+bias row)
                pl.BlockSpec((c_pad, c_pad), lambda g: (0, 0)),        # Wproj (+bias row)
            ],
            out_specs=pl.BlockSpec((rows, c_pad), lambda g: (g, 0)),
        ),
        compiler_params=pltpu.CompilerParams(
            dimension_semantics=("parallel",)),
        cost_estimate=pl.CostEstimate(
            flops=flops, transcendentals=transcendentals,
            bytes_accessed=bytes_accessed),
    )(x2, wqkv, wproj)

    return out_pad[:, :Cx].reshape(Bx, Tx, Cx)


def _reference(x, w_attn, b_attn, w_proj, b_proj, n_head=N_HEAD):
    """Pure-JAX reference mirroring the PyTorch forward (eval mode)."""
    Bx, Tx, Cx = x.shape
    hd = Cx // n_head
    qkv = x @ w_attn.T + b_attn
    q, k, v = jnp.split(qkv, 3, axis=-1)

    def heads(t):
        return t.reshape(Bx, Tx, n_head, hd).transpose(0, 2, 1, 3)

    q, k, v = heads(q), heads(k), heads(v)
    att = jnp.einsum('bhtd,bhsd->bhts', q, k) / math.sqrt(hd)
    mask = jnp.tril(jnp.ones((Tx, Tx), dtype=bool))
    att = jnp.where(mask[None, None], att, -jnp.inf)
    att = jax.nn.softmax(att, axis=-1)
    y = jnp.einsum('bhts,bhsd->bhtd', att, v)
    y = y.transpose(0, 2, 1, 3).reshape(Bx, Tx, Cx)
    return y @ w_proj.T + b_proj


if __name__ == "__main__":
    key = jax.random.PRNGKey(0)
    kx, kwa, kba, kwp, kbp = jax.random.split(key, 5)

    x = jax.random.normal(kx, (B, T, C), dtype=jnp.float32)

    # nn.Linear-style parameters: weight (out, in), bias (out,)
    w_attn = jax.random.normal(kwa, (3 * C, C), dtype=jnp.float32) * 0.02
    b_attn = jax.random.normal(kba, (3 * C,), dtype=jnp.float32) * 0.02
    w_proj = jax.random.normal(kwp, (C, C), dtype=jnp.float32) * 0.02
    b_proj = jax.random.normal(kbp, (C,), dtype=jnp.float32) * 0.02

    # fp32 path (exact module semantics, exact softmax divide).
    out = causal_self_attention(x, w_attn, b_attn, w_proj, b_proj)
    out = jax.block_until_ready(out)
    assert out.shape == (B, T, C)

    ref = _reference(x, w_attn, b_attn, w_proj, b_proj)
    assert jnp.allclose(out, ref, atol=2e-4, rtol=2e-4), "mismatch vs reference"

    print("KERNEL_OK")
</pallas_src>

<mosaic_0001>
module attributes {stable_mosaic.version = 11 : i64} {
  func.func @kernel(%arg0: i32, %arg1: memref<16x128xf32, #tpu.memory_space<vmem>>, %arg2: memref<128x384xf32, #tpu.memory_space<vmem>>, %arg3: memref<128x128xf32, #tpu.memory_space<vmem>>, %arg4: memref<16x128xf32, #tpu.memory_space<vmem>>) attributes {dimension_semantics = [#tpu.dimension_semantics<parallel>], iteration_bounds = array<i64: 1>, scalar_prefetch = 0 : i64, scratch_operands = 0 : i64, tpu.core_type = #tpu.core_type<tc>, window_params = [{transform_indices = @transform_0, window_bounds = array<i64: 16, 128>}, {pipeline_mode = #tpu.pipeline_mode<synchronous>, transform_indices = @transform_1, window_bounds = array<i64: 128, 384>}, {pipeline_mode = #tpu.pipeline_mode<synchronous>, transform_indices = @transform_2, window_bounds = array<i64: 128, 128>}, {transform_indices = @transform_3, window_bounds = array<i64: 16, 128>}]} {
    %c0 = arith.constant 0 : index
    %c0_0 = arith.constant 0 : index
    %0 = vector.load %arg1[%c0, %c0_0] : memref<16x128xf32, #tpu.memory_space<vmem>>, vector<16x128xf32>
    %c0_1 = arith.constant 0 : index
    %c0_2 = arith.constant 0 : index
    %1 = vector.load %arg2[%c0_1, %c0_2] : memref<128x384xf32, #tpu.memory_space<vmem>>, vector<128x384xf32>
    %cst = arith.constant dense<0.000000e+00> : vector<16x384xf32>
    %2 = tpu.matmul %0, %1, %cst {dimension_numbers = #tpu.dot_dimension_numbers<[1], [0], [0], [1], [0, 0, 1, 1], [], []>} : vector<16x128xf32>, vector<128x384xf32>, vector<16x384xf32> -> vector<16x384xf32>
    %3 = tpu.transpose %2, [1, 0] : vector<16x384xf32> -> vector<384x16xf32>
    %4 = vector.extract_strided_slice %3 {offsets = [0, 0], sizes = [128, 16], strides = [1, 1]} : vector<384x16xf32> to vector<128x16xf32>
    %5 = vector.shape_cast %4 : vector<128x16xf32> to vector<16x8x16xf32>
    %6 = tpu.transpose %5, [0, 2, 1] : vector<16x8x16xf32> -> vector<16x16x8xf32>
    %7 = vector.extract_strided_slice %3 {offsets = [128, 0], sizes = [128, 16], strides = [1, 1]} : vector<384x16xf32> to vector<128x16xf32>
    %8 = vector.shape_cast %7 : vector<128x16xf32> to vector<16x8x16xf32>
    %9 = tpu.transpose %8, [0, 2, 1] : vector<16x8x16xf32> -> vector<16x16x8xf32>
    %10 = vector.extract_strided_slice %3 {offsets = [256, 0], sizes = [128, 16], strides = [1, 1]} : vector<384x16xf32> to vector<128x16xf32>
    %11 = vector.shape_cast %10 : vector<128x16xf32> to vector<16x8x16xf32>
    %12 = tpu.transpose %11, [0, 2, 1] : vector<16x8x16xf32> -> vector<16x16x8xf32>
    %13 = tpu.iota {dimensions = array<i32: 0>} : vector<2x8x16xi32>
    %14 = tpu.iota {dimensions = array<i32: 1>} : vector<2x8x16xi32>
    %15 = tpu.iota {dimensions = array<i32: 2>} : vector<2x8x16xi32>
    %c8_i32 = arith.constant 8 : i32
    %16 = vector.broadcast %c8_i32 : i32 to vector<2x8x16xi32>
    %17 = arith.muli %13, %16 : vector<2x8x16xi32>
    %18 = arith.cmpi sge, %15, %17 : vector<2x8x16xi32>
    %c8_i32_3 = arith.constant 8 : i32
    %19 = vector.broadcast %c8_i32_3 : i32 to vector<2x8x16xi32>
    %20 = arith.muli %13, %19 : vector<2x8x16xi32>
    %21 = arith.addi %20, %14 : vector<2x8x16xi32>
    %22 = arith.cmpi sle, %15, %21 : vector<2x8x16xi32>
    %23 = arith.andi %18, %22 : vector<2x8x16xi1>
    %cst_4 = arith.constant 0.000000e+00 : f32
    %cst_5 = arith.constant -1.000000e+30 : f32
    %24 = vector.broadcast %cst_4 : f32 to vector<2x8x16xf32>
    %25 = vector.broadcast %cst_5 : f32 to vector<2x8x16xf32>
    %26 = arith.select %23, %24, %25 : vector<2x8x16xi1>, vector<2x8x16xf32>
    %27 = vector.shape_cast %26 : vector<2x8x16xf32> to vector<1x16x16xf32>
    "tpu.trace_start"() <{level = 10 : i32, message = "hqd,hkd->hqk"}> : () -> ()
    %cst_6 = arith.constant dense<0.000000e+00> : vector<16x16x16xf32>
    %28 = tpu.matmul %6, %9, %cst_6 {dimension_numbers = #tpu.dot_dimension_numbers<[2], [2], [1], [1], [0, 0, 0, 1, 1, 1], [0], [0]>} : vector<16x16x8xf32>, vector<16x16x8xf32>, vector<16x16x16xf32> -> vector<16x16x16xf32>
    "tpu.trace_stop"() : () -> ()
    %29 = vector.broadcast %27 : vector<1x16x16xf32> to vector<16x16x16xf32>
    %30 = arith.addf %28, %29 : vector<16x16x16xf32>
    %cst_7 = arith.constant dense<0xFF800000> : vector<16x16xf32>
    %31 = vector.multi_reduction <maximumf>, %30, %cst_7 [2] : vector<16x16x16xf32> to vector<16x16xf32>
    %32 = vector.shape_cast %31 : vector<16x16xf32> to vector<16x16x1xf32>
    %33 = vector.broadcast %32 : vector<16x16x1xf32> to vector<16x16x16xf32>
    %34 = arith.subf %30, %33 : vector<16x16x16xf32>
    %35 = math.exp %34 : vector<16x16x16xf32>
    %cst_8 = arith.constant dense<0.000000e+00> : vector<16x16xf32>
    %36 = vector.multi_reduction <add>, %35, %cst_8 [2] : vector<16x16x16xf32> to vector<16x16xf32>
    %37 = vector.shape_cast %36 : vector<16x16xf32> to vector<16x16x1xf32>
    %38 = vector.broadcast %37 : vector<16x16x1xf32> to vector<16x16x16xf32>
    %39 = arith.divf %35, %38 : vector<16x16x16xf32>
    "tpu.trace_start"() <{level = 10 : i32, message = "hqk,hkd->hqd"}> : () -> ()
    %cst_9 = arith.constant dense<0.000000e+00> : vector<16x16x8xf32>
    %40 = tpu.matmul %39, %12, %cst_9 {dimension_numbers = #tpu.dot_dimension_numbers<[2], [1], [1], [2], [0, 0, 0, 1, 1, 2], [0], [0]>} : vector<16x16x16xf32>, vector<16x16x8xf32>, vector<16x16x8xf32> -> vector<16x16x8xf32>
    "tpu.trace_stop"() : () -> ()
    %41 = tpu.transpose %40, [0, 2, 1] : vector<16x16x8xf32> -> vector<16x8x16xf32>
    %42 = vector.shape_cast %41 : vector<16x8x16xf32> to vector<128x16xf32>
    %43 = tpu.transpose %42, [1, 0] : vector<128x16xf32> -> vector<16x128xf32>
    %c0_10 = arith.constant 0 : index
    %c0_11 = arith.constant 0 : index
    %44 = vector.load %arg3[%c0_10, %c0_11] : memref<128x128xf32, #tpu.memory_space<vmem>>, vector<128x128xf32>
    %cst_12 = arith.constant dense<0.000000e+00> : vector<16x128xf32>
    %45 = tpu.matmul %43, %44, %cst_12 {dimension_numbers = #tpu.dot_dimension_numbers<[1], [0], [0], [1], [0, 0, 1, 1], [], []>} : vector<16x128xf32>, vector<128x128xf32>, vector<16x128xf32> -> vector<16x128xf32>
    %c0_13 = arith.constant 0 : index
    %c0_14 = arith.constant 0 : index
    %46 = vector.load %arg4[%c0_13, %c0_14] : memref<16x128xf32, #tpu.memory_space<vmem>>, vector<16x128xf32>
    tpu.vector_store %arg4[%c0_13, %c0_14], %45 {strides = array<i32>} : memref<16x128xf32, #tpu.memory_space<vmem>>, vector<16x128xf32>,
    return
  }
  func.func @transform_0(%arg0: i32) -> (i32, i32) {
    %c0_i32 = arith.constant 0 : i32
    %c0_i32_0 = arith.constant 0 : i32
    return %arg0, %c0_i32 : i32, i32
  }
  func.func @transform_1(%arg0: i32) -> (i32, i32) {
    %c0_i32 = arith.constant 0 : i32
    %c0_i32_0 = arith.constant 0 : i32
    %c0_i32_1 = arith.constant 0 : i32
    return %c0_i32, %c0_i32_0 : i32, i32
  }
  func.func @transform_2(%arg0: i32) -> (i32, i32) {
    %c0_i32 = arith.constant 0 : i32
    %c0_i32_0 = arith.constant 0 : i32
    %c0_i32_1 = arith.constant 0 : i32
    return %c0_i32, %c0_i32_0 : i32, i32
  }
  func.func @transform_3(%arg0: i32) -> (i32, i32) {
    %c0_i32 = arith.constant 0 : i32
    %c0_i32_0 = arith.constant 0 : i32
    return %arg0, %c0_i32 : i32, i32
  }
}

</mosaic_0001>

<llo_original>
// kernel: tpu_custom_call.1
$region0: #{tpu_custom_call.1}
  #allocation0 [shape = 'u32[]', space=smem, size = 0x4, offset = 0x4, fixed_abs, tag = 'smem constant byte address 0x4 - core index']
  #allocation1 [shape = 'u32[72,128]{1,0:T(1,128)}', space=vmem, size = 0x9000, scoped, tag = 'internal scratch']
  %s0 = inlined_call_operand.hbm [shape: f32[16,128], index: 0, kind: input, shape index: {}]
  %s1 = inlined_call_operand.hbm [shape: f32[128,384], index: 1, kind: input, shape index: {}]
  %s2 = inlined_call_operand.hbm [shape: f32[128,128], index: 2, kind: input, shape index: {}]
  %s3 = inlined_call_operand.hbm [shape: f32[16,128], index: 3, kind: output, shape index: {}]
  %s4 = sld [smem:[#allocation0]]
  $region34: #{tpu_custom_call.1} parent=0
    _
  %s6 = ssub.s32 1, %s4
  %s7 = scalar_select 0, %s6, %s4
  $region1: #{tpu_custom_call.1} parent=0
    #allocation2 [shape = 'u8[8192]{0}', space=vmem, size = 0x2000, scoped, tag = 'input window, operand 0, single buffered']
    #allocation3 [shape = 's32[1]{0}', space=sflag, size = 0x4, scoped, tag = 'scoped memory for tpu_custom_call.1']
    #allocation4 [shape = 's32[1]{0}', space=sflag, size = 0x4, scoped, tag = 'scoped memory for tpu_custom_call.1']
    #allocation5 [shape = 'u8[196608]{0}', space=vmem, size = 0x30000, scoped, tag = 'input window, operand 1, single buffered']
    #allocation6 [shape = 's32[1]{0}', space=sflag, size = 0x4, scoped, tag = 'scoped memory for tpu_custom_call.1']
    #allocation7 [shape = 'u8[65536]{0}', space=vmem, size = 0x10000, scoped, tag = 'input window, operand 2, single buffered']
    #allocation8 [shape = 'u8[8192]{0}', space=vmem, size = 0x2000, scoped, tag = 'output window, operand 0, single buffered']
    %8 = vsyncpa [#allocation3], 0
    %9 = vsyncpa [#allocation6], 0
    %10 = vsyncpa [#allocation4], 0
    // Predicated region
    $region2: #{tpu_custom_call.1} parent=1 // pred_check
      _
    $region3: #{tpu_custom_call.1} parent=1 // pred_check_branch
      %12 = sbr.rel (0) target = $region5
    $region4: #{tpu_custom_call.1} parent=1 // pred_region
      %14 = vsyncadd [#allocation3], 0
      %s15 = sshll.u32 %s0, 4
      %s16 = int_to_ptr.hbm [resolvable:$true] %s15
      %s17 = sshll.u32 [#allocation2], 4
      %s18 = int_to_ptr.vmem [resolvable:$true] %s17
      %23 = dma.hbm_to_vmem [thread:$0]  %s16, 256, %s18, [#allocation3], 128, 128, 8
    $region5: #{tpu_custom_call.1} parent=1 // pred_fallthru
      _
    // Predicated region
    $region6: #{tpu_custom_call.1} parent=1 // pred_check
      _
    $region7: #{tpu_custom_call.1} parent=1 // pred_check_branch
      %25 = sbr.rel (0) target = $region9
    $region8: #{tpu_custom_call.1} parent=1 // pred_region
      %27 = vsyncadd [#allocation6], 0
      %s28 = sshll.u32 %s1, 4
      %s29 = int_to_ptr.hbm [resolvable:$true] %s28
      %s30 = sshll.u32 [#allocation5], 4
      %s31 = int_to_ptr.vmem [resolvable:$true] %s30
      %36 = dma.hbm_to_vmem [thread:$0]  %s29, 6144, %s31, [#allocation6], 384, 384, 24
    $region9: #{tpu_custom_call.1} parent=1 // pred_fallthru
      _
    // Predicated region
    $region10: #{tpu_custom_call.1} parent=1 // pred_check
      _
    $region11: #{tpu_custom_call.1} parent=1 // pred_check_branch
      %38 = sbr.rel (0) target = $region13
    $region12: #{tpu_custom_call.1} parent=1 // pred_region
      %40 = vsyncadd [#allocation6], 0
      %s41 = sshll.u32 %s2, 4
      %s42 = int_to_ptr.hbm [resolvable:$true] %s41
      %s43 = sshll.u32 [#allocation7], 4
      %s44 = int_to_ptr.vmem [resolvable:$true] %s43
      %49 = dma.hbm_to_vmem [thread:$0]  %s42, 2048, %s44, [#allocation6], 128, 128, 8
    $region13: #{tpu_custom_call.1} parent=1 // pred_fallthru
      _
    // Predicated region
    $region14: #{tpu_custom_call.1} parent=1 // pred_check
      _
    $region15: #{tpu_custom_call.1} parent=1 // pred_check_branch
      %51 = sbr.rel (0) target = $region17
    $region16: #{tpu_custom_call.1} parent=1 // pred_region
      %53 = dma.done [#allocation3], 256
    $region17: #{tpu_custom_call.1} parent=1 // pred_fallthru
      _
    // Predicated region
    $region18: #{tpu_custom_call.1} parent=1 // pred_check
      _
    $region19: #{tpu_custom_call.1} parent=1 // pred_check_branch
      %55 = sbr.rel (0) target = $region21
    $region20: #{tpu_custom_call.1} parent=1 // pred_region
      %57 = dma.done [#allocation6], 6144
    $region21: #{tpu_custom_call.1} parent=1 // pred_fallthru
      _
    // Predicated region
    $region22: #{tpu_custom_call.1} parent=1 // pred_check
      _
    $region23: #{tpu_custom_call.1} parent=1 // pred_check_branch
      %59 = sbr.rel (0) target = $region25
    $region24: #{tpu_custom_call.1} parent=1 // pred_region
      %61 = dma.done [#allocation6], 2048
    $region25: #{tpu_custom_call.1} parent=1 // pred_fallthru
      _
    %v62 = vld [vmem:[#allocation2] sm:$0xff]
    %v63 = vld [vmem:[#allocation2 + $0x8] sm:$0xff]
    %v64 = vld [vmem:[#allocation5] sm:$0xff]
    %v65 = vld [vmem:[#allocation5 + $0x8] sm:$0xff]
    %v66 = vld [vmem:[#allocation5 + $0x10] sm:$0xff]
    %v67 = vld [vmem:[#allocation5 + $0x18] sm:$0xff]
    %v68 = vld [vmem:[#allocation5 + $0x20] sm:$0xff]
    %v69 = vld [vmem:[#allocation5 + $0x28] sm:$0xff]
    %v70 = vld [vmem:[#allocation5 + $0x30] sm:$0xff]
    %v71 = vld [vmem:[#allocation5 + $0x38] sm:$0xff]
    %v72 = vld [vmem:[#allocation5 + $0x40] sm:$0xff]
    %v73 = vld [vmem:[#allocation5 + $0x48] sm:$0xff]
    %v74 = vld [vmem:[#allocation5 + $0x50] sm:$0xff]
    %v75 = vld [vmem:[#allocation5 + $0x58] sm:$0xff]
    %v76 = vld [vmem:[#allocation5 + $0x60] sm:$0xff]
    %v77 = vld [vmem:[#allocation5 + $0x68] sm:$0xff]
    %v78 = vld [vmem:[#allocation5 + $0x70] sm:$0xff]
    %v79 = vld [vmem:[#allocation5 + $0x78] sm:$0xff]
    %v80 = vld [vmem:[#allocation5 + $0x80] sm:$0xff]
    %v81 = vld [vmem:[#allocation5 + $0x88] sm:$0xff]
    %v82 = vld [vmem:[#allocation5 + $0x90] sm:$0xff]
    %v83 = vld [vmem:[#allocation5 + $0x98] sm:$0xff]
    %v84 = vld [vmem:[#allocation5 + $0xa0] sm:$0xff]
    %v85 = vld [vmem:[#allocation5 + $0xa8] sm:$0xff]
    %v86 = vld [vmem:[#allocation5 + $0xb0] sm:$0xff]
    %v87 = vld [vmem:[#allocation5 + $0xb8] sm:$0xff]
    %v88 = vld [vmem:[#allocation5 + $0xc0] sm:$0xff]
    %v89 = vld [vmem:[#allocation5 + $0xc8] sm:$0xff]
    %v90 = vld [vmem:[#allocation5 + $0xd0] sm:$0xff]
    %v91 = vld [vmem:[#allocation5 + $0xd8] sm:$0xff]
    %v92 = vld [vmem:[#allocation5 + $0xe0] sm:$0xff]
    %v93 = vld [vmem:[#allocation5 + $0xe8] sm:$0xff]
    %v94 = vld [vmem:[#allocation5 + $0xf0] sm:$0xff]
    %v95 = vld [vmem:[#allocation5 + $0xf8] sm:$0xff]
    %v96 = vld [vmem:[#allocation5 + $0x100] sm:$0xff]
    %v97 = vld [vmem:[#allocation5 + $0x108] sm:$0xff]
    %v98 = vld [vmem:[#allocation5 + $0x110] sm:$0xff]
    %v99 = vld [vmem:[#allocation5 + $0x118] sm:$0xff]
    %v100 = vld [vmem:[#allocation5 + $0x120] sm:$0xff]
    %v101 = vld [vmem:[#allocation5 + $0x128] sm:$0xff]
    %v102 = vld [vmem:[#allocation5 + $0x130] sm:$0xff]
    %v103 = vld [vmem:[#allocation5 + $0x138] sm:$0xff]
    %v104 = vld [vmem:[#allocation5 + $0x140] sm:$0xff]
    %v105 = vld [vmem:[#allocation5 + $0x148] sm:$0xff]
    %v106 = vld [vmem:[#allocation5 + $0x150] sm:$0xff]
    %v107 = vld [vmem:[#allocation5 + $0x158] sm:$0xff]
    %v108 = vld [vmem:[#allocation5 + $0x160] sm:$0xff]
    %v109 = vld [vmem:[#allocation5 + $0x168] sm:$0xff]
    %v110 = vld [vmem:[#allocation5 + $0x170] sm:$0xff]
    %v111 = vld [vmem:[#allocation5 + $0x178] sm:$0xff]
    %112 = vmatpush.msra.mxu0 %v109
    %113 = vmatpush.msra.mxu0 %v106
    %114 = vmatpush.msra.mxu0 %v103
    %115 = vmatpush.msra.mxu0 %v100
    %116 = vmatpush.msra.mxu0 %v97
    %117 = vmatpush.msra.mxu0 %v94
    %118 = vmatpush.msra.mxu0 %v91
    %119 = vmatpush.msra.mxu0 %v88
    %120 = vmatpush.msra.mxu0 %v85
    %121 = vmatpush.msra.mxu0 %v82
    %122 = vmatpush.msra.mxu0 %v79
    %123 = vmatpush.msra.mxu0 %v76
    %124 = vmatpush.msra.mxu0 %v73
    %125 = vmatpush.msra.mxu0 %v70
    %126 = vmatpush.msra.mxu0 %v67
    %127 = vmatpush.msra.mxu0 %v64
    %128 = vmatmul.f32.gmra.mxu0 %v62
    %v129 = vpop.f32.mrf.mxu0
    %v130 = vadd.f32 0.0, %v129
    %131 = vmatmul.f32.gmra.mxu0 %v63
    %v132 = vpop.f32.mrf.mxu0
    %v133 = vadd.f32 0.0, %v132
    %134 = vdwg.mxu0
    %135 = vmatpush.msra.mxu0 %v110
    %136 = vmatpush.msra.mxu0 %v107
    %137 = vmatpush.msra.mxu0 %v104
    %138 = vmatpush.msra.mxu0 %v101
    %139 = vmatpush.msra.mxu0 %v98
    %140 = vmatpush.msra.mxu0 %v95
    %141 = vmatpush.msra.mxu0 %v92
    %142 = vmatpush.msra.mxu0 %v89
    %143 = vmatpush.msra.mxu0 %v86
    %144 = vmatpush.msra.mxu0 %v83
    %145 = vmatpush.msra.mxu0 %v80
    %146 = vmatpush.msra.mxu0 %v77
    %147 = vmatpush.msra.mxu0 %v74
    %148 = vmatpush.msra.mxu0 %v71
    %149 = vmatpush.msra.mxu0 %v68
    %150 = vmatpush.msra.mxu0 %v65
    %151 = vmatmul.f32.gmra.mxu0 %v62
    %v152 = vpop.f32.mrf.mxu0
    %v153 = vadd.f32 0.0, %v152
    %154 = vmatmul.f32.gmra.mxu0 %v63
    %v155 = vpop.f32.mrf.mxu0
    %v156 = vadd.f32 0.0, %v155
    %157 = vdwg.mxu0
    %158 = vmatpush.msra.mxu0 %v111
    %159 = vmatpush.msra.mxu0 %v108
    %160 = vmatpush.msra.mxu0 %v105
    %161 = vmatpush.msra.mxu0 %v102
    %162 = vmatpush.msra.mxu0 %v99
    %163 = vmatpush.msra.mxu0 %v96
    %164 = vmatpush.msra.mxu0 %v93
    %165 = vmatpush.msra.mxu0 %v90
    %166 = vmatpush.msra.mxu0 %v87
    %167 = vmatpush.msra.mxu0 %v84
    %168 = vmatpush.msra.mxu0 %v81
    %169 = vmatpush.msra.mxu0 %v78
    %170 = vmatpush.msra.mxu0 %v75
    %171 = vmatpush.msra.mxu0 %v72
    %172 = vmatpush.msra.mxu0 %v69
    %173 = vmatpush.msra.mxu0 %v66
    %174 = vmatmul.f32.gmra.mxu0 %v62
    %v175 = vpop.f32.mrf.mxu0
    %v176 = vadd.f32 0.0, %v175
    %177 = vmatmul.f32.gmra.mxu0 %v63
    %v178 = vpop.f32.mrf.mxu0
    %v179 = vadd.f32 0.0, %v178
    %180 = vdwg.mxu0
    %181 = vxpose.xlu0.b32.start [1/16] %v130, 128
    %182 = vxpose.xlu0.b32.cont [2/16] %v133, 128
    %183 = vxpose.xlu0.b32.cont [3/16] 0.0, 128
    %184 = vxpose.xlu0.b32.cont [4/16] 0.0, 128
    %185 = vxpose.xlu0.b32.cont [5/16] 0.0, 128
    %186 = vxpose.xlu0.b32.cont [6/16] 0.0, 128
    %187 = vxpose.xlu0.b32.cont [7/16] 0.0, 128
    %188 = vxpose.xlu0.b32.cont [8/16] 0.0, 128
    %189 = vxpose.xlu0.b32.cont [9/16] 0.0, 128
    %190 = vxpose.xlu0.b32.cont [10/16] 0.0, 128
    %191 = vxpose.xlu0.b32.cont [11/16] 0.0, 128
    %192 = vxpose.xlu0.b32.cont [12/16] 0.0, 128
    %193 = vxpose.xlu0.b32.cont [13/16] 0.0, 128
    %194 = vxpose.xlu0.b32.cont [14/16] 0.0, 128
    %195 = vxpose.xlu0.b32.cont [15/16] 0.0, 128
    %196 = vxpose.xlu0.b32.end [16/16] 0.0, 128
    %v197 = vpop.trf.xlu0
    %v198 = vpop.trf.xlu0
    %v199 = vpop.trf.xlu0
    %v200 = vpop.trf.xlu0
    %v201 = vpop.trf.xlu0
    %v202 = vpop.trf.xlu0
    %v203 = vpop.trf.xlu0
    %v204 = vpop.trf.xlu0
    %v205 = vpop.trf.xlu0
    %v206 = vpop.trf.xlu0
    %v207 = vpop.trf.xlu0
    %v208 = vpop.trf.xlu0
    %v209 = vpop.trf.xlu0
    %v210 = vpop.trf.xlu0
    %v211 = vpop.trf.xlu0
    %v212 = vpop.trf.xlu0
    %213 = vxpose.xlu0.b32.start [1/16] %v153, 128
    %214 = vxpose.xlu0.b32.cont [2/16] %v156, 128
    %215 = vxpose.xlu0.b32.cont [3/16] 0.0, 128
    %216 = vxpose.xlu0.b32.cont [4/16] 0.0, 128
    %217 = vxpose.xlu0.b32.cont [5/16] 0.0, 128
    %218 = vxpose.xlu0.b32.cont [6/16] 0.0, 128
    %219 = vxpose.xlu0.b32.cont [7/16] 0.0, 128
    %220 = vxpose.xlu0.b32.cont [8/16] 0.0, 128
    %221 = vxpose.xlu0.b32.cont [9/16] 0.0, 128
    %222 = vxpose.xlu0.b32.cont [10/16] 0.0, 128
    %223 = vxpose.xlu0.b32.cont [11/16] 0.0, 128
    %224 = vxpose.xlu0.b32.cont [12/16] 0.0, 128
    %225 = vxpose.xlu0.b32.cont [13/16] 0.0, 128
    %226 = vxpose.xlu0.b32.cont [14/16] 0.0, 128
    %227 = vxpose.xlu0.b32.cont [15/16] 0.0, 128
    %228 = vxpose.xlu0.b32.end [16/16] 0.0, 128
    %v229 = vpop.trf.xlu0
    %v230 = vpop.trf.xlu0
    %v231 = vpop.trf.xlu0
    %v232 = vpop.trf.xlu0
    %v233 = vpop.trf.xlu0
    %v234 = vpop.trf.xlu0
    %v235 = vpop.trf.xlu0
    %v236 = vpop.trf.xlu0
    %v237 = vpop.trf.xlu0
    %v238 = vpop.trf.xlu0
    %v239 = vpop.trf.xlu0
    %v240 = vpop.trf.xlu0
    %v241 = vpop.trf.xlu0
    %v242 = vpop.trf.xlu0
    %v243 = vpop.trf.xlu0
    %v244 = vpop.trf.xlu0
    %245 = vxpose.xlu0.b32.start [1/16] %v176, 128
    %246 = vxpose.xlu0.b32.cont [2/16] %v179, 128
    %247 = vxpose.xlu0.b32.cont [3/16] 0.0, 128
    %248 = vxpose.xlu0.b32.cont [4/16] 0.0, 128
    %249 = vxpose.xlu0.b32.cont [5/16] 0.0, 128
    %250 = vxpose.xlu0.b32.cont [6/16] 0.0, 128
    %251 = vxpose.xlu0.b32.cont [7/16] 0.0, 128
    %252 = vxpose.xlu0.b32.cont [8/16] 0.0, 128
    %253 = vxpose.xlu0.b32.cont [9/16] 0.0, 128
    %254 = vxpose.xlu0.b32.cont [10/16] 0.0, 128
    %255 = vxpose.xlu0.b32.cont [11/16] 0.0, 128
    %256 = vxpose.xlu0.b32.cont [12/16] 0.0, 128
    %257 = vxpose.xlu0.b32.cont [13/16] 0.0, 128
    %258 = vxpose.xlu0.b32.cont [14/16] 0.0, 128
    %259 = vxpose.xlu0.b32.cont [15/16] 0.0, 128
    %260 = vxpose.xlu0.b32.end [16/16] 0.0, 128
    %v261 = vpop.trf.xlu0
    %v262 = vpop.trf.xlu0
    %v263 = vpop.trf.xlu0
    %v264 = vpop.trf.xlu0
    %v265 = vpop.trf.xlu0
    %v266 = vpop.trf.xlu0
    %v267 = vpop.trf.xlu0
    %v268 = vpop.trf.xlu0
    %v269 = vpop.trf.xlu0
    %v270 = vpop.trf.xlu0
    %v271 = vpop.trf.xlu0
    %v272 = vpop.trf.xlu0
    %v273 = vpop.trf.xlu0
    %v274 = vpop.trf.xlu0
    %v275 = vpop.trf.xlu0
    %v276 = vpop.trf.xlu0
    %277 = vxpose.xlu0.b32.start [1/16] %v197, 128
    %278 = vxpose.xlu0.b32.cont [2/16] 0.0, 128
    %279 = vxpose.xlu0.b32.cont [3/16] 0.0, 128
    %280 = vxpose.xlu0.b32.cont [4/16] 0.0, 128
    %281 = vxpose.xlu0.b32.cont [5/16] 0.0, 128
    %282 = vxpose.xlu0.b32.cont [6/16] 0.0, 128
    %283 = vxpose.xlu0.b32.cont [7/16] 0.0, 128
    %284 = vxpose.xlu0.b32.cont [8/16] 0.0, 128
    %285 = vxpose.xlu0.b32.cont [9/16] 0.0, 128
    %286 = vxpose.xlu0.b32.cont [10/16] 0.0, 128
    %287 = vxpose.xlu0.b32.cont [11/16] 0.0, 128
    %288 = vxpose.xlu0.b32.cont [12/16] 0.0, 128
    %289 = vxpose.xlu0.b32.cont [13/16] 0.0, 128
    %290 = vxpose.xlu0.b32.cont [14/16] 0.0, 128
    %291 = vxpose.xlu0.b32.cont [15/16] 0.0, 128
    %292 = vxpose.xlu0.b32.end [16/16] 0.0, 128
    %v293 = vpop.trf.xlu0
    %v294 = vpop.trf.xlu0
    %v295 = vpop.trf.xlu0
    %v296 = vpop.trf.xlu0
    %v297 = vpop.trf.xlu0
    %v298 = vpop.trf.xlu0
    %v299 = vpop.trf.xlu0
    %v300 = vpop.trf.xlu0
    %v301 = vpop.trf.xlu0
    %v302 = vpop.trf.xlu0
    %v303 = vpop.trf.xlu0
    %v304 = vpop.trf.xlu0
    %v305 = vpop.trf.xlu0
    %v306 = vpop.trf.xlu0
    %v307 = vpop.trf.xlu0
    %v308 = vpop.trf.xlu0
    %309 = vxpose.xlu0.b32.start [1/16] %v198, 128
    %310 = vxpose.xlu0.b32.cont [2/16] 0.0, 128
    %311 = vxpose.xlu0.b32.cont [3/16] 0.0, 128
    %312 = vxpose.xlu0.b32.cont [4/16] 0.0, 128
    %313 = vxpose.xlu0.b32.cont [5/16] 0.0, 128
    %314 = vxpose.xlu0.b32.cont [6/16] 0.0, 128
    %315 = vxpose.xlu0.b32.cont [7/16] 0.0, 128
    %316 = vxpose.xlu0.b32.cont [8/16] 0.0, 128
    %317 = vxpose.xlu0.b32.cont [9/16] 0.0, 128
    %318 = vxpose.xlu0.b32.cont [10/16] 0.0, 128
    %319 = vxpose.xlu0.b32.cont [11/16] 0.0, 128
    %320 = vxpose.xlu0.b32.cont [12/16] 0.0, 128
    %321 = vxpose.xlu0.b32.cont [13/16] 0.0, 128
    %322 = vxpose.xlu0.b32.cont [14/16] 0.0, 128
    %323 = vxpose.xlu0.b32.cont [15/16] 0.0, 128
    %324 = vxpose.xlu0.b32.end [16/16] 0.0, 128
    %v325 = vpop.trf.xlu0
    %v326 = vpop.trf.xlu0
    %v327 = vpop.trf.xlu0
    %v328 = vpop.trf.xlu0
    %v329 = vpop.trf.xlu0
    %v330 = vpop.trf.xlu0
    %v331 = vpop.trf.xlu0
    %v332 = vpop.trf.xlu0
    %v333 = vpop.trf.xlu0
    %v334 = vpop.trf.xlu0
    %v335 = vpop.trf.xlu0
    %v336 = vpop.trf.xlu0
    %v337 = vpop.trf.xlu0
    %v338 = vpop.trf.xlu0
    %v339 = vpop.trf.xlu0
    %v340 = vpop.trf.xlu0
    %341 = vxpose.xlu0.b32.start [1/16] %v199, 128
    %342 = vxpose.xlu0.b32.cont [2/16] 0.0, 128
    %343 = vxpose.xlu0.b32.cont [3/16] 0.0, 128
    %344 = vxpose.xlu0.b32.cont [4/16] 0.0, 128
    %345 = vxpose.xlu0.b32.cont [5/16] 0.0, 128
    %346 = vxpose.xlu0.b32.cont [6/16] 0.0, 128
    %347 = vxpose.xlu0.b32.cont [7/16] 0.0, 128
    %348 = vxpose.xlu0.b32.cont [8/16] 0.0, 128
    %349 = vxpose.xlu0.b32.cont [9/16] 0.0, 128
    %350 = vxpose.xlu0.b32.cont [10/16] 0.0, 128
    %351 = vxpose.xlu0.b32.cont [11/16] 0.0, 128
    %352 = vxpose.xlu0.b32.cont [12/16] 0.0, 128
    %353 = vxpose.xlu0.b32.cont [13/16] 0.0, 128
    %354 = vxpose.xlu0.b32.cont [14/16] 0.0, 128
    %355 = vxpose.xlu0.b32.cont [15/16] 0.0, 128
    %356 = vxpose.xlu0.b32.end [16/16] 0.0, 128
    %v357 = vpop.trf.xlu0
    %v358 = vpop.trf.xlu0
    %v359 = vpop.trf.xlu0
    %v360 = vpop.trf.xlu0
    %v361 = vpop.trf.xlu0
    %v362 = vpop.trf.xlu0
    %v363 = vpop.trf.xlu0
    %v364 = vpop.trf.xlu0
    %v365 = vpop.trf.xlu0
    %v366 = vpop.trf.xlu0
    %v367 = vpop.trf.xlu0
    %v368 = vpop.trf.xlu0
    %v369 = vpop.trf.xlu0
    %v370 = vpop.trf.xlu0
    %v371 = vpop.trf.xlu0
    %v372 = vpop.trf.xlu0
    %373 = vxpose.xlu0.b32.start [1/16] %v200, 128
    %374 = vxpose.xlu0.b32.cont [2/16] 0.0, 128
    %375 = vxpose.xlu0.b32.cont [3/16] 0.0, 128
    %376 = vxpose.xlu0.b32.cont [4/16] 0.0, 128
    %377 = vxpose.xlu0.b32.cont [5/16] 0.0, 128
    %378 = vxpose.xlu0.b32.cont [6/16] 0.0, 128
    %379 = vxpose.xlu0.b32.cont [7/16] 0.0, 128
    %380 = vxpose.xlu0.b32.cont [8/16] 0.0, 128
    %381 = vxpose.xlu0.b32.cont [9/16] 0.0, 128
    %382 = vxpose.xlu0.b32.cont [10/16] 0.0, 128
    %383 = vxpose.xlu0.b32.cont [11/16] 0.0, 128
    %384 = vxpose.xlu0.b32.cont [12/16] 0.0, 128
    %385 = vxpose.xlu0.b32.cont [13/16] 0.0, 128
    %386 = vxpose.xlu0.b32.cont [14/16] 0.0, 128
    %387 = vxpose.xlu0.b32.cont [15/16] 0.0, 128
    %388 = vxpose.xlu0.b32.end [16/16] 0.0, 128
    %v389 = vpop.trf.xlu0
    %v390 = vpop.trf.xlu0
    %v391 = vpop.trf.xlu0
    %v392 = vpop.trf.xlu0
    %v393 = vpop.trf.xlu0
    %v394 = vpop.trf.xlu0
    %v395 = vpop.trf.xlu0
    %v396 = vpop.trf.xlu0
    %v397 = vpop.trf.xlu0
    %v398 = vpop.trf.xlu0
    %v399 = vpop.trf.xlu0
    %v400 = vpop.trf.xlu0
    %v401 = vpop.trf.xlu0
    %v402 = vpop.trf.xlu0
    %v403 = vpop.trf.xlu0
    %v404 = vpop.trf.xlu0
    %405 = vxpose.xlu0.b32.start [1/16] %v201, 128
    %406 = vxpose.xlu0.b32.cont [2/16] 0.0, 128
    %407 = vxpose.xlu0.b32.cont [3/16] 0.0, 128
    %408 = vxpose.xlu0.b32.cont [4/16] 0.0, 128
    %409 = vxpose.xlu0.b32.cont [5/16] 0.0, 128
    %410 = vxpose.xlu0.b32.cont [6/16] 0.0, 128
    %411 = vxpose.xlu0.b32.cont [7/16] 0.0, 128
    %412 = vxpose.xlu0.b32.cont [8/16] 0.0, 128
    %413 = vxpose.xlu0.b32.cont [9/16] 0.0, 128
    %414 = vxpose.xlu0.b32.cont [10/16] 0.0, 128
    %415 = vxpose.xlu0.b32.cont [11/16] 0.0, 128
    %416 = vxpose.xlu0.b32.cont [12/16] 0.0, 128
    %417 = vxpose.xlu0.b32.cont [13/16] 0.0, 128
    %418 = vxpose.xlu0.b32.cont [14/16] 0.0, 128
    %419 = vxpose.xlu0.b32.cont [15/16] 0.0, 128
    %420 = vxpose.xlu0.b32.end [16/16] 0.0, 128
    %v421 = vpop.trf.xlu0
    %v422 = vpop.trf.xlu0
    %v423 = vpop.trf.xlu0
    %v424 = vpop.trf.xlu0
    %v425 = vpop.trf.xlu0
    %v426 = vpop.trf.xlu0
    %v427 = vpop.trf.xlu0
    %v428 = vpop.trf.xlu0
    %v429 = vpop.trf.xlu0
    %v430 = vpop.trf.xlu0
    %v431 = vpop.trf.xlu0
    %v432 = vpop.trf.xlu0
    %v433 = vpop.trf.xlu0
    %v434 = vpop.trf.xlu0
    %v435 = vpop.trf.xlu0
    %v436 = vpop.trf.xlu0
    %437 = vxpose.xlu0.b32.start [1/16] %v202, 128
    %438 = vxpose.xlu0.b32.cont [2/16] 0.0, 128
    %439 = vxpose.xlu0.b32.cont [3/16] 0.0, 128
    %440 = vxpose.xlu0.b32.cont [4/16] 0.0, 128
    %441 = vxpose.xlu0.b32.cont [5/16] 0.0, 128
    %442 = vxpose.xlu0.b32.cont [6/16] 0.0, 128
    %443 = vxpose.xlu0.b32.cont [7/16] 0.0, 128
    %444 = vxpose.xlu0.b32.cont [8/16] 0.0, 128
    %445 = vxpose.xlu0.b32.cont [9/16] 0.0, 128
    %446 = vxpose.xlu0.b32.cont [10/16] 0.0, 128
    %447 = vxpose.xlu0.b32.cont [11/16] 0.0, 128
    %448 = vxpose.xlu0.b32.cont [12/16] 0.0, 128
    %449 = vxpose.xlu0.b32.cont [13/16] 0.0, 128
    %450 = vxpose.xlu0.b32.cont [14/16] 0.0, 128
    %451 = vxpose.xlu0.b32.cont [15/16] 0.0, 128
    %452 = vxpose.xlu0.b32.end [16/16] 0.0, 128
    %v453 = vpop.trf.xlu0
    %v454 = vpop.trf.xlu0
    %v455 = vpop.trf.xlu0
    %v456 = vpop.trf.xlu0
    %v457 = vpop.trf.xlu0
    %v458 = vpop.trf.xlu0
    %v459 = vpop.trf.xlu0
    %v460 = vpop.trf.xlu0
    %v461 = vpop.trf.xlu0
    %v462 = vpop.trf.xlu0
    %v463 = vpop.trf.xlu0
    %v464 = vpop.trf.xlu0
    %v465 = vpop.trf.xlu0
    %v466 = vpop.trf.xlu0
    %v467 = vpop.trf.xlu0
    %v468 = vpop.trf.xlu0
    %469 = vxpose.xlu0.b32.start [1/16] %v203, 128
    %470 = vxpose.xlu0.b32.cont [2/16] 0.0, 128
    %471 = vxpose.xlu0.b32.cont [3/16] 0.0, 128
    %472 = vxpose.xlu0.b32.cont [4/16] 0.0, 128
    %473 = vxpose.xlu0.b32.cont [5/16] 0.0, 128
    %474 = vxpose.xlu0.b32.cont [6/16] 0.0, 128
    %475 = vxpose.xlu0.b32.cont [7/16] 0.0, 128
    %476 = vxpose.xlu0.b32.cont [8/16] 0.0, 128
    %477 = vxpose.xlu0.b32.cont [9/16] 0.0, 128
    %478 = vxpose.xlu0.b32.cont [10/16] 0.0, 128
    %479 = vxpose.xlu0.b32.cont [11/16] 0.0, 128
    %480 = vxpose.xlu0.b32.cont [12/16] 0.0, 128
    %481 = vxpose.xlu0.b32.cont [13/16] 0.0, 128
    %482 = vxpose.xlu0.b32.cont [14/16] 0.0, 128
    %483 = vxpose.xlu0.b32.cont [15/16] 0.0, 128
    %484 = vxpose.xlu0.b32.end [16/16] 0.0, 128
    %v485 = vpop.trf.xlu0
    %v486 = vpop.trf.xlu0
    %v487 = vpop.trf.xlu0
    %v488 = vpop.trf.xlu0
    %v489 = vpop.trf.xlu0
    %v490 = vpop.trf.xlu0
    %v491 = vpop.trf.xlu0
    %v492 = vpop.trf.xlu0
    %v493 = vpop.trf.xlu0
    %v494 = vpop.trf.xlu0
    %v495 = vpop.trf.xlu0
    %v496 = vpop.trf.xlu0
    %v497 = vpop.trf.xlu0
    %v498 = vpop.trf.xlu0
    %v499 = vpop.trf.xlu0
    %v500 = vpop.trf.xlu0
    %501 = vxpose.xlu0.b32.start [1/16] %v204, 128
    %502 = vxpose.xlu0.b32.cont [2/16] 0.0, 128
    %503 = vxpose.xlu0.b32.cont [3/16] 0.0, 128
    %504 = vxpose.xlu0.b32.cont [4/16] 0.0, 128
    %505 = vxpose.xlu0.b32.cont [5/16] 0.0, 128
    %506 = vxpose.xlu0.b32.cont [6/16] 0.0, 128
    %507 = vxpose.xlu0.b32.cont [7/16] 0.0, 128
    %508 = vxpose.xlu0.b32.cont [8/16] 0.0, 128
    %509 = vxpose.xlu0.b32.cont [9/16] 0.0, 128
    %510 = vxpose.xlu0.b32.cont [10/16] 0.0, 128
    %511 = vxpose.xlu0.b32.cont [11/16] 0.0, 128
    %512 = vxpose.xlu0.b32.cont [12/16] 0.0, 128
    %513 = vxpose.xlu0.b32.cont [13/16] 0.0, 128
    %514 = vxpose.xlu0.b32.cont [14/16] 0.0, 128
    %515 = vxpose.xlu0.b32.cont [15/16] 0.0, 128
    %516 = vxpose.xlu0.b32.end [16/16] 0.0, 128
    %v517 = vpop.trf.xlu0
    %v518 = vpop.trf.xlu0
    %v519 = vpop.trf.xlu0
    %v520 = vpop.trf.xlu0
    %v521 = vpop.trf.xlu0
    %v522 = vpop.trf.xlu0
    %v523 = vpop.trf.xlu0
    %v524 = vpop.trf.xlu0
    %v525 = vpop.trf.xlu0
    %v526 = vpop.trf.xlu0
    %v527 = vpop.trf.xlu0
    %v528 = vpop.trf.xlu0
    %v529 = vpop.trf.xlu0
    %v530 = vpop.trf.xlu0
    %v531 = vpop.trf.xlu0
    %v532 = vpop.trf.xlu0
    %533 = vxpose.xlu0.b32.start [1/16] %v205, 128
    %534 = vxpose.xlu0.b32.cont [2/16] 0.0, 128
    %535 = vxpose.xlu0.b32.cont [3/16] 0.0, 128
    %536 = vxpose.xlu0.b32.cont [4/16] 0.0, 128
    %537 = vxpose.xlu0.b32.cont [5/16] 0.0, 128
    %538 = vxpose.xlu0.b32.cont [6/16] 0.0, 128
    %539 = vxpose.xlu0.b32.cont [7/16] 0.0, 128
    %540 = vxpose.xlu0.b32.cont [8/16] 0.0, 128
    %541 = vxpose.xlu0.b32.cont [9/16] 0.0, 128
    %542 = vxpose.xlu0.b32.cont [10/16] 0.0, 128
    %543 = vxpose.xlu0.b32.cont [11/16] 0.0, 128
    %544 = vxpose.xlu0.b32.cont [12/16] 0.0, 128
    %545 = vxpose.xlu0.b32.cont [13/16] 0.0, 128
    %546 = vxpose.xlu0.b32.cont [14/16] 0.0, 128
    %547 = vxpose.xlu0.b32.cont [15/16] 0.0, 128
    %548 = vxpose.xlu0.b32.end [16/16] 0.0, 128
    %v549 = vpop.trf.xlu0
    %v550 = vpop.trf.xlu0
    %v551 = vpop.trf.xlu0
    %v552 = vpop.trf.xlu0
    %v553 = vpop.trf.xlu0
    %v554 = vpop.trf.xlu0
    %v555 = vpop.trf.xlu0
    %v556 = vpop.trf.xlu0
    %v557 = vpop.trf.xlu0
    %v558 = vpop.trf.xlu0
    %v559 = vpop.trf.xlu0
    %v560 = vpop.trf.xlu0
    %v561 = vpop.trf.xlu0
    %v562 = vpop.trf.xlu0
    %v563 = vpop.trf.xlu0
    %v564 = vpop.trf.xlu0
    %565 = vxpose.xlu0.b32.start [1/16] %v206, 128
    %566 = vxpose.xlu0.b32.cont [2/16] 0.0, 128
    %567 = vxpose.xlu0.b32.cont [3/16] 0.0, 128
    %568 = vxpose.xlu0.b32.cont [4/16] 0.0, 128
    %569 = vxpose.xlu0.b32.cont [5/16] 0.0, 128
    %570 = vxpose.xlu0.b32.cont [6/16] 0.0, 128
    %571 = vxpose.xlu0.b32.cont [7/16] 0.0, 128
    %572 = vxpose.xlu0.b32.cont [8/16] 0.0, 128
    %573 = vxpose.xlu0.b32.cont [9/16] 0.0, 128
    %574 = vxpose.xlu0.b32.cont [10/16] 0.0, 128
    %575 = vxpose.xlu0.b32.cont [11/16] 0.0, 128
    %576 = vxpose.xlu0.b32.cont [12/16] 0.0, 128
    %577 = vxpose.xlu0.b32.cont [13/16] 0.0, 128
    %578 = vxpose.xlu0.b32.cont [14/16] 0.0, 128
    %579 = vxpose.xlu0.b32.cont [15/16] 0.0, 128
    %580 = vxpose.xlu0.b32.end [16/16] 0.0, 128
    %v581 = vpop.trf.xlu0
    %v582 = vpop.trf.xlu0
    %v583 = vpop.trf.xlu0
    %v584 = vpop.trf.xlu0
    %v585 = vpop.trf.xlu0
    %v586 = vpop.trf.xlu0
    %v587 = vpop.trf.xlu0
    %v588 = vpop.trf.xlu0
    %v589 = vpop.trf.xlu0
    %v590 = vpop.trf.xlu0
    %v591 = vpop.trf.xlu0
    %v592 = vpop.trf.xlu0
    %v593 = vpop.trf.xlu0
    %v594 = vpop.trf.xlu0
    %v595 = vpop.trf.xlu0
    %v596 = vpop.trf.xlu0
    %597 = vxpose.xlu0.b32.start [1/16] %v207, 128
    %598 = vxpose.xlu0.b32.cont [2/16] 0.0, 128
    %599 = vxpose.xlu0.b32.cont [3/16] 0.0, 128
    %600 = vxpose.xlu0.b32.cont [4/16] 0.0, 128
    %601 = vxpose.xlu0.b32.cont [5/16] 0.0, 128
    %602 = vxpose.xlu0.b32.cont [6/16] 0.0, 128
    %603 = vxpose.xlu0.b32.cont [7/16] 0.0, 128
    %604 = vxpose.xlu0.b32.cont [8/16] 0.0, 128
    %605 = vxpose.xlu0.b32.cont [9/16] 0.0, 128
    %606 = vxpose.xlu0.b32.cont [10/16] 0.0, 128
    %607 = vxpose.xlu0.b32.cont [11/16] 0.0, 128
    %608 = vxpose.xlu0.b32.cont [12/16] 0.0, 128
    %609 = vxpose.xlu0.b32.cont [13/16] 0.0, 128
    %610 = vxpose.xlu0.b32.cont [14/16] 0.0, 128
    %611 = vxpose.xlu0.b32.cont [15/16] 0.0, 128
    %612 = vxpose.xlu0.b32.end [16/16] 0.0, 128
    %v613 = vpop.trf.xlu0
    %v614 = vpop.trf.xlu0
    %v615 = vpop.trf.xlu0
    %v616 = vpop.trf.xlu0
    %v617 = vpop.trf.xlu0
    %v618 = vpop.trf.xlu0
    %v619 = vpop.trf.xlu0
    %v620 = vpop.trf.xlu0
    %v621 = vpop.trf.xlu0
    %v622 = vpop.trf.xlu0
    %v623 = vpop.trf.xlu0
    %v624 = vpop.trf.xlu0
    %v625 = vpop.trf.xlu0
    %v626 = vpop.trf.xlu0
    %v627 = vpop.trf.xlu0
    %v628 = vpop.trf.xlu0
    %629 = vxpose.xlu0.b32.start [1/16] %v208, 128
    %630 = vxpose.xlu0.b32.cont [2/16] 0.0, 128
    %631 = vxpose.xlu0.b32.cont [3/16] 0.0, 128
    %632 = vxpose.xlu0.b32.cont [4/16] 0.0, 128
    %633 = vxpose.xlu0.b32.cont [5/16] 0.0, 128
    %634 = vxpose.xlu0.b32.cont [6/16] 0.0, 128
    %635 = vxpose.xlu0.b32.cont [7/16] 0.0, 128
    %636 = vxpose.xlu0.b32.cont [8/16] 0.0, 128
    %637 = vxpose.xlu0.b32.cont [9/16] 0.0, 128
    %638 = vxpose.xlu0.b32.cont [10/16] 0.0, 128
    %639 = vxpose.xlu0.b32.cont [11/16] 0.0, 128
    %640 = vxpose.xlu0.b32.cont [12/16] 0.0, 128
    %641 = vxpose.xlu0.b32.cont [13/16] 0.0, 128
    %642 = vxpose.xlu0.b32.cont [14/16] 0.0, 128
    %643 = vxpose.xlu0.b32.cont [15/16] 0.0, 128
    %644 = vxpose.xlu0.b32.end [16/16] 0.0, 128
    %v645 = vpop.trf.xlu0
    %v646 = vpop.trf.xlu0
    %v647 = vpop.trf.xlu0
    %v648 = vpop.trf.xlu0
    %v649 = vpop.trf.xlu0
    %v650 = vpop.trf.xlu0
    %v651 = vpop.trf.xlu0
    %v652 = vpop.trf.xlu0
    %v653 = vpop.trf.xlu0
    %v654 = vpop.trf.xlu0
    %v655 = vpop.trf.xlu0
    %v656 = vpop.trf.xlu0
    %v657 = vpop.trf.xlu0
    %v658 = vpop.trf.xlu0
    %v659 = vpop.trf.xlu0
    %v660 = vpop.trf.xlu0
    %661 = vxpose.xlu0.b32.start [1/16] %v209, 128
    %662 = vxpose.xlu0.b32.cont [2/16] 0.0, 128
    %663 = vxpose.xlu0.b32.cont [3/16] 0.0, 128
    %664 = vxpose.xlu0.b32.cont [4/16] 0.0, 128
    %665 = vxpose.xlu0.b32.cont [5/16] 0.0, 128
    %666 = vxpose.xlu0.b32.cont [6/16] 0.0, 128
    %667 = vxpose.xlu0.b32.cont [7/16] 0.0, 128
    %668 = vxpose.xlu0.b32.cont [8/16] 0.0, 128
    %669 = vxpose.xlu0.b32.cont [9/16] 0.0, 128
    %670 = vxpose.xlu0.b32.cont [10/16] 0.0, 128
    %671 = vxpose.xlu0.b32.cont [11/16] 0.0, 128
    %672 = vxpose.xlu0.b32.cont [12/16] 0.0, 128
    %673 = vxpose.xlu0.b32.cont [13/16] 0.0, 128
    %674 = vxpose.xlu0.b32.cont [14/16] 0.0, 128
    %675 = vxpose.xlu0.b32.cont [15/16] 0.0, 128
    %676 = vxpose.xlu0.b32.end [16/16] 0.0, 128
    %v677 = vpop.trf.xlu0
    %v678 = vpop.trf.xlu0
    %v679 = vpop.trf.xlu0
    %v680 = vpop.trf.xlu0
    %v681 = vpop.trf.xlu0
    %v682 = vpop.trf.xlu0
    %v683 = vpop.trf.xlu0
    %v684 = vpop.trf.xlu0
    %v685 = vpop.trf.xlu0
    %v686 = vpop.trf.xlu0
    %v687 = vpop.trf.xlu0
    %v688 = vpop.trf.xlu0
    %v689 = vpop.trf.xlu0
    %v690 = vpop.trf.xlu0
    %v691 = vpop.trf.xlu0
    %v692 = vpop.trf.xlu0
    %693 = vxpose.xlu0.b32.start [1/16] %v210, 128
    %694 = vxpose.xlu0.b32.cont [2/16] 0.0, 128
    %695 = vxpose.xlu0.b32.cont [3/16] 0.0, 128
    %696 = vxpose.xlu0.b32.cont [4/16] 0.0, 128
    %697 = vxpose.xlu0.b32.cont [5/16] 0.0, 128
    %698 = vxpose.xlu0.b32.cont [6/16] 0.0, 128
    %699 = vxpose.xlu0.b32.cont [7/16] 0.0, 128
    %700 = vxpose.xlu0.b32.cont [8/16] 0.0, 128
    %701 = vxpose.xlu0.b32.cont [9/16] 0.0, 128
    %702 = vxpose.xlu0.b32.cont [10/16] 0.0, 128
    %703 = vxpose.xlu0.b32.cont [11/16] 0.0, 128
    %704 = vxpose.xlu0.b32.cont [12/16] 0.0, 128
    %705 = vxpose.xlu0.b32.cont [13/16] 0.0, 128
    %706 = vxpose.xlu0.b32.cont [14/16] 0.0, 128
    %707 = vxpose.xlu0.b32.cont [15/16] 0.0, 128
    %708 = vxpose.xlu0.b32.end [16/16] 0.0, 128
    %v709 = vpop.trf.xlu0
    %v710 = vpop.trf.xlu0
    %v711 = vpop.trf.xlu0
    %v712 = vpop.trf.xlu0
    %v713 = vpop.trf.xlu0
    %v714 = vpop.trf.xlu0
    %v715 = vpop.trf.xlu0
    %v716 = vpop.trf.xlu0
    %v717 = vpop.trf.xlu0
    %v718 = vpop.trf.xlu0
    %v719 = vpop.trf.xlu0
    %v720 = vpop.trf.xlu0
    %v721 = vpop.trf.xlu0
    %v722 = vpop.trf.xlu0
    %v723 = vpop.trf.xlu0
    %v724 = vpop.trf.xlu0
    %725 = vxpose.xlu0.b32.start [1/16] %v211, 128
    %726 = vxpose.xlu0.b32.cont [2/16] 0.0, 128
    %727 = vxpose.xlu0.b32.cont [3/16] 0.0, 128
    %728 = vxpose.xlu0.b32.cont [4/16] 0.0, 128
    %729 = vxpose.xlu0.b32.cont [5/16] 0.0, 128
    %730 = vxpose.xlu0.b32.cont [6/16] 0.0, 128
    %731 = vxpose.xlu0.b32.cont [7/16] 0.0, 128
    %732 = vxpose.xlu0.b32.cont [8/16] 0.0, 128
    %733 = vxpose.xlu0.b32.cont [9/16] 0.0, 128
    %734 = vxpose.xlu0.b32.cont [10/16] 0.0, 128
    %735 = vxpose.xlu0.b32.cont [11/16] 0.0, 128
    %736 = vxpose.xlu0.b32.cont [12/16] 0.0, 128
    %737 = vxpose.xlu0.b32.cont [13/16] 0.0, 128
    %738 = vxpose.xlu0.b32.cont [14/16] 0.0, 128
    %739 = vxpose.xlu0.b32.cont [15/16] 0.0, 128
    %740 = vxpose.xlu0.b32.end [16/16] 0.0, 128
    %v741 = vpop.trf.xlu0
    %v742 = vpop.trf.xlu0
    %v743 = vpop.trf.xlu0
    %v744 = vpop.trf.xlu0
    %v745 = vpop.trf.xlu0
    %v746 = vpop.trf.xlu0
    %v747 = vpop.trf.xlu0
    %v748 = vpop.trf.xlu0
    %v749 = vpop.trf.xlu0
    %v750 = vpop.trf.xlu0
    %v751 = vpop.trf.xlu0
    %v752 = vpop.trf.xlu0
    %v753 = vpop.trf.xlu0
    %v754 = vpop.trf.xlu0
    %v755 = vpop.trf.xlu0
    %v756 = vpop.trf.xlu0
    %757 = vxpose.xlu0.b32.start [1/16] %v212, 128
    %758 = vxpose.xlu0.b32.cont [2/16] 0.0, 128
    %759 = vxpose.xlu0.b32.cont [3/16] 0.0, 128
    %760 = vxpose.xlu0.b32.cont [4/16] 0.0, 128
    %761 = vxpose.xlu0.b32.cont [5/16] 0.0, 128
    %762 = vxpose.xlu0.b32.cont [6/16] 0.0, 128
    %763 = vxpose.xlu0.b32.cont [7/16] 0.0, 128
    %764 = vxpose.xlu0.b32.cont [8/16] 0.0, 128
    %765 = vxpose.xlu0.b32.cont [9/16] 0.0, 128
    %766 = vxpose.xlu0.b32.cont [10/16] 0.0, 128
    %767 = vxpose.xlu0.b32.cont [11/16] 0.0, 128
    %768 = vxpose.xlu0.b32.cont [12/16] 0.0, 128
    %769 = vxpose.xlu0.b32.cont [13/16] 0.0, 128
    %770 = vxpose.xlu0.b32.cont [14/16] 0.0, 128
    %771 = vxpose.xlu0.b32.cont [15/16] 0.0, 128
    %772 = vxpose.xlu0.b32.end [16/16] 0.0, 128
    %v773 = vpop.trf.xlu0
    %v774 = vpop.trf.xlu0
    %v775 = vpop.trf.xlu0
    %v776 = vpop.trf.xlu0
    %v777 = vpop.trf.xlu0
    %v778 = vpop.trf.xlu0
    %v779 = vpop.trf.xlu0
    %v780 = vpop.trf.xlu0
    %v781 = vpop.trf.xlu0
    %v782 = vpop.trf.xlu0
    %v783 = vpop.trf.xlu0
    %v784 = vpop.trf.xlu0
    %v785 = vpop.trf.xlu0
    %v786 = vpop.trf.xlu0
    %v787 = vpop.trf.xlu0
    %v788 = vpop.trf.xlu0
    %v789 = vlaneseq
    %v790 = vshrl.u32 %v789, 7
    %v791 = vlaneseq
    %v792 = vand.u32 %v791, 127
    %vm793 = vcmp.ge.s32.totalorder %v792, 0
    %vm794 = vcmp.ge.s32.totalorder %v792, 8
    %v795 = vadd.s32 %v790, 8
    %vm796 = vcmp.le.s32.totalorder %v792, %v790
    %vm797 = vcmp.le.s32.totalorder %v792, %v795
    %vm798 = vmand %vm793, %vm796
    %vm799 = vmand %vm794, %vm797
    %v800 = vsel %vm798, 0.0, -1e+30
    %v801 = vsel %vm799, 0.0, -1e+30
    %vm802 = vcmask 64512
    %v804 = vsel %vm802, %v293, 0
    %v807 = vsel %vm802, %v294, 0
    %809 = vmatpush.msra.mxu0 0.0
    %810 = vmatpush.msra.mxu0 0.0
    %811 = vmatpush.msra.mxu0 0.0
    %812 = vmatpush.msra.mxu0 0.0
    %813 = vmatpush.msra.mxu0 0.0
    %814 = vmatpush.msra.mxu0 0.0
    %815 = vmatpush.msra.mxu0 0.0
    %816 = vmatpush.msra.mxu0 0.0
    %817 = vmatpush.msra.mxu0 0.0
    %818 = vmatpush.msra.mxu0 0.0
    %819 = vmatpush.msra.mxu0 0.0
    %820 = vmatpush.msra.mxu0 0.0
    %821 = vmatpush.msra.mxu0 0.0
    %822 = vmatpush.msra.mxu0 0.0
    %823 = vmatpush.msra.mxu0 0.0
    %824 = vmatpush.msra.mxu0 %v229
    %825 = vmatmul.f32.gmra.mxu0 %v804
    %v826 = vpop.f32.mrf.mxu0
    %v827 = vadd.f32 %v800, %v826
    %828 = vmatmul.f32.gmra.mxu0 %v807
    %v829 = vpop.f32.mrf.mxu0
    %v830 = vadd.f32 %v801, %v829
    %831 = vdwg.mxu0
    %v833 = vsel %vm802, %v325, 0
    %v836 = vsel %vm802, %v326, 0
    %838 = vmatpush.msra.mxu0 0.0
    %839 = vmatpush.msra.mxu0 0.0
    %840 = vmatpush.msra.mxu0 0.0
    %841 = vmatpush.msra.mxu0 0.0
    %842 = vmatpush.msra.mxu0 0.0
    %843 = vmatpush.msra.mxu0 0.0
    %844 = vmatpush.msra.mxu0 0.0
    %845 = vmatpush.msra.mxu0 0.0
    %846 = vmatpush.msra.mxu0 0.0
    %847 = vmatpush.msra.mxu0 0.0
    %848 = vmatpush.msra.mxu0 0.0
    %849 = vmatpush.msra.mxu0 0.0
    %850 = vmatpush.msra.mxu0 0.0
    %851 = vmatpush.msra.mxu0 0.0
    %852 = vmatpush.msra.mxu0 0.0
    %853 = vmatpush.msra.mxu0 %v230
    %854 = vmatmul.f32.gmra.mxu0 %v833
    %v855 = vpop.f32.mrf.mxu0
    %v856 = vadd.f32 %v800, %v855
    %857 = vmatmul.f32.gmra.mxu0 %v836
    %v858 = vpop.f32.mrf.mxu0
    %v859 = vadd.f32 %v801, %v858
    %860 = vdwg.mxu0
    %v862 = vsel %vm802, %v357, 0
    %v865 = vsel %vm802, %v358, 0
    %867 = vmatpush.msra.mxu0 0.0
    %868 = vmatpush.msra.mxu0 0.0
    %869 = vmatpush.msra.mxu0 0.0
    %870 = vmatpush.msra.mxu0 0.0
    %871 = vmatpush.msra.mxu0 0.0
    %872 = vmatpush.msra.mxu0 0.0
    %873 = vmatpush.msra.mxu0 0.0
    %874 = vmatpush.msra.mxu0 0.0
    %875 = vmatpush.msra.mxu0 0.0
    %876 = vmatpush.msra.mxu0 0.0
    %877 = vmatpush.msra.mxu0 0.0
    %878 = vmatpush.msra.mxu0 0.0
    %879 = vmatpush.msra.mxu0 0.0
    %880 = vmatpush.msra.mxu0 0.0
    %881 = vmatpush.msra.mxu0 0.0
    %882 = vmatpush.msra.mxu0 %v231
    %883 = vmatmul.f32.gmra.mxu0 %v862
    %v884 = vpop.f32.mrf.mxu0
    %v885 = vadd.f32 %v800, %v884
    %886 = vmatmul.f32.gmra.mxu0 %v865
    %v887 = vpop.f32.mrf.mxu0
    %v888 = vadd.f32 %v801, %v887
    %889 = vdwg.mxu0
    %v891 = vsel %vm802, %v389, 0
    %v894 = vsel %vm802, %v390, 0
    %896 = vmatpush.msra.mxu0 0.0
    %897 = vmatpush.msra.mxu0 0.0
    %898 = vmatpush.msra.mxu0 0.0
    %899 = vmatpush.msra.mxu0 0.0
    %900 = vmatpush.msra.mxu0 0.0
    %901 = vmatpush.msra.mxu0 0.0
    %902 = vmatpush.msra.mxu0 0.0
    %903 = vmatpush.msra.mxu0 0.0
    %904 = vmatpush.msra.mxu0 0.0
    %905 = vmatpush.msra.mxu0 0.0
    %906 = vmatpush.msra.mxu0 0.0
    %907 = vmatpush.msra.mxu0 0.0
    %908 = vmatpush.msra.mxu0 0.0
    %909 = vmatpush.msra.mxu0 0.0
    %910 = vmatpush.msra.mxu0 0.0
    %911 = vmatpush.msra.mxu0 %v232
    %912 = vmatmul.f32.gmra.mxu0 %v891
    %v913 = vpop.f32.mrf.mxu0
    %v914 = vadd.f32 %v800, %v913
    %915 = vmatmul.f32.gmra.mxu0 %v894
    %v916 = vpop.f32.mrf.mxu0
    %v917 = vadd.f32 %v801, %v916
    %918 = vdwg.mxu0
    %v920 = vsel %vm802, %v421, 0
    %v923 = vsel %vm802, %v422, 0
    %925 = vmatpush.msra.mxu0 0.0
    %926 = vmatpush.msra.mxu0 0.0
    %927 = vmatpush.msra.mxu0 0.0
    %928 = vmatpush.msra.mxu0 0.0
    %929 = vmatpush.msra.mxu0 0.0
    %930 = vmatpush.msra.mxu0 0.0
    %931 = vmatpush.msra.mxu0 0.0
    %932 = vmatpush.msra.mxu0 0.0
    %933 = vmatpush.msra.mxu0 0.0
    %934 = vmatpush.msra.mxu0 0.0
    %935 = vmatpush.msra.mxu0 0.0
    %936 = vmatpush.msra.mxu0 0.0
    %937 = vmatpush.msra.mxu0 0.0
    %938 = vmatpush.msra.mxu0 0.0
    %939 = vmatpush.msra.mxu0 0.0
    %940 = vmatpush.msra.mxu0 %v233
    %941 = vmatmul.f32.gmra.mxu0 %v920
    %v942 = vpop.f32.mrf.mxu0
    %v943 = vadd.f32 %v800, %v942
    %944 = vmatmul.f32.gmra.mxu0 %v923
    %v945 = vpop.f32.mrf.mxu0
    %v946 = vadd.f32 %v801, %v945
    %947 = vdwg.mxu0
    %v949 = vsel %vm802, %v453, 0
    %v952 = vsel %vm802, %v454, 0
    %954 = vmatpush.msra.mxu0 0.0
    %955 = vmatpush.msra.mxu0 0.0
    %956 = vmatpush.msra.mxu0 0.0
    %957 = vmatpush.msra.mxu0 0.0
    %958 = vmatpush.msra.mxu0 0.0
    %959 = vmatpush.msra.mxu0 0.0
    %960 = vmatpush.msra.mxu0 0.0
    %961 = vmatpush.msra.mxu0 0.0
    %962 = vmatpush.msra.mxu0 0.0
    %963 = vmatpush.msra.mxu0 0.0
    %964 = vmatpush.msra.mxu0 0.0
    %965 = vmatpush.msra.mxu0 0.0
    %966 = vmatpush.msra.mxu0 0.0
    %967 = vmatpush.msra.mxu0 0.0
    %968 = vmatpush.msra.mxu0 0.0
    %969 = vmatpush.msra.mxu0 %v234
    %970 = vmatmul.f32.gmra.mxu0 %v949
    %v971 = vpop.f32.mrf.mxu0
    %v972 = vadd.f32 %v800, %v971
    %973 = vmatmul.f32.gmra.mxu0 %v952
    %v974 = vpop.f32.mrf.mxu0
    %v975 = vadd.f32 %v801, %v974
    %976 = vdwg.mxu0
    %v978 = vsel %vm802, %v485, 0
    %v981 = vsel %vm802, %v486, 0
    %983 = vmatpush.msra.mxu0 0.0
    %984 = vmatpush.msra.mxu0 0.0
    %985 = vmatpush.msra.mxu0 0.0
    %986 = vmatpush.msra.mxu0 0.0
    %987 = vmatpush.msra.mxu0 0.0
    %988 = vmatpush.msra.mxu0 0.0
    %989 = vmatpush.msra.mxu0 0.0
    %990 = vmatpush.msra.mxu0 0.0
    %991 = vmatpush.msra.mxu0 0.0
    %992 = vmatpush.msra.mxu0 0.0
    %993 = vmatpush.msra.mxu0 0.0
    %994 = vmatpush.msra.mxu0 0.0
    %995 = vmatpush.msra.mxu0 0.0
    %996 = vmatpush.msra.mxu0 0.0
    %997 = vmatpush.msra.mxu0 0.0
    %998 = vmatpush.msra.mxu0 %v235
    %999 = vmatmul.f32.gmra.mxu0 %v978
    %v1000 = vpop.f32.mrf.mxu0
    %v1001 = vadd.f32 %v800, %v1000
    %1002 = vmatmul.f32.gmra.mxu0 %v981
    %v1003 = vpop.f32.mrf.mxu0
    %v1004 = vadd.f32 %v801, %v1003
    %1005 = vdwg.mxu0
    %v1007 = vsel %vm802, %v517, 0
    %v1010 = vsel %vm802, %v518, 0
    %1012 = vmatpush.msra.mxu0 0.0
    %1013 = vmatpush.msra.mxu0 0.0
    %1014 = vmatpush.msra.mxu0 0.0
    %1015 = vmatpush.msra.mxu0 0.0
    %1016 = vmatpush.msra.mxu0 0.0
    %1017 = vmatpush.msra.mxu0 0.0
    %1018 = vmatpush.msra.mxu0 0.0
    %1019 = vmatpush.msra.mxu0 0.0
    %1020 = vmatpush.msra.mxu0 0.0
    %1021 = vmatpush.msra.mxu0 0.0
    %1022 = vmatpush.msra.mxu0 0.0
    %1023 = vmatpush.msra.mxu0 0.0
    %1024 = vmatpush.msra.mxu0 0.0
    %1025 = vmatpush.msra.mxu0 0.0
    %1026 = vmatpush.msra.mxu0 0.0
    %1027 = vmatpush.msra.mxu0 %v236
    %1028 = vmatmul.f32.gmra.mxu0 %v1007
    %v1029 = vpop.f32.mrf.mxu0
    %v1030 = vadd.f32 %v800, %v1029
    %1031 = vmatmul.f32.gmra.mxu0 %v1010
    %v1032 = vpop.f32.mrf.mxu0
    %v1033 = vadd.f32 %v801, %v1032
    %1034 = vdwg.mxu0
    %v1036 = vsel %vm802, %v549, 0
    %v1039 = vsel %vm802, %v550, 0
    %1041 = vmatpush.msra.mxu0 0.0
    %1042 = vmatpush.msra.mxu0 0.0
    %1043 = vmatpush.msra.mxu0 0.0
    %1044 = vmatpush.msra.mxu0 0.0
    %1045 = vmatpush.msra.mxu0 0.0
    %1046 = vmatpush.msra.mxu0 0.0
    %1047 = vmatpush.msra.mxu0 0.0
    %1048 = vmatpush.msra.mxu0 0.0
    %1049 = vmatpush.msra.mxu0 0.0
    %1050 = vmatpush.msra.mxu0 0.0
    %1051 = vmatpush.msra.mxu0 0.0
    %1052 = vmatpush.msra.mxu0 0.0
    %1053 = vmatpush.msra.mxu0 0.0
    %1054 = vmatpush.msra.mxu0 0.0
    %1055 = vmatpush.msra.mxu0 0.0
    %1056 = vmatpush.msra.mxu0 %v237
    %1057 = vmatmul.f32.gmra.mxu0 %v1036
    %v1058 = vpop.f32.mrf.mxu0
    %v1059 = vadd.f32 %v800, %v1058
    %1060 = vmatmul.f32.gmra.mxu0 %v1039
    %v1061 = vpop.f32.mrf.mxu0
    %v1062 = vadd.f32 %v801, %v1061
    %1063 = vdwg.mxu0
    %v1065 = vsel %vm802, %v581, 0
    %v1068 = vsel %vm802, %v582, 0
    %1070 = vmatpush.msra.mxu0 0.0
    %1071 = vmatpush.msra.mxu0 0.0
    %1072 = vmatpush.msra.mxu0 0.0
    %1073 = vmatpush.msra.mxu0 0.0
    %1074 = vmatpush.msra.mxu0 0.0
    %1075 = vmatpush.msra.mxu0 0.0
    %1076 = vmatpush.msra.mxu0 0.0
    %1077 = vmatpush.msra.mxu0 0.0
    %1078 = vmatpush.msra.mxu0 0.0
    %1079 = vmatpush.msra.mxu0 0.0
    %1080 = vmatpush.msra.mxu0 0.0
    %1081 = vmatpush.msra.mxu0 0.0
    %1082 = vmatpush.msra.mxu0 0.0
    %1083 = vmatpush.msra.mxu0 0.0
    %1084 = vmatpush.msra.mxu0 0.0
    %1085 = vmatpush.msra.mxu0 %v238
    %1086 = vmatmul.f32.gmra.mxu0 %v1065
    %v1087 = vpop.f32.mrf.mxu0
    %v1088 = vadd.f32 %v800, %v1087
    %1089 = vmatmul.f32.gmra.mxu0 %v1068
    %v1090 = vpop.f32.mrf.mxu0
    %v1091 = vadd.f32 %v801, %v1090
    %1092 = vdwg.mxu0
    %v1094 = vsel %vm802, %v613, 0
    %v1097 = vsel %vm802, %v614, 0
    %1099 = vmatpush.msra.mxu0 0.0
    %1100 = vmatpush.msra.mxu0 0.0
    %1101 = vmatpush.msra.mxu0 0.0
    %1102 = vmatpush.msra.mxu0 0.0
    %1103 = vmatpush.msra.mxu0 0.0
    %1104 = vmatpush.msra.mxu0 0.0
    %1105 = vmatpush.msra.mxu0 0.0
    %1106 = vmatpush.msra.mxu0 0.0
    %1107 = vmatpush.msra.mxu0 0.0
    %1108 = vmatpush.msra.mxu0 0.0
    %1109 = vmatpush.msra.mxu0 0.0
    %1110 = vmatpush.msra.mxu0 0.0
    %1111 = vmatpush.msra.mxu0 0.0
    %1112 = vmatpush.msra.mxu0 0.0
    %1113 = vmatpush.msra.mxu0 0.0
    %1114 = vmatpush.msra.mxu0 %v239
    %1115 = vmatmul.f32.gmra.mxu0 %v1094
    %v1116 = vpop.f32.mrf.mxu0
    %v1117 = vadd.f32 %v800, %v1116
    %1118 = vmatmul.f32.gmra.mxu0 %v1097
    %v1119 = vpop.f32.mrf.mxu0
    %v1120 = vadd.f32 %v801, %v1119
    %1121 = vdwg.mxu0
    %v1123 = vsel %vm802, %v645, 0
    %v1126 = vsel %vm802, %v646, 0
    %1128 = vmatpush.msra.mxu0 0.0
    %1129 = vmatpush.msra.mxu0 0.0
    %1130 = vmatpush.msra.mxu0 0.0
    %1131 = vmatpush.msra.mxu0 0.0
    %1132 = vmatpush.msra.mxu0 0.0
    %1133 = vmatpush.msra.mxu0 0.0
    %1134 = vmatpush.msra.mxu0 0.0
    %1135 = vmatpush.msra.mxu0 0.0
    %1136 = vmatpush.msra.mxu0 0.0
    %1137 = vmatpush.msra.mxu0 0.0
    %1138 = vmatpush.msra.mxu0 0.0
    %1139 = vmatpush.msra.mxu0 0.0
    %1140 = vmatpush.msra.mxu0 0.0
    %1141 = vmatpush.msra.mxu0 0.0
    %1142 = vmatpush.msra.mxu0 0.0
    %1143 = vmatpush.msra.mxu0 %v240
    %1144 = vmatmul.f32.gmra.mxu0 %v1123
    %v1145 = vpop.f32.mrf.mxu0
    %v1146 = vadd.f32 %v800, %v1145
    %1147 = vmatmul.f32.gmra.mxu0 %v1126
    %v1148 = vpop.f32.mrf.mxu0
    %v1149 = vadd.f32 %v801, %v1148
    %1150 = vdwg.mxu0
    %v1152 = vsel %vm802, %v677, 0
    %v1155 = vsel %vm802, %v678, 0
    %1157 = vmatpush.msra.mxu0 0.0
    %1158 = vmatpush.msra.mxu0 0.0
    %1159 = vmatpush.msra.mxu0 0.0
    %1160 = vmatpush.msra.mxu0 0.0
    %1161 = vmatpush.msra.mxu0 0.0
    %1162 = vmatpush.msra.mxu0 0.0
    %1163 = vmatpush.msra.mxu0 0.0
    %1164 = vmatpush.msra.mxu0 0.0
    %1165 = vmatpush.msra.mxu0 0.0
    %1166 = vmatpush.msra.mxu0 0.0
    %1167 = vmatpush.msra.mxu0 0.0
    %1168 = vmatpush.msra.mxu0 0.0
    %1169 = vmatpush.msra.mxu0 0.0
    %1170 = vmatpush.msra.mxu0 0.0
    %1171 = vmatpush.msra.mxu0 0.0
    %1172 = vmatpush.msra.mxu0 %v241
    %1173 = vmatmul.f32.gmra.mxu0 %v1152
    %v1174 = vpop.f32.mrf.mxu0
    %v1175 = vadd.f32 %v800, %v1174
    %1176 = vmatmul.f32.gmra.mxu0 %v1155
    %v1177 = vpop.f32.mrf.mxu0
    %v1178 = vadd.f32 %v801, %v1177
    %1179 = vdwg.mxu0
    %v1181 = vsel %vm802, %v709, 0
    %v1184 = vsel %vm802, %v710, 0
    %1186 = vmatpush.msra.mxu0 0.0
    %1187 = vmatpush.msra.mxu0 0.0
    %1188 = vmatpush.msra.mxu0 0.0
    %1189 = vmatpush.msra.mxu0 0.0
    %1190 = vmatpush.msra.mxu0 0.0
    %1191 = vmatpush.msra.mxu0 0.0
    %1192 = vmatpush.msra.mxu0 0.0
    %1193 = vmatpush.msra.mxu0 0.0
    %1194 = vmatpush.msra.mxu0 0.0
    %1195 = vmatpush.msra.mxu0 0.0
    %1196 = vmatpush.msra.mxu0 0.0
    %1197 = vmatpush.msra.mxu0 0.0
    %1198 = vmatpush.msra.mxu0 0.0
    %1199 = vmatpush.msra.mxu0 0.0
    %1200 = vmatpush.msra.mxu0 0.0
    %1201 = vmatpush.msra.mxu0 %v242
    %1202 = vmatmul.f32.gmra.mxu0 %v1181
    %v1203 = vpop.f32.mrf.mxu0
    %v1204 = vadd.f32 %v800, %v1203
    %1205 = vmatmul.f32.gmra.mxu0 %v1184
    %v1206 = vpop.f32.mrf.mxu0
    %v1207 = vadd.f32 %v801, %v1206
    %1208 = vdwg.mxu0
    %v1210 = vsel %vm802, %v741, 0
    %v1213 = vsel %vm802, %v742, 0
    %1215 = vmatpush.msra.mxu0 0.0
    %1216 = vmatpush.msra.mxu0 0.0
    %1217 = vmatpush.msra.mxu0 0.0
    %1218 = vmatpush.msra.mxu0 0.0
    %1219 = vmatpush.msra.mxu0 0.0
    %1220 = vmatpush.msra.mxu0 0.0
    %1221 = vmatpush.msra.mxu0 0.0
    %1222 = vmatpush.msra.mxu0 0.0
    %1223 = vmatpush.msra.mxu0 0.0
    %1224 = vmatpush.msra.mxu0 0.0
    %1225 = vmatpush.msra.mxu0 0.0
    %1226 = vmatpush.msra.mxu0 0.0
    %1227 = vmatpush.msra.mxu0 0.0
    %1228 = vmatpush.msra.mxu0 0.0
    %1229 = vmatpush.msra.mxu0 0.0
    %1230 = vmatpush.msra.mxu0 %v243
    %1231 = vmatmul.f32.gmra.mxu0 %v1210
    %v1232 = vpop.f32.mrf.mxu0
    %v1233 = vadd.f32 %v800, %v1232
    %1234 = vmatmul.f32.gmra.mxu0 %v1213
    %v1235 = vpop.f32.mrf.mxu0
    %v1236 = vadd.f32 %v801, %v1235
    %1237 = vdwg.mxu0
    %v1239 = vsel %vm802, %v773, 0
    %v1242 = vsel %vm802, %v774, 0
    %1244 = vmatpush.msra.mxu0 0.0
    %1245 = vmatpush.msra.mxu0 0.0
    %1246 = vmatpush.msra.mxu0 0.0
    %1247 = vmatpush.msra.mxu0 0.0
    %1248 = vmatpush.msra.mxu0 0.0
    %1249 = vmatpush.msra.mxu0 0.0
    %1250 = vmatpush.msra.mxu0 0.0
    %1251 = vmatpush.msra.mxu0 0.0
    %1252 = vmatpush.msra.mxu0 0.0
    %1253 = vmatpush.msra.mxu0 0.0
    %1254 = vmatpush.msra.mxu0 0.0
    %1255 = vmatpush.msra.mxu0 0.0
    %1256 = vmatpush.msra.mxu0 0.0
    %1257 = vmatpush.msra.mxu0 0.0
    %1258 = vmatpush.msra.mxu0 0.0
    %1259 = vmatpush.msra.mxu0 %v244
    %1260 = vmatmul.f32.gmra.mxu0 %v1239
    %v1261 = vpop.f32.mrf.mxu0
    %v1262 = vadd.f32 %v800, %v1261
    %1263 = vmatmul.f32.gmra.mxu0 %v1242
    %v1264 = vpop.f32.mrf.mxu0
    %v1265 = vadd.f32 %v801, %v1264
    %1266 = vdwg.mxu0
    %vm1267 = vcmask 130048
    %v1268 = vsel %vm1267, %v827, -inf
    %1269 = vmax.xlane.f32.xlu0 %v1268
    %v1270 = vpop.xlane.xlu0 %1269
    %v1271 = vsel %vm1267, %v830, -inf
    %1272 = vmax.xlane.f32.xlu0 %v1271
    %v1273 = vpop.xlane.xlu0 %1272
    %v1274 = vsel %vm1267, %v856, -inf
    %1275 = vmax.xlane.f32.xlu0 %v1274
    %v1276 = vpop.xlane.xlu0 %1275
    %v1277 = vsel %vm1267, %v859, -inf
    %1278 = vmax.xlane.f32.xlu0 %v1277
    %v1279 = vpop.xlane.xlu0 %1278
    %v1280 = vsel %vm1267, %v885, -inf
    %1281 = vmax.xlane.f32.xlu0 %v1280
    %v1282 = vpop.xlane.xlu0 %1281
    %v1283 = vsel %vm1267, %v888, -inf
    %1284 = vmax.xlane.f32.xlu0 %v1283
    %v1285 = vpop.xlane.xlu0 %1284
    %v1286 = vsel %vm1267, %v914, -inf
    %1287 = vmax.xlane.f32.xlu0 %v1286
    %v1288 = vpop.xlane.xlu0 %1287
    %v1289 = vsel %vm1267, %v917, -inf
    %1290 = vmax.xlane.f32.xlu0 %v1289
    %v1291 = vpop.xlane.xlu0 %1290
    %v1292 = vsel %vm1267, %v943, -inf
    %1293 = vmax.xlane.f32.xlu0 %v1292
    %v1294 = vpop.xlane.xlu0 %1293
    %v1295 = vsel %vm1267, %v946, -inf
    %1296 = vmax.xlane.f32.xlu0 %v1295
    %v1297 = vpop.xlane.xlu0 %1296
    %v1298 = vsel %vm1267, %v972, -inf
    %1299 = vmax.xlane.f32.xlu0 %v1298
    %v1300 = vpop.xlane.xlu0 %1299
    %v1301 = vsel %vm1267, %v975, -inf
    %1302 = vmax.xlane.f32.xlu0 %v1301
    %v1303 = vpop.xlane.xlu0 %1302
    %v1304 = vsel %vm1267, %v1001, -inf
    %1305 = vmax.xlane.f32.xlu0 %v1304
    %v1306 = vpop.xlane.xlu0 %1305
    %v1307 = vsel %vm1267, %v1004, -inf
    %1308 = vmax.xlane.f32.xlu0 %v1307
    %v1309 = vpop.xlane.xlu0 %1308
    %v1310 = vsel %vm1267, %v1030, -inf
    %1311 = vmax.xlane.f32.xlu0 %v1310
    %v1312 = vpop.xlane.xlu0 %1311
    %v1313 = vsel %vm1267, %v1033, -inf
    %1314 = vmax.xlane.f32.xlu0 %v1313
    %v1315 = vpop.xlane.xlu0 %1314
    %v1316 = vsel %vm1267, %v1059, -inf
    %1317 = vmax.xlane.f32.xlu0 %v1316
    %v1318 = vpop.xlane.xlu0 %1317
    %v1319 = vsel %vm1267, %v1062, -inf
    %1320 = vmax.xlane.f32.xlu0 %v1319
    %v1321 = vpop.xlane.xlu0 %1320
    %v1322 = vsel %vm1267, %v1088, -inf
    %1323 = vmax.xlane.f32.xlu0 %v1322
    %v1324 = vpop.xlane.xlu0 %1323
    %v1325 = vsel %vm1267, %v1091, -inf
    %1326 = vmax.xlane.f32.xlu0 %v1325
    %v1327 = vpop.xlane.xlu0 %1326
    %v1328 = vsel %vm1267, %v1117, -inf
    %1329 = vmax.xlane.f32.xlu0 %v1328
    %v1330 = vpop.xlane.xlu0 %1329
    %v1331 = vsel %vm1267, %v1120, -inf
    %1332 = vmax.xlane.f32.xlu0 %v1331
    %v1333 = vpop.xlane.xlu0 %1332
    %v1334 = vsel %vm1267, %v1146, -inf
    %1335 = vmax.xlane.f32.xlu0 %v1334
    %v1336 = vpop.xlane.xlu0 %1335
    %v1337 = vsel %vm1267, %v1149, -inf
    %1338 = vmax.xlane.f32.xlu0 %v1337
    %v1339 = vpop.xlane.xlu0 %1338
    %v1340 = vsel %vm1267, %v1175, -inf
    %1341 = vmax.xlane.f32.xlu0 %v1340
    %v1342 = vpop.xlane.xlu0 %1341
    %v1343 = vsel %vm1267, %v1178, -inf
    %1344 = vmax.xlane.f32.xlu0 %v1343
    %v1345 = vpop.xlane.xlu0 %1344
    %v1346 = vsel %vm1267, %v1204, -inf
    %1347 = vmax.xlane.f32.xlu0 %v1346
    %v1348 = vpop.xlane.xlu0 %1347
    %v1349 = vsel %vm1267, %v1207, -inf
    %1350 = vmax.xlane.f32.xlu0 %v1349
    %v1351 = vpop.xlane.xlu0 %1350
    %v1352 = vsel %vm1267, %v1233, -inf
    %1353 = vmax.xlane.f32.xlu0 %v1352
    %v1354 = vpop.xlane.xlu0 %1353
    %v1355 = vsel %vm1267, %v1236, -inf
    %1356 = vmax.xlane.f32.xlu0 %v1355
    %v1357 = vpop.xlane.xlu0 %1356
    %v1358 = vsel %vm1267, %v1262, -inf
    %1359 = vmax.xlane.f32.xlu0 %v1358
    %v1360 = vpop.xlane.xlu0 %1359
    %v1361 = vsel %vm1267, %v1265, -inf
    %1362 = vmax.xlane.f32.xlu0 %v1361
    %v1363 = vpop.xlane.xlu0 %1362
    %v1364 = vsub.f32 %v827, %v1270
    %v1365 = vsub.f32 %v830, %v1273
    %v1366 = vsub.f32 %v856, %v1276
    %v1367 = vsub.f32 %v859, %v1279
    %v1368 = vsub.f32 %v885, %v1282
    %v1369 = vsub.f32 %v888, %v1285
    %v1370 = vsub.f32 %v914, %v1288
    %v1371 = vsub.f32 %v917, %v1291
    %v1372 = vsub.f32 %v943, %v1294
    %v1373 = vsub.f32 %v946, %v1297
    %v1374 = vsub.f32 %v972, %v1300
    %v1375 = vsub.f32 %v975, %v1303
    %v1376 = vsub.f32 %v1001, %v1306
    %v1377 = vsub.f32 %v1004, %v1309
    %v1378 = vsub.f32 %v1030, %v1312
    %v1379 = vsub.f32 %v1033, %v1315
    %v1380 = vsub.f32 %v1059, %v1318
    %v1381 = vsub.f32 %v1062, %v1321
    %v1382 = vsub.f32 %v1088, %v1324
    %v1383 = vsub.f32 %v1091, %v1327
    %v1384 = vsub.f32 %v1117, %v1330
    %v1385 = vsub.f32 %v1120, %v1333
    %v1386 = vsub.f32 %v1146, %v1336
    %v1387 = vsub.f32 %v1149, %v1339
    %v1388 = vsub.f32 %v1175, %v1342
    %v1389 = vsub.f32 %v1178, %v1345
    %v1390 = vsub.f32 %v1204, %v1348
    %v1391 = vsub.f32 %v1207, %v1351
    %v1392 = vsub.f32 %v1233, %v1354
    %v1393 = vsub.f32 %v1236, %v1357
    %v1394 = vsub.f32 %v1262, %v1360
    %v1395 = vsub.f32 %v1265, %v1363
    %v1396 = vmul.f32 %v1364, 1.442695
    %v1397 = vpow.pop %v1396
    %v1398 = vmul.f32 %v1365, 1.442695
    %v1399 = vpow.pop %v1398
    %v1400 = vmul.f32 %v1366, 1.442695
    %v1401 = vpow.pop %v1400
    %v1402 = vmul.f32 %v1367, 1.442695
    %v1403 = vpow.pop %v1402
    %v1404 = vmul.f32 %v1368, 1.442695
    %v1405 = vpow.pop %v1404
    %v1406 = vmul.f32 %v1369, 1.442695
    %v1407 = vpow.pop %v1406
    %v1408 = vmul.f32 %v1370, 1.442695
    %v1409 = vpow.pop %v1408
    %v1410 = vmul.f32 %v1371, 1.442695
    %v1411 = vpow.pop %v1410
    %v1412 = vmul.f32 %v1372, 1.442695
    %v1413 = vpow.pop %v1412
    %v1414 = vmul.f32 %v1373, 1.442695
    %v1415 = vpow.pop %v1414
    %v1416 = vmul.f32 %v1374, 1.442695
    %v1417 = vpow.pop %v1416
    %v1418 = vmul.f32 %v1375, 1.442695
    %v1419 = vpow.pop %v1418
    %v1420 = vmul.f32 %v1376, 1.442695
    %v1421 = vpow.pop %v1420
    %v1422 = vmul.f32 %v1377, 1.442695
    %v1423 = vpow.pop %v1422
    %v1424 = vmul.f32 %v1378, 1.442695
    %v1425 = vpow.pop %v1424
    %v1426 = vmul.f32 %v1379, 1.442695
    %v1427 = vpow.pop %v1426
    %v1428 = vmul.f32 %v1380, 1.442695
    %v1429 = vpow.pop %v1428
    %v1430 = vmul.f32 %v1381, 1.442695
    %v1431 = vpow.pop %v1430
    %v1432 = vmul.f32 %v1382, 1.442695
    %v1433 = vpow.pop %v1432
    %v1434 = vmul.f32 %v1383, 1.442695
    %v1435 = vpow.pop %v1434
    %v1436 = vmul.f32 %v1384, 1.442695
    %v1437 = vpow.pop %v1436
    %v1438 = vmul.f32 %v1385, 1.442695
    %v1439 = vpow.pop %v1438
    %v1440 = vmul.f32 %v1386, 1.442695
    %v1441 = vpow.pop %v1440
    %v1442 = vmul.f32 %v1387, 1.442695
    %v1443 = vpow.pop %v1442
    %v1444 = vmul.f32 %v1388, 1.442695
    %v1445 = vpow.pop %v1444
    %v1446 = vmul.f32 %v1389, 1.442695
    %v1447 = vpow.pop %v1446
    %v1448 = vmul.f32 %v1390, 1.442695
    %v1449 = vpow.pop %v1448
    %v1450 = vmul.f32 %v1391, 1.442695
    %v1451 = vpow.pop %v1450
    %v1452 = vmul.f32 %v1392, 1.442695
    %v1453 = vpow.pop %v1452
    %v1454 = vmul.f32 %v1393, 1.442695
    %v1455 = vpow.pop %v1454
    %v1456 = vmul.f32 %v1394, 1.442695
    %v1457 = vpow.pop %v1456
    %v1458 = vmul.f32 %v1395, 1.442695
    %v1459 = vpow.pop %v1458
    %v1460 = vsel %vm1267, %v1397, 0.0
    %1461 = vadd.xlane.f32.xlu0 %v1460
    %v1462 = vpop.xlane.xlu0 %1461
    %v1463 = vsel %vm1267, %v1399, 0.0
    %1464 = vadd.xlane.f32.xlu0 %v1463
    %v1465 = vpop.xlane.xlu0 %1464
    %v1466 = vsel %vm1267, %v1401, 0.0
    %1467 = vadd.xlane.f32.xlu0 %v1466
    %v1468 = vpop.xlane.xlu0 %1467
    %v1469 = vsel %vm1267, %v1403, 0.0
    %1470 = vadd.xlane.f32.xlu0 %v1469
    %v1471 = vpop.xlane.xlu0 %1470
    %v1472 = vsel %vm1267, %v1405, 0.0
    %1473 = vadd.xlane.f32.xlu0 %v1472
    %v1474 = vpop.xlane.xlu0 %1473
    %v1475 = vsel %vm1267, %v1407, 0.0
    %1476 = vadd.xlane.f32.xlu0 %v1475
    %v1477 = vpop.xlane.xlu0 %1476
    %v1478 = vsel %vm1267, %v1409, 0.0
    %1479 = vadd.xlane.f32.xlu0 %v1478
    %v1480 = vpop.xlane.xlu0 %1479
    %v1481 = vsel %vm1267, %v1411, 0.0
    %1482 = vadd.xlane.f32.xlu0 %v1481
    %v1483 = vpop.xlane.xlu0 %1482
    %v1484 = vsel %vm1267, %v1413, 0.0
    %1485 = vadd.xlane.f32.xlu0 %v1484
    %v1486 = vpop.xlane.xlu0 %1485
    %v1487 = vsel %vm1267, %v1415, 0.0
    %1488 = vadd.xlane.f32.xlu0 %v1487
    %v1489 = vpop.xlane.xlu0 %1488
    %v1490 = vsel %vm1267, %v1417, 0.0
    %1491 = vadd.xlane.f32.xlu0 %v1490
    %v1492 = vpop.xlane.xlu0 %1491
    %v1493 = vsel %vm1267, %v1419, 0.0
    %1494 = vadd.xlane.f32.xlu0 %v1493
    %v1495 = vpop.xlane.xlu0 %1494
    %v1496 = vsel %vm1267, %v1421, 0.0
    %1497 = vadd.xlane.f32.xlu0 %v1496
    %v1498 = vpop.xlane.xlu0 %1497
    %v1499 = vsel %vm1267, %v1423, 0.0
    %1500 = vadd.xlane.f32.xlu0 %v1499
    %v1501 = vpop.xlane.xlu0 %1500
    %v1502 = vsel %vm1267, %v1425, 0.0
    %1503 = vadd.xlane.f32.xlu0 %v1502
    %v1504 = vpop.xlane.xlu0 %1503
    %v1505 = vsel %vm1267, %v1427, 0.0
    %1506 = vadd.xlane.f32.xlu0 %v1505
    %v1507 = vpop.xlane.xlu0 %1506
    %v1508 = vsel %vm1267, %v1429, 0.0
    %1509 = vadd.xlane.f32.xlu0 %v1508
    %v1510 = vpop.xlane.xlu0 %1509
    %v1511 = vsel %vm1267, %v1431, 0.0
    %1512 = vadd.xlane.f32.xlu0 %v1511
    %v1513 = vpop.xlane.xlu0 %1512
    %v1514 = vsel %vm1267, %v1433, 0.0
    %1515 = vadd.xlane.f32.xlu0 %v1514
    %v1516 = vpop.xlane.xlu0 %1515
    %v1517 = vsel %vm1267, %v1435, 0.0
    %1518 = vadd.xlane.f32.xlu0 %v1517
    %v1519 = vpop.xlane.xlu0 %1518
    %v1520 = vsel %vm1267, %v1437, 0.0
    %1521 = vadd.xlane.f32.xlu0 %v1520
    %v1522 = vpop.xlane.xlu0 %1521
    %v1523 = vsel %vm1267, %v1439, 0.0
    %1524 = vadd.xlane.f32.xlu0 %v1523
    %v1525 = vpop.xlane.xlu0 %1524
    %v1526 = vsel %vm1267, %v1441, 0.0
    %1527 = vadd.xlane.f32.xlu0 %v1526
    %v1528 = vpop.xlane.xlu0 %1527
    %v1529 = vsel %vm1267, %v1443, 0.0
    %1530 = vadd.xlane.f32.xlu0 %v1529
    %v1531 = vpop.xlane.xlu0 %1530
    %v1532 = vsel %vm1267, %v1445, 0.0
    %1533 = vadd.xlane.f32.xlu0 %v1532
    %v1534 = vpop.xlane.xlu0 %1533
    %v1535 = vsel %vm1267, %v1447, 0.0
    %1536 = vadd.xlane.f32.xlu0 %v1535
    %v1537 = vpop.xlane.xlu0 %1536
    %v1538 = vsel %vm1267, %v1449, 0.0
    %1539 = vadd.xlane.f32.xlu0 %v1538
    %v1540 = vpop.xlane.xlu0 %1539
    %v1541 = vsel %vm1267, %v1451, 0.0
    %1542 = vadd.xlane.f32.xlu0 %v1541
    %v1543 = vpop.xlane.xlu0 %1542
    %v1544 = vsel %vm1267, %v1453, 0.0
    %1545 = vadd.xlane.f32.xlu0 %v1544
    %v1546 = vpop.xlane.xlu0 %1545
    %v1547 = vsel %vm1267, %v1455, 0.0
    %1548 = vadd.xlane.f32.xlu0 %v1547
    %v1549 = vpop.xlane.xlu0 %1548
    %v1550 = vsel %vm1267, %v1457, 0.0
    %1551 = vadd.xlane.f32.xlu0 %v1550
    %v1552 = vpop.xlane.xlu0 %1551
    %v1553 = vsel %vm1267, %v1459, 0.0
    %1554 = vadd.xlane.f32.xlu0 %v1553
    %v1555 = vpop.xlane.xlu0 %1554
    %v1556 = vrcp.pop %v1462
    %v1557 = vmul.f32 %v1462, %v1556
    %v1558 = vsub.f32 1.0, %v1557
    %v1559 = vmul.f32 %v1556, %v1558
    %v1560 = vadd.f32 %v1556, %v1559
    %vm1561 = vweird.f32 %v1462
    %vm1562 = vweird.f32 %v1556
    %vm1563 = vmor %vm1561, %vm1562
    %v1564 = vsel %vm1563, %v1556, %v1560
    %v1565 = vand.u32 2147483647, %v1462
    %vm1566 = vcmp.eq.f32.partialorder %v1565, 8.507059e+37
    %v1567 = vand.u32 %v1462, 2147483648
    %v1568 = vor.u32 1.1754944e-38, %v1567
    %v1569 = vsel %vm1566, %v1568, %v1564
    %v1570 = vmul.f32 %v1397, %v1569
    %v1571 = vrcp.pop %v1465
    %v1572 = vmul.f32 %v1465, %v1571
    %v1573 = vsub.f32 1.0, %v1572
    %v1574 = vmul.f32 %v1571, %v1573
    %v1575 = vadd.f32 %v1571, %v1574
    %vm1576 = vweird.f32 %v1465
    %vm1577 = vweird.f32 %v1571
    %vm1578 = vmor %vm1576, %vm1577
    %v1579 = vsel %vm1578, %v1571, %v1575
    %v1580 = vand.u32 2147483647, %v1465
    %vm1581 = vcmp.eq.f32.partialorder %v1580, 8.507059e+37
    %v1582 = vand.u32 %v1465, 2147483648
    %v1583 = vor.u32 1.1754944e-38, %v1582
    %v1584 = vsel %vm1581, %v1583, %v1579
    %v1585 = vmul.f32 %v1399, %v1584
    %v1586 = vrcp.pop %v1468
    %v1587 = vmul.f32 %v1468, %v1586
    %v1588 = vsub.f32 1.0, %v1587
    %v1589 = vmul.f32 %v1586, %v1588
    %v1590 = vadd.f32 %v1586, %v1589
    %vm1591 = vweird.f32 %v1468
    %vm1592 = vweird.f32 %v1586
    %vm1593 = vmor %vm1591, %vm1592
    %v1594 = vsel %vm1593, %v1586, %v1590
    %v1595 = vand.u32 2147483647, %v1468
    %vm1596 = vcmp.eq.f32.partialorder %v1595, 8.507059e+37
    %v1597 = vand.u32 %v1468, 2147483648
    %v1598 = vor.u32 1.1754944e-38, %v1597
    %v1599 = vsel %vm1596, %v1598, %v1594
    %v1600 = vmul.f32 %v1401, %v1599
    %v1601 = vrcp.pop %v1471
    %v1602 = vmul.f32 %v1471, %v1601
    %v1603 = vsub.f32 1.0, %v1602
    %v1604 = vmul.f32 %v1601, %v1603
    %v1605 = vadd.f32 %v1601, %v1604
    %vm1606 = vweird.f32 %v1471
    %vm1607 = vweird.f32 %v1601
    %vm1608 = vmor %vm1606, %vm1607
    %v1609 = vsel %vm1608, %v1601, %v1605
    %v1610 = vand.u32 2147483647, %v1471
    %vm1611 = vcmp.eq.f32.partialorder %v1610, 8.507059e+37
    %v1612 = vand.u32 %v1471, 2147483648
    %v1613 = vor.u32 1.1754944e-38, %v1612
    %v1614 = vsel %vm1611, %v1613, %v1609
    %v1615 = vmul.f32 %v1403, %v1614
    %v1616 = vrcp.pop %v1474
    %v1617 = vmul.f32 %v1474, %v1616
    %v1618 = vsub.f32 1.0, %v1617
    %v1619 = vmul.f32 %v1616, %v1618
    %v1620 = vadd.f32 %v1616, %v1619
    %vm1621 = vweird.f32 %v1474
    %vm1622 = vweird.f32 %v1616
    %vm1623 = vmor %vm1621, %vm1622
    %v1624 = vsel %vm1623, %v1616, %v1620
    %v1625 = vand.u32 2147483647, %v1474
    %vm1626 = vcmp.eq.f32.partialorder %v1625, 8.507059e+37
    %v1627 = vand.u32 %v1474, 2147483648
    %v1628 = vor.u32 1.1754944e-38, %v1627
    %v1629 = vsel %vm1626, %v1628, %v1624
    %v1630 = vmul.f32 %v1405, %v1629
    %v1631 = vrcp.pop %v1477
    %v1632 = vmul.f32 %v1477, %v1631
    %v1633 = vsub.f32 1.0, %v1632
    %v1634 = vmul.f32 %v1631, %v1633
    %v1635 = vadd.f32 %v1631, %v1634
    %vm1636 = vweird.f32 %v1477
    %vm1637 = vweird.f32 %v1631
    %vm1638 = vmor %vm1636, %vm1637
    %v1639 = vsel %vm1638, %v1631, %v1635
    %v1640 = vand.u32 2147483647, %v1477
    %vm1641 = vcmp.eq.f32.partialorder %v1640, 8.507059e+37
    %v1642 = vand.u32 %v1477, 2147483648
    %v1643 = vor.u32 1.1754944e-38, %v1642
    %v1644 = vsel %vm1641, %v1643, %v1639
    %v1645 = vmul.f32 %v1407, %v1644
    %v1646 = vrcp.pop %v1480
    %v1647 = vmul.f32 %v1480, %v1646
    %v1648 = vsub.f32 1.0, %v1647
    %v1649 = vmul.f32 %v1646, %v1648
    %v1650 = vadd.f32 %v1646, %v1649
    %vm1651 = vweird.f32 %v1480
    %vm1652 = vweird.f32 %v1646
    %vm1653 = vmor %vm1651, %vm1652
    %v1654 = vsel %vm1653, %v1646, %v1650
    %v1655 = vand.u32 2147483647, %v1480
    %vm1656 = vcmp.eq.f32.partialorder %v1655, 8.507059e+37
    %v1657 = vand.u32 %v1480, 2147483648
    %v1658 = vor.u32 1.1754944e-38, %v1657
    %v1659 = vsel %vm1656, %v1658, %v1654
    %v1660 = vmul.f32 %v1409, %v1659
    %v1661 = vrcp.pop %v1483
    %v1662 = vmul.f32 %v1483, %v1661
    %v1663 = vsub.f32 1.0, %v1662
    %v1664 = vmul.f32 %v1661, %v1663
    %v1665 = vadd.f32 %v1661, %v1664
    %vm1666 = vweird.f32 %v1483
    %vm1667 = vweird.f32 %v1661
    %vm1668 = vmor %vm1666, %vm1667
    %v1669 = vsel %vm1668, %v1661, %v1665
    %v1670 = vand.u32 2147483647, %v1483
    %vm1671 = vcmp.eq.f32.partialorder %v1670, 8.507059e+37
    %v1672 = vand.u32 %v1483, 2147483648
    %v1673 = vor.u32 1.1754944e-38, %v1672
    %v1674 = vsel %vm1671, %v1673, %v1669
    %v1675 = vmul.f32 %v1411, %v1674
    %v1676 = vrcp.pop %v1486
    %v1677 = vmul.f32 %v1486, %v1676
    %v1678 = vsub.f32 1.0, %v1677
    %v1679 = vmul.f32 %v1676, %v1678
    %v1680 = vadd.f32 %v1676, %v1679
    %vm1681 = vweird.f32 %v1486
    %vm1682 = vweird.f32 %v1676
    %vm1683 = vmor %vm1681, %vm1682
    %v1684 = vsel %vm1683, %v1676, %v1680
    %v1685 = vand.u32 2147483647, %v1486
    %vm1686 = vcmp.eq.f32.partialorder %v1685, 8.507059e+37
    %v1687 = vand.u32 %v1486, 2147483648
    %v1688 = vor.u32 1.1754944e-38, %v1687
    %v1689 = vsel %vm1686, %v1688, %v1684
    %v1690 = vmul.f32 %v1413, %v1689
    %v1691 = vrcp.pop %v1489
    %v1692 = vmul.f32 %v1489, %v1691
    %v1693 = vsub.f32 1.0, %v1692
    %v1694 = vmul.f32 %v1691, %v1693
    %v1695 = vadd.f32 %v1691, %v1694
    %vm1696 = vweird.f32 %v1489
    %vm1697 = vweird.f32 %v1691
    %vm1698 = vmor %vm1696, %vm1697
    %v1699 = vsel %vm1698, %v1691, %v1695
    %v1700 = vand.u32 2147483647, %v1489
    %vm1701 = vcmp.eq.f32.partialorder %v1700, 8.507059e+37
    %v1702 = vand.u32 %v1489, 2147483648
    %v1703 = vor.u32 1.1754944e-38, %v1702
    %v1704 = vsel %vm1701, %v1703, %v1699
    %v1705 = vmul.f32 %v1415, %v1704
    %v1706 = vrcp.pop %v1492
    %v1707 = vmul.f32 %v1492, %v1706
    %v1708 = vsub.f32 1.0, %v1707
    %v1709 = vmul.f32 %v1706, %v1708
    %v1710 = vadd.f32 %v1706, %v1709
    %vm1711 = vweird.f32 %v1492
    %vm1712 = vweird.f32 %v1706
    %vm1713 = vmor %vm1711, %vm1712
    %v1714 = vsel %vm1713, %v1706, %v1710
    %v1715 = vand.u32 2147483647, %v1492
    %vm1716 = vcmp.eq.f32.partialorder %v1715, 8.507059e+37
    %v1717 = vand.u32 %v1492, 2147483648
    %v1718 = vor.u32 1.1754944e-38, %v1717
    %v1719 = vsel %vm1716, %v1718, %v1714
    %v1720 = vmul.f32 %v1417, %v1719
    %v1721 = vrcp.pop %v1495
    %v1722 = vmul.f32 %v1495, %v1721
    %v1723 = vsub.f32 1.0, %v1722
    %v1724 = vmul.f32 %v1721, %v1723
    %v1725 = vadd.f32 %v1721, %v1724
    %vm1726 = vweird.f32 %v1495
    %vm1727 = vweird.f32 %v1721
    %vm1728 = vmor %vm1726, %vm1727
    %v1729 = vsel %vm1728, %v1721, %v1725
    %v1730 = vand.u32 2147483647, %v1495
    %vm1731 = vcmp.eq.f32.partialorder %v1730, 8.507059e+37
    %v1732 = vand.u32 %v1495, 2147483648
    %v1733 = vor.u32 1.1754944e-38, %v1732
    %v1734 = vsel %vm1731, %v1733, %v1729
    %v1735 = vmul.f32 %v1419, %v1734
    %v1736 = vrcp.pop %v1498
    %v1737 = vmul.f32 %v1498, %v1736
    %v1738 = vsub.f32 1.0, %v1737
    %v1739 = vmul.f32 %v1736, %v1738
    %v1740 = vadd.f32 %v1736, %v1739
    %vm1741 = vweird.f32 %v1498
    %vm1742 = vweird.f32 %v1736
    %vm1743 = vmor %vm1741, %vm1742
    %v1744 = vsel %vm1743, %v1736, %v1740
    %v1745 = vand.u32 2147483647, %v1498
    %vm1746 = vcmp.eq.f32.partialorder %v1745, 8.507059e+37
    %v1747 = vand.u32 %v1498, 2147483648
    %v1748 = vor.u32 1.1754944e-38, %v1747
    %v1749 = vsel %vm1746, %v1748, %v1744
    %v1750 = vmul.f32 %v1421, %v1749
    %v1751 = vrcp.pop %v1501
    %v1752 = vmul.f32 %v1501, %v1751
    %v1753 = vsub.f32 1.0, %v1752
    %v1754 = vmul.f32 %v1751, %v1753
    %v1755 = vadd.f32 %v1751, %v1754
    %vm1756 = vweird.f32 %v1501
    %vm1757 = vweird.f32 %v1751
    %vm1758 = vmor %vm1756, %vm1757
    %v1759 = vsel %vm1758, %v1751, %v1755
    %v1760 = vand.u32 2147483647, %v1501
    %vm1761 = vcmp.eq.f32.partialorder %v1760, 8.507059e+37
    %v1762 = vand.u32 %v1501, 2147483648
    %v1763 = vor.u32 1.1754944e-38, %v1762
    %v1764 = vsel %vm1761, %v1763, %v1759
    %v1765 = vmul.f32 %v1423, %v1764
    %v1766 = vrcp.pop %v1504
    %v1767 = vmul.f32 %v1504, %v1766
    %v1768 = vsub.f32 1.0, %v1767
    %v1769 = vmul.f32 %v1766, %v1768
    %v1770 = vadd.f32 %v1766, %v1769
    %vm1771 = vweird.f32 %v1504
    %vm1772 = vweird.f32 %v1766
    %vm1773 = vmor %vm1771, %vm1772
    %v1774 = vsel %vm1773, %v1766, %v1770
    %v1775 = vand.u32 2147483647, %v1504
    %vm1776 = vcmp.eq.f32.partialorder %v1775, 8.507059e+37
    %v1777 = vand.u32 %v1504, 2147483648
    %v1778 = vor.u32 1.1754944e-38, %v1777
    %v1779 = vsel %vm1776, %v1778, %v1774
    %v1780 = vmul.f32 %v1425, %v1779
    %v1781 = vrcp.pop %v1507
    %v1782 = vmul.f32 %v1507, %v1781
    %v1783 = vsub.f32 1.0, %v1782
    %v1784 = vmul.f32 %v1781, %v1783
    %v1785 = vadd.f32 %v1781, %v1784
    %vm1786 = vweird.f32 %v1507
    %vm1787 = vweird.f32 %v1781
    %vm1788 = vmor %vm1786, %vm1787
    %v1789 = vsel %vm1788, %v1781, %v1785
    %v1790 = vand.u32 2147483647, %v1507
    %vm1791 = vcmp.eq.f32.partialorder %v1790, 8.507059e+37
    %v1792 = vand.u32 %v1507, 2147483648
    %v1793 = vor.u32 1.1754944e-38, %v1792
    %v1794 = vsel %vm1791, %v1793, %v1789
    %v1795 = vmul.f32 %v1427, %v1794
    %v1796 = vrcp.pop %v1510
    %v1797 = vmul.f32 %v1510, %v1796
    %v1798 = vsub.f32 1.0, %v1797
    %v1799 = vmul.f32 %v1796, %v1798
    %v1800 = vadd.f32 %v1796, %v1799
    %vm1801 = vweird.f32 %v1510
    %vm1802 = vweird.f32 %v1796
    %vm1803 = vmor %vm1801, %vm1802
    %v1804 = vsel %vm1803, %v1796, %v1800
    %v1805 = vand.u32 2147483647, %v1510
    %vm1806 = vcmp.eq.f32.partialorder %v1805, 8.507059e+37
    %v1807 = vand.u32 %v1510, 2147483648
    %v1808 = vor.u32 1.1754944e-38, %v1807
    %v1809 = vsel %vm1806, %v1808, %v1804
    %v1810 = vmul.f32 %v1429, %v1809
    %v1811 = vrcp.pop %v1513
    %v1812 = vmul.f32 %v1513, %v1811
    %v1813 = vsub.f32 1.0, %v1812
    %v1814 = vmul.f32 %v1811, %v1813
    %v1815 = vadd.f32 %v1811, %v1814
    %vm1816 = vweird.f32 %v1513
    %vm1817 = vweird.f32 %v1811
    %vm1818 = vmor %vm1816, %vm1817
    %v1819 = vsel %vm1818, %v1811, %v1815
    %v1820 = vand.u32 2147483647, %v1513
    %vm1821 = vcmp.eq.f32.partialorder %v1820, 8.507059e+37
    %v1822 = vand.u32 %v1513, 2147483648
    %v1823 = vor.u32 1.1754944e-38, %v1822
    %v1824 = vsel %vm1821, %v1823, %v1819
    %v1825 = vmul.f32 %v1431, %v1824
    %v1826 = vrcp.pop %v1516
    %v1827 = vmul.f32 %v1516, %v1826
    %v1828 = vsub.f32 1.0, %v1827
    %v1829 = vmul.f32 %v1826, %v1828
    %v1830 = vadd.f32 %v1826, %v1829
    %vm1831 = vweird.f32 %v1516
    %vm1832 = vweird.f32 %v1826
    %vm1833 = vmor %vm1831, %vm1832
    %v1834 = vsel %vm1833, %v1826, %v1830
    %v1835 = vand.u32 2147483647, %v1516
    %vm1836 = vcmp.eq.f32.partialorder %v1835, 8.507059e+37
    %v1837 = vand.u32 %v1516, 2147483648
    %v1838 = vor.u32 1.1754944e-38, %v1837
    %v1839 = vsel %vm1836, %v1838, %v1834
    %v1840 = vmul.f32 %v1433, %v1839
    %v1841 = vrcp.pop %v1519
    %v1842 = vmul.f32 %v1519, %v1841
    %v1843 = vsub.f32 1.0, %v1842
    %v1844 = vmul.f32 %v1841, %v1843
    %v1845 = vadd.f32 %v1841, %v1844
    %vm1846 = vweird.f32 %v1519
    %vm1847 = vweird.f32 %v1841
    %vm1848 = vmor %vm1846, %vm1847
    %v1849 = vsel %vm1848, %v1841, %v1845
    %v1850 = vand.u32 2147483647, %v1519
    %vm1851 = vcmp.eq.f32.partialorder %v1850, 8.507059e+37
    %v1852 = vand.u32 %v1519, 2147483648
    %v1853 = vor.u32 1.1754944e-38, %v1852
    %v1854 = vsel %vm1851, %v1853, %v1849
    %v1855 = vmul.f32 %v1435, %v1854
    %v1856 = vrcp.pop %v1522
    %v1857 = vmul.f32 %v1522, %v1856
    %v1858 = vsub.f32 1.0, %v1857
    %v1859 = vmul.f32 %v1856, %v1858
    %v1860 = vadd.f32 %v1856, %v1859
    %vm1861 = vweird.f32 %v1522
    %vm1862 = vweird.f32 %v1856
    %vm1863 = vmor %vm1861, %vm1862
    %v1864 = vsel %vm1863, %v1856, %v1860
    %v1865 = vand.u32 2147483647, %v1522
    %vm1866 = vcmp.eq.f32.partialorder %v1865, 8.507059e+37
    %v1867 = vand.u32 %v1522, 2147483648
    %v1868 = vor.u32 1.1754944e-38, %v1867
    %v1869 = vsel %vm1866, %v1868, %v1864
    %v1870 = vmul.f32 %v1437, %v1869
    %v1871 = vrcp.pop %v1525
    %v1872 = vmul.f32 %v1525, %v1871
    %v1873 = vsub.f32 1.0, %v1872
    %v1874 = vmul.f32 %v1871, %v1873
    %v1875 = vadd.f32 %v1871, %v1874
    %vm1876 = vweird.f32 %v1525
    %vm1877 = vweird.f32 %v1871
    %vm1878 = vmor %vm1876, %vm1877
    %v1879 = vsel %vm1878, %v1871, %v1875
    %v1880 = vand.u32 2147483647, %v1525
    %vm1881 = vcmp.eq.f32.partialorder %v1880, 8.507059e+37
    %v1882 = vand.u32 %v1525, 2147483648
    %v1883 = vor.u32 1.1754944e-38, %v1882
    %v1884 = vsel %vm1881, %v1883, %v1879
    %v1885 = vmul.f32 %v1439, %v1884
    %v1886 = vrcp.pop %v1528
    %v1887 = vmul.f32 %v1528, %v1886
    %v1888 = vsub.f32 1.0, %v1887
    %v1889 = vmul.f32 %v1886, %v1888
    %v1890 = vadd.f32 %v1886, %v1889
    %vm1891 = vweird.f32 %v1528
    %vm1892 = vweird.f32 %v1886
    %vm1893 = vmor %vm1891, %vm1892
    %v1894 = vsel %vm1893, %v1886, %v1890
    %v1895 = vand.u32 2147483647, %v1528
    %vm1896 = vcmp.eq.f32.partialorder %v1895, 8.507059e+37
    %v1897 = vand.u32 %v1528, 2147483648
    %v1898 = vor.u32 1.1754944e-38, %v1897
    %v1899 = vsel %vm1896, %v1898, %v1894
    %v1900 = vmul.f32 %v1441, %v1899
    %v1901 = vrcp.pop %v1531
    %v1902 = vmul.f32 %v1531, %v1901
    %v1903 = vsub.f32 1.0, %v1902
    %v1904 = vmul.f32 %v1901, %v1903
    %v1905 = vadd.f32 %v1901, %v1904
    %vm1906 = vweird.f32 %v1531
    %vm1907 = vweird.f32 %v1901
    %vm1908 = vmor %vm1906, %vm1907
    %v1909 = vsel %vm1908, %v1901, %v1905
    %v1910 = vand.u32 2147483647, %v1531
    %vm1911 = vcmp.eq.f32.partialorder %v1910, 8.507059e+37
    %v1912 = vand.u32 %v1531, 2147483648
    %v1913 = vor.u32 1.1754944e-38, %v1912
    %v1914 = vsel %vm1911, %v1913, %v1909
    %v1915 = vmul.f32 %v1443, %v1914
    %v1916 = vrcp.pop %v1534
    %v1917 = vmul.f32 %v1534, %v1916
    %v1918 = vsub.f32 1.0, %v1917
    %v1919 = vmul.f32 %v1916, %v1918
    %v1920 = vadd.f32 %v1916, %v1919
    %vm1921 = vweird.f32 %v1534
    %vm1922 = vweird.f32 %v1916
    %vm1923 = vmor %vm1921, %vm1922
    %v1924 = vsel %vm1923, %v1916, %v1920
    %v1925 = vand.u32 2147483647, %v1534
    %vm1926 = vcmp.eq.f32.partialorder %v1925, 8.507059e+37
    %v1927 = vand.u32 %v1534, 2147483648
    %v1928 = vor.u32 1.1754944e-38, %v1927
    %v1929 = vsel %vm1926, %v1928, %v1924
    %v1930 = vmul.f32 %v1445, %v1929
    %v1931 = vrcp.pop %v1537
    %v1932 = vmul.f32 %v1537, %v1931
    %v1933 = vsub.f32 1.0, %v1932
    %v1934 = vmul.f32 %v1931, %v1933
    %v1935 = vadd.f32 %v1931, %v1934
    %vm1936 = vweird.f32 %v1537
    %vm1937 = vweird.f32 %v1931
    %vm1938 = vmor %vm1936, %vm1937
    %v1939 = vsel %vm1938, %v1931, %v1935
    %v1940 = vand.u32 2147483647, %v1537
    %vm1941 = vcmp.eq.f32.partialorder %v1940, 8.507059e+37
    %v1942 = vand.u32 %v1537, 2147483648
    %v1943 = vor.u32 1.1754944e-38, %v1942
    %v1944 = vsel %vm1941, %v1943, %v1939
    %v1945 = vmul.f32 %v1447, %v1944
    %v1946 = vrcp.pop %v1540
    %v1947 = vmul.f32 %v1540, %v1946
    %v1948 = vsub.f32 1.0, %v1947
    %v1949 = vmul.f32 %v1946, %v1948
    %v1950 = vadd.f32 %v1946, %v1949
    %vm1951 = vweird.f32 %v1540
    %vm1952 = vweird.f32 %v1946
    %vm1953 = vmor %vm1951, %vm1952
    %v1954 = vsel %vm1953, %v1946, %v1950
    %v1955 = vand.u32 2147483647, %v1540
    %vm1956 = vcmp.eq.f32.partialorder %v1955, 8.507059e+37
    %v1957 = vand.u32 %v1540, 2147483648
    %v1958 = vor.u32 1.1754944e-38, %v1957
    %v1959 = vsel %vm1956, %v1958, %v1954
    %v1960 = vmul.f32 %v1449, %v1959
    %v1961 = vrcp.pop %v1543
    %v1962 = vmul.f32 %v1543, %v1961
    %v1963 = vsub.f32 1.0, %v1962
    %v1964 = vmul.f32 %v1961, %v1963
    %v1965 = vadd.f32 %v1961, %v1964
    %vm1966 = vweird.f32 %v1543
    %vm1967 = vweird.f32 %v1961
    %vm1968 = vmor %vm1966, %vm1967
    %v1969 = vsel %vm1968, %v1961, %v1965
    %v1970 = vand.u32 2147483647, %v1543
    %vm1971 = vcmp.eq.f32.partialorder %v1970, 8.507059e+37
    %v1972 = vand.u32 %v1543, 2147483648
    %v1973 = vor.u32 1.1754944e-38, %v1972
    %v1974 = vsel %vm1971, %v1973, %v1969
    %v1975 = vmul.f32 %v1451, %v1974
    %v1976 = vrcp.pop %v1546
    %v1977 = vmul.f32 %v1546, %v1976
    %v1978 = vsub.f32 1.0, %v1977
    %v1979 = vmul.f32 %v1976, %v1978
    %v1980 = vadd.f32 %v1976, %v1979
    %vm1981 = vweird.f32 %v1546
    %vm1982 = vweird.f32 %v1976
    %vm1983 = vmor %vm1981, %vm1982
    %v1984 = vsel %vm1983, %v1976, %v1980
    %v1985 = vand.u32 2147483647, %v1546
    %vm1986 = vcmp.eq.f32.partialorder %v1985, 8.507059e+37
    %v1987 = vand.u32 %v1546, 2147483648
    %v1988 = vor.u32 1.1754944e-38, %v1987
    %v1989 = vsel %vm1986, %v1988, %v1984
    %v1990 = vmul.f32 %v1453, %v1989
    %v1991 = vrcp.pop %v1549
    %v1992 = vmul.f32 %v1549, %v1991
    %v1993 = vsub.f32 1.0, %v1992
    %v1994 = vmul.f32 %v1991, %v1993
    %v1995 = vadd.f32 %v1991, %v1994
    %vm1996 = vweird.f32 %v1549
    %vm1997 = vweird.f32 %v1991
    %vm1998 = vmor %vm1996, %vm1997
    %v1999 = vsel %vm1998, %v1991, %v1995
    %v2000 = vand.u32 2147483647, %v1549
    %vm2001 = vcmp.eq.f32.partialorder %v2000, 8.507059e+37
    %v2002 = vand.u32 %v1549, 2147483648
    %v2003 = vor.u32 1.1754944e-38, %v2002
    %v2004 = vsel %vm2001, %v2003, %v1999
    %v2005 = vmul.f32 %v1455, %v2004
    %v2006 = vrcp.pop %v1552
    %v2007 = vmul.f32 %v1552, %v2006
    %v2008 = vsub.f32 1.0, %v2007
    %v2009 = vmul.f32 %v2006, %v2008
    %v2010 = vadd.f32 %v2006, %v2009
    %vm2011 = vweird.f32 %v1552
    %vm2012 = vweird.f32 %v2006
    %vm2013 = vmor %vm2011, %vm2012
    %v2014 = vsel %vm2013, %v2006, %v2010
    %v2015 = vand.u32 2147483647, %v1552
    %vm2016 = vcmp.eq.f32.partialorder %v2015, 8.507059e+37
    %v2017 = vand.u32 %v1552, 2147483648
    %v2018 = vor.u32 1.1754944e-38, %v2017
    %v2019 = vsel %vm2016, %v2018, %v2014
    %v2020 = vmul.f32 %v1457, %v2019
    %v2021 = vrcp.pop %v1555
    %v2022 = vmul.f32 %v1555, %v2021
    %v2023 = vsub.f32 1.0, %v2022
    %v2024 = vmul.f32 %v2021, %v2023
    %v2025 = vadd.f32 %v2021, %v2024
    %vm2026 = vweird.f32 %v1555
    %vm2027 = vweird.f32 %v2021
    %vm2028 = vmor %vm2026, %vm2027
    %v2029 = vsel %vm2028, %v2021, %v2025
    %v2030 = vand.u32 2147483647, %v1555
    %vm2031 = vcmp.eq.f32.partialorder %v2030, 8.507059e+37
    %v2032 = vand.u32 %v1555, 2147483648
    %v2033 = vor.u32 1.1754944e-38, %v2032
    %v2034 = vsel %vm2031, %v2033, %v2029
    %v2035 = vmul.f32 %v1459, %v2034
    %v2037 = vsel %vm1267, %v1570, 0
    %v2040 = vsel %vm1267, %v1585, 0
    %v2043 = vsel %vm1267, %v261, 0
    %2045 = vmatpush.xpose.msra.mxu0 0.0
    %2046 = vmatpush.xpose.msra.mxu0 0.0
    %2047 = vmatpush.xpose.msra.mxu0 0.0
    %2048 = vmatpush.xpose.msra.mxu0 0.0
    %2049 = vmatpush.xpose.msra.mxu0 0.0
    %2050 = vmatpush.xpose.msra.mxu0 0.0
    %2051 = vmatpush.xpose.msra.mxu0 0.0
    %2052 = vmatpush.xpose.msra.mxu0 0.0
    %2053 = vmatpush.xpose.msra.mxu0 0.0
    %2054 = vmatpush.xpose.msra.mxu0 0.0
    %2055 = vmatpush.xpose.msra.mxu0 0.0
    %2056 = vmatpush.xpose.msra.mxu0 0.0
    %2057 = vmatpush.xpose.msra.mxu0 0.0
    %2058 = vmatpush.xpose.msra.mxu0 0.0
    %2059 = vmatpush.xpose.msra.mxu0 0.0
    %2060 = vmatpush.xpose.msra.mxu0 %v2043
    %2061 = vmatmul.f32.gmra.mxu0 %v2037
    %v2062 = vpop.f32.mrf.mxu0
    %v2063 = vadd.f32 0.0, %v2062
    %2064 = vmatmul.f32.gmra.mxu0 %v2040
    %v2065 = vpop.f32.mrf.mxu0
    %v2066 = vadd.f32 0.0, %v2065
    %2067 = vdwg.mxu0
    %v2069 = vsel %vm1267, %v1600, 0
    %v2072 = vsel %vm1267, %v1615, 0
    %v2075 = vsel %vm1267, %v262, 0
    %2077 = vmatpush.xpose.msra.mxu0 0.0
    %2078 = vmatpush.xpose.msra.mxu0 0.0
    %2079 = vmatpush.xpose.msra.mxu0 0.0
    %2080 = vmatpush.xpose.msra.mxu0 0.0
    %2081 = vmatpush.xpose.msra.mxu0 0.0
    %2082 = vmatpush.xpose.msra.mxu0 0.0
    %2083 = vmatpush.xpose.msra.mxu0 0.0
    %2084 = vmatpush.xpose.msra.mxu0 0.0
    %2085 = vmatpush.xpose.msra.mxu0 0.0
    %2086 = vmatpush.xpose.msra.mxu0 0.0
    %2087 = vmatpush.xpose.msra.mxu0 0.0
    %2088 = vmatpush.xpose.msra.mxu0 0.0
    %2089 = vmatpush.xpose.msra.mxu0 0.0
    %2090 = vmatpush.xpose.msra.mxu0 0.0
    %2091 = vmatpush.xpose.msra.mxu0 0.0
    %2092 = vmatpush.xpose.msra.mxu0 %v2075
    %2093 = vmatmul.f32.gmra.mxu0 %v2069
    %v2094 = vpop.f32.mrf.mxu0
    %v2095 = vadd.f32 0.0, %v2094
    %2096 = vmatmul.f32.gmra.mxu0 %v2072
    %v2097 = vpop.f32.mrf.mxu0
    %v2098 = vadd.f32 0.0, %v2097
    %2099 = vdwg.mxu0
    %v2101 = vsel %vm1267, %v1630, 0
    %v2104 = vsel %vm1267, %v1645, 0
    %v2107 = vsel %vm1267, %v263, 0
    %2109 = vmatpush.xpose.msra.mxu0 0.0
    %2110 = vmatpush.xpose.msra.mxu0 0.0
    %2111 = vmatpush.xpose.msra.mxu0 0.0
    %2112 = vmatpush.xpose.msra.mxu0 0.0
    %2113 = vmatpush.xpose.msra.mxu0 0.0
    %2114 = vmatpush.xpose.msra.mxu0 0.0
    %2115 = vmatpush.xpose.msra.mxu0 0.0
    %2116 = vmatpush.xpose.msra.mxu0 0.0
    %2117 = vmatpush.xpose.msra.mxu0 0.0
    %2118 = vmatpush.xpose.msra.mxu0 0.0
    %2119 = vmatpush.xpose.msra.mxu0 0.0
    %2120 = vmatpush.xpose.msra.mxu0 0.0
    %2121 = vmatpush.xpose.msra.mxu0 0.0
    %2122 = vmatpush.xpose.msra.mxu0 0.0
    %2123 = vmatpush.xpose.msra.mxu0 0.0
    %2124 = vmatpush.xpose.msra.mxu0 %v2107
    %2125 = vmatmul.f32.gmra.mxu0 %v2101
    %v2126 = vpop.f32.mrf.mxu0
    %v2127 = vadd.f32 0.0, %v2126
    %2128 = vmatmul.f32.gmra.mxu0 %v2104
    %v2129 = vpop.f32.mrf.mxu0
    %v2130 = vadd.f32 0.0, %v2129
    %2131 = vdwg.mxu0
    %v2133 = vsel %vm1267, %v1660, 0
    %v2136 = vsel %vm1267, %v1675, 0
    %v2139 = vsel %vm1267, %v264, 0
    %2141 = vmatpush.xpose.msra.mxu0 0.0
    %2142 = vmatpush.xpose.msra.mxu0 0.0
    %2143 = vmatpush.xpose.msra.mxu0 0.0
    %2144 = vmatpush.xpose.msra.mxu0 0.0
    %2145 = vmatpush.xpose.msra.mxu0 0.0
    %2146 = vmatpush.xpose.msra.mxu0 0.0
    %2147 = vmatpush.xpose.msra.mxu0 0.0
    %2148 = vmatpush.xpose.msra.mxu0 0.0
    %2149 = vmatpush.xpose.msra.mxu0 0.0
    %2150 = vmatpush.xpose.msra.mxu0 0.0
    %2151 = vmatpush.xpose.msra.mxu0 0.0
    %2152 = vmatpush.xpose.msra.mxu0 0.0
    %2153 = vmatpush.xpose.msra.mxu0 0.0
    %2154 = vmatpush.xpose.msra.mxu0 0.0
    %2155 = vmatpush.xpose.msra.mxu0 0.0
    %2156 = vmatpush.xpose.msra.mxu0 %v2139
    %2157 = vmatmul.f32.gmra.mxu0 %v2133
    %v2158 = vpop.f32.mrf.mxu0
    %v2159 = vadd.f32 0.0, %v2158
    %2160 = vmatmul.f32.gmra.mxu0 %v2136
    %v2161 = vpop.f32.mrf.mxu0
    %v2162 = vadd.f32 0.0, %v2161
    %2163 = vdwg.mxu0
    %v2165 = vsel %vm1267, %v1690, 0
    %v2168 = vsel %vm1267, %v1705, 0
    %v2171 = vsel %vm1267, %v265, 0
    %2173 = vmatpush.xpose.msra.mxu0 0.0
    %2174 = vmatpush.xpose.msra.mxu0 0.0
    %2175 = vmatpush.xpose.msra.mxu0 0.0
    %2176 = vmatpush.xpose.msra.mxu0 0.0
    %2177 = vmatpush.xpose.msra.mxu0 0.0
    %2178 = vmatpush.xpose.msra.mxu0 0.0
    %2179 = vmatpush.xpose.msra.mxu0 0.0
    %2180 = vmatpush.xpose.msra.mxu0 0.0
    %2181 = vmatpush.xpose.msra.mxu0 0.0
    %2182 = vmatpush.xpose.msra.mxu0 0.0
    %2183 = vmatpush.xpose.msra.mxu0 0.0
    %2184 = vmatpush.xpose.msra.mxu0 0.0
    %2185 = vmatpush.xpose.msra.mxu0 0.0
    %2186 = vmatpush.xpose.msra.mxu0 0.0
    %2187 = vmatpush.xpose.msra.mxu0 0.0
    %2188 = vmatpush.xpose.msra.mxu0 %v2171
    %2189 = vmatmul.f32.gmra.mxu0 %v2165
    %v2190 = vpop.f32.mrf.mxu0
    %v2191 = vadd.f32 0.0, %v2190
    %2192 = vmatmul.f32.gmra.mxu0 %v2168
    %v2193 = vpop.f32.mrf.mxu0
    %v2194 = vadd.f32 0.0, %v2193
    %2195 = vdwg.mxu0
    %v2197 = vsel %vm1267, %v1720, 0
    %v2200 = vsel %vm1267, %v1735, 0
    %v2203 = vsel %vm1267, %v266, 0
    %2205 = vmatpush.xpose.msra.mxu0 0.0
    %2206 = vmatpush.xpose.msra.mxu0 0.0
    %2207 = vmatpush.xpose.msra.mxu0 0.0
    %2208 = vmatpush.xpose.msra.mxu0 0.0
    %2209 = vmatpush.xpose.msra.mxu0 0.0
    %2210 = vmatpush.xpose.msra.mxu0 0.0
    %2211 = vmatpush.xpose.msra.mxu0 0.0
    %2212 = vmatpush.xpose.msra.mxu0 0.0
    %2213 = vmatpush.xpose.msra.mxu0 0.0
    %2214 = vmatpush.xpose.msra.mxu0 0.0
    %2215 = vmatpush.xpose.msra.mxu0 0.0
    %2216 = vmatpush.xpose.msra.mxu0 0.0
    %2217 = vmatpush.xpose.msra.mxu0 0.0
    %2218 = vmatpush.xpose.msra.mxu0 0.0
    %2219 = vmatpush.xpose.msra.mxu0 0.0
    %2220 = vmatpush.xpose.msra.mxu0 %v2203
    %2221 = vmatmul.f32.gmra.mxu0 %v2197
    %v2222 = vpop.f32.mrf.mxu0
    %v2223 = vadd.f32 0.0, %v2222
    %2224 = vmatmul.f32.gmra.mxu0 %v2200
    %v2225 = vpop.f32.mrf.mxu0
    %v2226 = vadd.f32 0.0, %v2225
    %2227 = vdwg.mxu0
    %v2229 = vsel %vm1267, %v1750, 0
    %v2232 = vsel %vm1267, %v1765, 0
    %v2235 = vsel %vm1267, %v267, 0
    %2237 = vmatpush.xpose.msra.mxu0 0.0
    %2238 = vmatpush.xpose.msra.mxu0 0.0
    %2239 = vmatpush.xpose.msra.mxu0 0.0
    %2240 = vmatpush.xpose.msra.mxu0 0.0
    %2241 = vmatpush.xpose.msra.mxu0 0.0
    %2242 = vmatpush.xpose.msra.mxu0 0.0
    %2243 = vmatpush.xpose.msra.mxu0 0.0
    %2244 = vmatpush.xpose.msra.mxu0 0.0
    %2245 = vmatpush.xpose.msra.mxu0 0.0
    %2246 = vmatpush.xpose.msra.mxu0 0.0
    %2247 = vmatpush.xpose.msra.mxu0 0.0
    %2248 = vmatpush.xpose.msra.mxu0 0.0
    %2249 = vmatpush.xpose.msra.mxu0 0.0
    %2250 = vmatpush.xpose.msra.mxu0 0.0
    %2251 = vmatpush.xpose.msra.mxu0 0.0
    %2252 = vmatpush.xpose.msra.mxu0 %v2235
    %2253 = vmatmul.f32.gmra.mxu0 %v2229
    %v2254 = vpop.f32.mrf.mxu0
    %v2255 = vadd.f32 0.0, %v2254
    %2256 = vmatmul.f32.gmra.mxu0 %v2232
    %v2257 = vpop.f32.mrf.mxu0
    %v2258 = vadd.f32 0.0, %v2257
    %2259 = vdwg.mxu0
    %v2261 = vsel %vm1267, %v1780, 0
    %v2264 = vsel %vm1267, %v1795, 0
    %v2267 = vsel %vm1267, %v268, 0
    %2269 = vmatpush.xpose.msra.mxu0 0.0
    %2270 = vmatpush.xpose.msra.mxu0 0.0
    %2271 = vmatpush.xpose.msra.mxu0 0.0
    %2272 = vmatpush.xpose.msra.mxu0 0.0
    %2273 = vmatpush.xpose.msra.mxu0 0.0
    %2274 = vmatpush.xpose.msra.mxu0 0.0
    %2275 = vmatpush.xpose.msra.mxu0 0.0
    %2276 = vmatpush.xpose.msra.mxu0 0.0
    %2277 = vmatpush.xpose.msra.mxu0 0.0
    %2278 = vmatpush.xpose.msra.mxu0 0.0
    %2279 = vmatpush.xpose.msra.mxu0 0.0
    %2280 = vmatpush.xpose.msra.mxu0 0.0
    %2281 = vmatpush.xpose.msra.mxu0 0.0
    %2282 = vmatpush.xpose.msra.mxu0 0.0
    %2283 = vmatpush.xpose.msra.mxu0 0.0
    %2284 = vmatpush.xpose.msra.mxu0 %v2267
    %2285 = vmatmul.f32.gmra.mxu0 %v2261
    %v2286 = vpop.f32.mrf.mxu0
    %v2287 = vadd.f32 0.0, %v2286
    %2288 = vmatmul.f32.gmra.mxu0 %v2264
    %v2289 = vpop.f32.mrf.mxu0
    %v2290 = vadd.f32 0.0, %v2289
    %2291 = vdwg.mxu0
    %v2293 = vsel %vm1267, %v1810, 0
    %v2296 = vsel %vm1267, %v1825, 0
    %v2299 = vsel %vm1267, %v269, 0
    %2301 = vmatpush.xpose.msra.mxu0 0.0
    %2302 = vmatpush.xpose.msra.mxu0 0.0
    %2303 = vmatpush.xpose.msra.mxu0 0.0
    %2304 = vmatpush.xpose.msra.mxu0 0.0
    %2305 = vmatpush.xpose.msra.mxu0 0.0
    %2306 = vmatpush.xpose.msra.mxu0 0.0
    %2307 = vmatpush.xpose.msra.mxu0 0.0
    %2308 = vmatpush.xpose.msra.mxu0 0.0
    %2309 = vmatpush.xpose.msra.mxu0 0.0
    %2310 = vmatpush.xpose.msra.mxu0 0.0
    %2311 = vmatpush.xpose.msra.mxu0 0.0
    %2312 = vmatpush.xpose.msra.mxu0 0.0
    %2313 = vmatpush.xpose.msra.mxu0 0.0
    %2314 = vmatpush.xpose.msra.mxu0 0.0
    %2315 = vmatpush.xpose.msra.mxu0 0.0
    %2316 = vmatpush.xpose.msra.mxu0 %v2299
    %2317 = vmatmul.f32.gmra.mxu0 %v2293
    %v2318 = vpop.f32.mrf.mxu0
    %v2319 = vadd.f32 0.0, %v2318
    %2320 = vmatmul.f32.gmra.mxu0 %v2296
    %v2321 = vpop.f32.mrf.mxu0
    %v2322 = vadd.f32 0.0, %v2321
    %2323 = vdwg.mxu0
    %v2325 = vsel %vm1267, %v1840, 0
    %v2328 = vsel %vm1267, %v1855, 0
    %v2331 = vsel %vm1267, %v270, 0
    %2333 = vmatpush.xpose.msra.mxu0 0.0
    %2334 = vmatpush.xpose.msra.mxu0 0.0
    %2335 = vmatpush.xpose.msra.mxu0 0.0
    %2336 = vmatpush.xpose.msra.mxu0 0.0
    %2337 = vmatpush.xpose.msra.mxu0 0.0
    %2338 = vmatpush.xpose.msra.mxu0 0.0
    %2339 = vmatpush.xpose.msra.mxu0 0.0
    %2340 = vmatpush.xpose.msra.mxu0 0.0
    %2341 = vmatpush.xpose.msra.mxu0 0.0
    %2342 = vmatpush.xpose.msra.mxu0 0.0
    %2343 = vmatpush.xpose.msra.mxu0 0.0
    %2344 = vmatpush.xpose.msra.mxu0 0.0
    %2345 = vmatpush.xpose.msra.mxu0 0.0
    %2346 = vmatpush.xpose.msra.mxu0 0.0
    %2347 = vmatpush.xpose.msra.mxu0 0.0
    %2348 = vmatpush.xpose.msra.mxu0 %v2331
    %2349 = vmatmul.f32.gmra.mxu0 %v2325
    %v2350 = vpop.f32.mrf.mxu0
    %v2351 = vadd.f32 0.0, %v2350
    %2352 = vmatmul.f32.gmra.mxu0 %v2328
    %v2353 = vpop.f32.mrf.mxu0
    %v2354 = vadd.f32 0.0, %v2353
    %2355 = vdwg.mxu0
    %v2357 = vsel %vm1267, %v1870, 0
    %v2360 = vsel %vm1267, %v1885, 0
    %v2363 = vsel %vm1267, %v271, 0
    %2365 = vmatpush.xpose.msra.mxu0 0.0
    %2366 = vmatpush.xpose.msra.mxu0 0.0
    %2367 = vmatpush.xpose.msra.mxu0 0.0
    %2368 = vmatpush.xpose.msra.mxu0 0.0
    %2369 = vmatpush.xpose.msra.mxu0 0.0
    %2370 = vmatpush.xpose.msra.mxu0 0.0
    %2371 = vmatpush.xpose.msra.mxu0 0.0
    %2372 = vmatpush.xpose.msra.mxu0 0.0
    %2373 = vmatpush.xpose.msra.mxu0 0.0
    %2374 = vmatpush.xpose.msra.mxu0 0.0
    %2375 = vmatpush.xpose.msra.mxu0 0.0
    %2376 = vmatpush.xpose.msra.mxu0 0.0
    %2377 = vmatpush.xpose.msra.mxu0 0.0
    %2378 = vmatpush.xpose.msra.mxu0 0.0
    %2379 = vmatpush.xpose.msra.mxu0 0.0
    %2380 = vmatpush.xpose.msra.mxu0 %v2363
    %2381 = vmatmul.f32.gmra.mxu0 %v2357
    %v2382 = vpop.f32.mrf.mxu0
    %v2383 = vadd.f32 0.0, %v2382
    %2384 = vmatmul.f32.gmra.mxu0 %v2360
    %v2385 = vpop.f32.mrf.mxu0
    %v2386 = vadd.f32 0.0, %v2385
    %2387 = vdwg.mxu0
    %v2389 = vsel %vm1267, %v1900, 0
    %v2392 = vsel %vm1267, %v1915, 0
    %v2395 = vsel %vm1267, %v272, 0
    %2397 = vmatpush.xpose.msra.mxu0 0.0
    %2398 = vmatpush.xpose.msra.mxu0 0.0
    %2399 = vmatpush.xpose.msra.mxu0 0.0
    %2400 = vmatpush.xpose.msra.mxu0 0.0
    %2401 = vmatpush.xpose.msra.mxu0 0.0
    %2402 = vmatpush.xpose.msra.mxu0 0.0
    %2403 = vmatpush.xpose.msra.mxu0 0.0
    %2404 = vmatpush.xpose.msra.mxu0 0.0
    %2405 = vmatpush.xpose.msra.mxu0 0.0
    %2406 = vmatpush.xpose.msra.mxu0 0.0
    %2407 = vmatpush.xpose.msra.mxu0 0.0
    %2408 = vmatpush.xpose.msra.mxu0 0.0
    %2409 = vmatpush.xpose.msra.mxu0 0.0
    %2410 = vmatpush.xpose.msra.mxu0 0.0
    %2411 = vmatpush.xpose.msra.mxu0 0.0
    %2412 = vmatpush.xpose.msra.mxu0 %v2395
    %2413 = vmatmul.f32.gmra.mxu0 %v2389
    %v2414 = vpop.f32.mrf.mxu0
    %v2415 = vadd.f32 0.0, %v2414
    %2416 = vmatmul.f32.gmra.mxu0 %v2392
    %v2417 = vpop.f32.mrf.mxu0
    %v2418 = vadd.f32 0.0, %v2417
    %2419 = vdwg.mxu0
    %v2421 = vsel %vm1267, %v1930, 0
    %v2424 = vsel %vm1267, %v1945, 0
    %v2427 = vsel %vm1267, %v273, 0
    %2429 = vmatpush.xpose.msra.mxu0 0.0
    %2430 = vmatpush.xpose.msra.mxu0 0.0
    %2431 = vmatpush.xpose.msra.mxu0 0.0
    %2432 = vmatpush.xpose.msra.mxu0 0.0
    %2433 = vmatpush.xpose.msra.mxu0 0.0
    %2434 = vmatpush.xpose.msra.mxu0 0.0
    %2435 = vmatpush.xpose.msra.mxu0 0.0
    %2436 = vmatpush.xpose.msra.mxu0 0.0
    %2437 = vmatpush.xpose.msra.mxu0 0.0
    %2438 = vmatpush.xpose.msra.mxu0 0.0
    %2439 = vmatpush.xpose.msra.mxu0 0.0
    %2440 = vmatpush.xpose.msra.mxu0 0.0
    %2441 = vmatpush.xpose.msra.mxu0 0.0
    %2442 = vmatpush.xpose.msra.mxu0 0.0
    %2443 = vmatpush.xpose.msra.mxu0 0.0
    %2444 = vmatpush.xpose.msra.mxu0 %v2427
    %2445 = vmatmul.f32.gmra.mxu0 %v2421
    %v2446 = vpop.f32.mrf.mxu0
    %v2447 = vadd.f32 0.0, %v2446
    %2448 = vmatmul.f32.gmra.mxu0 %v2424
    %v2449 = vpop.f32.mrf.mxu0
    %v2450 = vadd.f32 0.0, %v2449
    %2451 = vdwg.mxu0
    %v2453 = vsel %vm1267, %v1960, 0
    %v2456 = vsel %vm1267, %v1975, 0
    %v2459 = vsel %vm1267, %v274, 0
    %2461 = vmatpush.xpose.msra.mxu0 0.0
    %2462 = vmatpush.xpose.msra.mxu0 0.0
    %2463 = vmatpush.xpose.msra.mxu0 0.0
    %2464 = vmatpush.xpose.msra.mxu0 0.0
    %2465 = vmatpush.xpose.msra.mxu0 0.0
    %2466 = vmatpush.xpose.msra.mxu0 0.0
    %2467 = vmatpush.xpose.msra.mxu0 0.0
    %2468 = vmatpush.xpose.msra.mxu0 0.0
    %2469 = vmatpush.xpose.msra.mxu0 0.0
    %2470 = vmatpush.xpose.msra.mxu0 0.0
    %2471 = vmatpush.xpose.msra.mxu0 0.0
    %2472 = vmatpush.xpose.msra.mxu0 0.0
    %2473 = vmatpush.xpose.msra.mxu0 0.0
    %2474 = vmatpush.xpose.msra.mxu0 0.0
    %2475 = vmatpush.xpose.msra.mxu0 0.0
    %2476 = vmatpush.xpose.msra.mxu0 %v2459
    %2477 = vmatmul.f32.gmra.mxu0 %v2453
    %v2478 = vpop.f32.mrf.mxu0
    %v2479 = vadd.f32 0.0, %v2478
    %2480 = vmatmul.f32.gmra.mxu0 %v2456
    %v2481 = vpop.f32.mrf.mxu0
    %v2482 = vadd.f32 0.0, %v2481
    %2483 = vdwg.mxu0
    %v2485 = vsel %vm1267, %v1990, 0
    %v2488 = vsel %vm1267, %v2005, 0
    %v2491 = vsel %vm1267, %v275, 0
    %2493 = vmatpush.xpose.msra.mxu0 0.0
    %2494 = vmatpush.xpose.msra.mxu0 0.0
    %2495 = vmatpush.xpose.msra.mxu0 0.0
    %2496 = vmatpush.xpose.msra.mxu0 0.0
    %2497 = vmatpush.xpose.msra.mxu0 0.0
    %2498 = vmatpush.xpose.msra.mxu0 0.0
    %2499 = vmatpush.xpose.msra.mxu0 0.0
    %2500 = vmatpush.xpose.msra.mxu0 0.0
    %2501 = vmatpush.xpose.msra.mxu0 0.0
    %2502 = vmatpush.xpose.msra.mxu0 0.0
    %2503 = vmatpush.xpose.msra.mxu0 0.0
    %2504 = vmatpush.xpose.msra.mxu0 0.0
    %2505 = vmatpush.xpose.msra.mxu0 0.0
    %2506 = vmatpush.xpose.msra.mxu0 0.0
    %2507 = vmatpush.xpose.msra.mxu0 0.0
    %2508 = vmatpush.xpose.msra.mxu0 %v2491
    %2509 = vmatmul.f32.gmra.mxu0 %v2485
    %v2510 = vpop.f32.mrf.mxu0
    %v2511 = vadd.f32 0.0, %v2510
    %2512 = vmatmul.f32.gmra.mxu0 %v2488
    %v2513 = vpop.f32.mrf.mxu0
    %v2514 = vadd.f32 0.0, %v2513
    %2515 = vdwg.mxu0
    %v2517 = vsel %vm1267, %v2020, 0
    %v2520 = vsel %vm1267, %v2035, 0
    %v2523 = vsel %vm1267, %v276, 0
    %2525 = vmatpush.xpose.msra.mxu0 0.0
    %2526 = vmatpush.xpose.msra.mxu0 0.0
    %2527 = vmatpush.xpose.msra.mxu0 0.0
    %2528 = vmatpush.xpose.msra.mxu0 0.0
    %2529 = vmatpush.xpose.msra.mxu0 0.0
    %2530 = vmatpush.xpose.msra.mxu0 0.0
    %2531 = vmatpush.xpose.msra.mxu0 0.0
    %2532 = vmatpush.xpose.msra.mxu0 0.0
    %2533 = vmatpush.xpose.msra.mxu0 0.0
    %2534 = vmatpush.xpose.msra.mxu0 0.0
    %2535 = vmatpush.xpose.msra.mxu0 0.0
    %2536 = vmatpush.xpose.msra.mxu0 0.0
    %2537 = vmatpush.xpose.msra.mxu0 0.0
    %2538 = vmatpush.xpose.msra.mxu0 0.0
    %2539 = vmatpush.xpose.msra.mxu0 0.0
    %2540 = vmatpush.xpose.msra.mxu0 %v2523
    %2541 = vmatmul.f32.gmra.mxu0 %v2517
    %v2542 = vpop.f32.mrf.mxu0
    %v2543 = vadd.f32 0.0, %v2542
    %2544 = vmatmul.f32.gmra.mxu0 %v2520
    %v2545 = vpop.f32.mrf.mxu0
    %v2546 = vadd.f32 0.0, %v2545
    %2547 = vdwg.mxu0
    %2548 = vxpose.xlu0.b32.start [1/16] %v2063, 128
    %2549 = vxpose.xlu0.b32.cont [2/16] %v2066, 128
    %2550 = vxpose.xlu0.b32.cont [3/16] 0.0, 128
    %2551 = vxpose.xlu0.b32.cont [4/16] 0.0, 128
    %2552 = vxpose.xlu0.b32.cont [5/16] 0.0, 128
    %2553 = vxpose.xlu0.b32.cont [6/16] 0.0, 128
    %2554 = vxpose.xlu0.b32.cont [7/16] 0.0, 128
    %2555 = vxpose.xlu0.b32.cont [8/16] 0.0, 128
    %2556 = vxpose.xlu0.b32.cont [9/16] 0.0, 128
    %2557 = vxpose.xlu0.b32.cont [10/16] 0.0, 128
    %2558 = vxpose.xlu0.b32.cont [11/16] 0.0, 128
    %2559 = vxpose.xlu0.b32.cont [12/16] 0.0, 128
    %2560 = vxpose.xlu0.b32.cont [13/16] 0.0, 128
    %2561 = vxpose.xlu0.b32.cont [14/16] 0.0, 128
    %2562 = vxpose.xlu0.b32.cont [15/16] 0.0, 128
    %2563 = vxpose.xlu0.b32.end [16/16] 0.0, 128
    %v2564 = vpop.trf.xlu0
    %v2565 = vpop.trf.xlu0
    %v2566 = vpop.trf.xlu0
    %v2567 = vpop.trf.xlu0
    %v2568 = vpop.trf.xlu0
    %v2569 = vpop.trf.xlu0
    %v2570 = vpop.trf.xlu0
    %v2571 = vpop.trf.xlu0
    %v2572 = vpop.trf.xlu0
    %v2573 = vpop.trf.xlu0
    %v2574 = vpop.trf.xlu0
    %v2575 = vpop.trf.xlu0
    %v2576 = vpop.trf.xlu0
    %v2577 = vpop.trf.xlu0
    %v2578 = vpop.trf.xlu0
    %v2579 = vpop.trf.xlu0
    %2580 = vxpose.xlu0.b32.start [1/16] %v2095, 128
    %2581 = vxpose.xlu0.b32.cont [2/16] %v2098, 128
    %2582 = vxpose.xlu0.b32.cont [3/16] 0.0, 128
    %2583 = vxpose.xlu0.b32.cont [4/16] 0.0, 128
    %2584 = vxpose.xlu0.b32.cont [5/16] 0.0, 128
    %2585 = vxpose.xlu0.b32.cont [6/16] 0.0, 128
    %2586 = vxpose.xlu0.b32.cont [7/16] 0.0, 128
    %2587 = vxpose.xlu0.b32.cont [8/16] 0.0, 128
    %2588 = vxpose.xlu0.b32.cont [9/16] 0.0, 128
    %2589 = vxpose.xlu0.b32.cont [10/16] 0.0, 128
    %2590 = vxpose.xlu0.b32.cont [11/16] 0.0, 128
    %2591 = vxpose.xlu0.b32.cont [12/16] 0.0, 128
    %2592 = vxpose.xlu0.b32.cont [13/16] 0.0, 128
    %2593 = vxpose.xlu0.b32.cont [14/16] 0.0, 128
    %2594 = vxpose.xlu0.b32.cont [15/16] 0.0, 128
    %2595 = vxpose.xlu0.b32.end [16/16] 0.0, 128
    %v2596 = vpop.trf.xlu0
    %v2597 = vpop.trf.xlu0
    %v2598 = vpop.trf.xlu0
    %v2599 = vpop.trf.xlu0
    %v2600 = vpop.trf.xlu0
    %v2601 = vpop.trf.xlu0
    %v2602 = vpop.trf.xlu0
    %v2603 = vpop.trf.xlu0
    %v2604 = vpop.trf.xlu0
    %v2605 = vpop.trf.xlu0
    %v2606 = vpop.trf.xlu0
    %v2607 = vpop.trf.xlu0
    %v2608 = vpop.trf.xlu0
    %v2609 = vpop.trf.xlu0
    %v2610 = vpop.trf.xlu0
    %v2611 = vpop.trf.xlu0
    %2612 = vxpose.xlu0.b32.start [1/16] %v2127, 128
    %2613 = vxpose.xlu0.b32.cont [2/16] %v2130, 128
    %2614 = vxpose.xlu0.b32.cont [3/16] 0.0, 128
    %2615 = vxpose.xlu0.b32.cont [4/16] 0.0, 128
    %2616 = vxpose.xlu0.b32.cont [5/16] 0.0, 128
    %2617 = vxpose.xlu0.b32.cont [6/16] 0.0, 128
    %2618 = vxpose.xlu0.b32.cont [7/16] 0.0, 128
    %2619 = vxpose.xlu0.b32.cont [8/16] 0.0, 128
    %2620 = vxpose.xlu0.b32.cont [9/16] 0.0, 128
    %2621 = vxpose.xlu0.b32.cont [10/16] 0.0, 128
    %2622 = vxpose.xlu0.b32.cont [11/16] 0.0, 128
    %2623 = vxpose.xlu0.b32.cont [12/16] 0.0, 128
    %2624 = vxpose.xlu0.b32.cont [13/16] 0.0, 128
    %2625 = vxpose.xlu0.b32.cont [14/16] 0.0, 128
    %2626 = vxpose.xlu0.b32.cont [15/16] 0.0, 128
    %2627 = vxpose.xlu0.b32.end [16/16] 0.0, 128
    %v2628 = vpop.trf.xlu0
    %v2629 = vpop.trf.xlu0
    %v2630 = vpop.trf.xlu0
    %v2631 = vpop.trf.xlu0
    %v2632 = vpop.trf.xlu0
    %v2633 = vpop.trf.xlu0
    %v2634 = vpop.trf.xlu0
    %v2635 = vpop.trf.xlu0
    %v2636 = vpop.trf.xlu0
    %v2637 = vpop.trf.xlu0
    %v2638 = vpop.trf.xlu0
    %v2639 = vpop.trf.xlu0
    %v2640 = vpop.trf.xlu0
    %v2641 = vpop.trf.xlu0
    %v2642 = vpop.trf.xlu0
    %v2643 = vpop.trf.xlu0
    %2644 = vxpose.xlu0.b32.start [1/16] %v2159, 128
    %2645 = vxpose.xlu0.b32.cont [2/16] %v2162, 128
    %2646 = vxpose.xlu0.b32.cont [3/16] 0.0, 128
    %2647 = vxpose.xlu0.b32.cont [4/16] 0.0, 128
    %2648 = vxpose.xlu0.b32.cont [5/16] 0.0, 128
    %2649 = vxpose.xlu0.b32.cont [6/16] 0.0, 128
    %2650 = vxpose.xlu0.b32.cont [7/16] 0.0, 128
    %2651 = vxpose.xlu0.b32.cont [8/16] 0.0, 128
    %2652 = vxpose.xlu0.b32.cont [9/16] 0.0, 128
    %2653 = vxpose.xlu0.b32.cont [10/16] 0.0, 128
    %2654 = vxpose.xlu0.b32.cont [11/16] 0.0, 128
    %2655 = vxpose.xlu0.b32.cont [12/16] 0.0, 128
    %2656 = vxpose.xlu0.b32.cont [13/16] 0.0, 128
    %2657 = vxpose.xlu0.b32.cont [14/16] 0.0, 128
    %2658 = vxpose.xlu0.b32.cont [15/16] 0.0, 128
    %2659 = vxpose.xlu0.b32.end [16/16] 0.0, 128
    %v2660 = vpop.trf.xlu0
    %v2661 = vpop.trf.xlu0
    %v2662 = vpop.trf.xlu0
    %v2663 = vpop.trf.xlu0
    %v2664 = vpop.trf.xlu0
    %v2665 = vpop.trf.xlu0
    %v2666 = vpop.trf.xlu0
    %v2667 = vpop.trf.xlu0
    %v2668 = vpop.trf.xlu0
    %v2669 = vpop.trf.xlu0
    %v2670 = vpop.trf.xlu0
    %v2671 = vpop.trf.xlu0
    %v2672 = vpop.trf.xlu0
    %v2673 = vpop.trf.xlu0
    %v2674 = vpop.trf.xlu0
    %v2675 = vpop.trf.xlu0
    %2676 = vxpose.xlu0.b32.start [1/16] %v2191, 128
    %2677 = vxpose.xlu0.b32.cont [2/16] %v2194, 128
    %2678 = vxpose.xlu0.b32.cont [3/16] 0.0, 128
    %2679 = vxpose.xlu0.b32.cont [4/16] 0.0, 128
    %2680 = vxpose.xlu0.b32.cont [5/16] 0.0, 128
    %2681 = vxpose.xlu0.b32.cont [6/16] 0.0, 128
    %2682 = vxpose.xlu0.b32.cont [7/16] 0.0, 128
    %2683 = vxpose.xlu0.b32.cont [8/16] 0.0, 128
    %2684 = vxpose.xlu0.b32.cont [9/16] 0.0, 128
    %2685 = vxpose.xlu0.b32.cont [10/16] 0.0, 128
    %2686 = vxpose.xlu0.b32.cont [11/16] 0.0, 128
    %2687 = vxpose.xlu0.b32.cont [12/16] 0.0, 128
    %2688 = vxpose.xlu0.b32.cont [13/16] 0.0, 128
    %2689 = vxpose.xlu0.b32.cont [14/16] 0.0, 128
    %2690 = vxpose.xlu0.b32.cont [15/16] 0.0, 128
    %2691 = vxpose.xlu0.b32.end [16/16] 0.0, 128
    %v2692 = vpop.trf.xlu0
    %v2693 = vpop.trf.xlu0
    %v2694 = vpop.trf.xlu0
    %v2695 = vpop.trf.xlu0
    %v2696 = vpop.trf.xlu0
    %v2697 = vpop.trf.xlu0
    %v2698 = vpop.trf.xlu0
    %v2699 = vpop.trf.xlu0
    %v2700 = vpop.trf.xlu0
    %v2701 = vpop.trf.xlu0
    %v2702 = vpop.trf.xlu0
    %v2703 = vpop.trf.xlu0
    %v2704 = vpop.trf.xlu0
    %v2705 = vpop.trf.xlu0
    %v2706 = vpop.trf.xlu0
    %v2707 = vpop.trf.xlu0
    %2708 = vxpose.xlu0.b32.start [1/16] %v2223, 128
    %2709 = vxpose.xlu0.b32.cont [2/16] %v2226, 128
    %2710 = vxpose.xlu0.b32.cont [3/16] 0.0, 128
    %2711 = vxpose.xlu0.b32.cont [4/16] 0.0, 128
    %2712 = vxpose.xlu0.b32.cont [5/16] 0.0, 128
    %2713 = vxpose.xlu0.b32.cont [6/16] 0.0, 128
    %2714 = vxpose.xlu0.b32.cont [7/16] 0.0, 128
    %2715 = vxpose.xlu0.b32.cont [8/16] 0.0, 128
    %2716 = vxpose.xlu0.b32.cont [9/16] 0.0, 128
    %2717 = vxpose.xlu0.b32.cont [10/16] 0.0, 128
    %2718 = vxpose.xlu0.b32.cont [11/16] 0.0, 128
    %2719 = vxpose.xlu0.b32.cont [12/16] 0.0, 128
    %2720 = vxpose.xlu0.b32.cont [13/16] 0.0, 128
    %2721 = vxpose.xlu0.b32.cont [14/16] 0.0, 128
    %2722 = vxpose.xlu0.b32.cont [15/16] 0.0, 128
    %2723 = vxpose.xlu0.b32.end [16/16] 0.0, 128
    %v2724 = vpop.trf.xlu0
    %v2725 = vpop.trf.xlu0
    %v2726 = vpop.trf.xlu0
    %v2727 = vpop.trf.xlu0
    %v2728 = vpop.trf.xlu0
    %v2729 = vpop.trf.xlu0
    %v2730 = vpop.trf.xlu0
    %v2731 = vpop.trf.xlu0
    %v2732 = vpop.trf.xlu0
    %v2733 = vpop.trf.xlu0
    %v2734 = vpop.trf.xlu0
    %v2735 = vpop.trf.xlu0
    %v2736 = vpop.trf.xlu0
    %v2737 = vpop.trf.xlu0
    %v2738 = vpop.trf.xlu0
    %v2739 = vpop.trf.xlu0
    %2740 = vxpose.xlu0.b32.start [1/16] %v2255, 128
    %2741 = vxpose.xlu0.b32.cont [2/16] %v2258, 128
    %2742 = vxpose.xlu0.b32.cont [3/16] 0.0, 128
    %2743 = vxpose.xlu0.b32.cont [4/16] 0.0, 128
    %2744 = vxpose.xlu0.b32.cont [5/16] 0.0, 128
    %2745 = vxpose.xlu0.b32.cont [6/16] 0.0, 128
    %2746 = vxpose.xlu0.b32.cont [7/16] 0.0, 128
    %2747 = vxpose.xlu0.b32.cont [8/16] 0.0, 128
    %2748 = vxpose.xlu0.b32.cont [9/16] 0.0, 128
    %2749 = vxpose.xlu0.b32.cont [10/16] 0.0, 128
    %2750 = vxpose.xlu0.b32.cont [11/16] 0.0, 128
    %2751 = vxpose.xlu0.b32.cont [12/16] 0.0, 128
    %2752 = vxpose.xlu0.b32.cont [13/16] 0.0, 128
    %2753 = vxpose.xlu0.b32.cont [14/16] 0.0, 128
    %2754 = vxpose.xlu0.b32.cont [15/16] 0.0, 128
    %2755 = vxpose.xlu0.b32.end [16/16] 0.0, 128
    %v2756 = vpop.trf.xlu0
    %v2757 = vpop.trf.xlu0
    %v2758 = vpop.trf.xlu0
    %v2759 = vpop.trf.xlu0
    %v2760 = vpop.trf.xlu0
    %v2761 = vpop.trf.xlu0
    %v2762 = vpop.trf.xlu0
    %v2763 = vpop.trf.xlu0
    %v2764 = vpop.trf.xlu0
    %v2765 = vpop.trf.xlu0
    %v2766 = vpop.trf.xlu0
    %v2767 = vpop.trf.xlu0
    %v2768 = vpop.trf.xlu0
    %v2769 = vpop.trf.xlu0
    %v2770 = vpop.trf.xlu0
    %v2771 = vpop.trf.xlu0
    %2772 = vxpose.xlu0.b32.start [1/16] %v2287, 128
    %2773 = vxpose.xlu0.b32.cont [2/16] %v2290, 128
    %2774 = vxpose.xlu0.b32.cont [3/16] 0.0, 128
    %2775 = vxpose.xlu0.b32.cont [4/16] 0.0, 128
    %2776 = vxpose.xlu0.b32.cont [5/16] 0.0, 128
    %2777 = vxpose.xlu0.b32.cont [6/16] 0.0, 128
    %2778 = vxpose.xlu0.b32.cont [7/16] 0.0, 128
    %2779 = vxpose.xlu0.b32.cont [8/16] 0.0, 128
    %2780 = vxpose.xlu0.b32.cont [9/16] 0.0, 128
    %2781 = vxpose.xlu0.b32.cont [10/16] 0.0, 128
    %2782 = vxpose.xlu0.b32.cont [11/16] 0.0, 128
    %2783 = vxpose.xlu0.b32.cont [12/16] 0.0, 128
    %2784 = vxpose.xlu0.b32.cont [13/16] 0.0, 128
    %2785 = vxpose.xlu0.b32.cont [14/16] 0.0, 128
    %2786 = vxpose.xlu0.b32.cont [15/16] 0.0, 128
    %2787 = vxpose.xlu0.b32.end [16/16] 0.0, 128
    %v2788 = vpop.trf.xlu0
    %v2789 = vpop.trf.xlu0
    %v2790 = vpop.trf.xlu0
    %v2791 = vpop.trf.xlu0
    %v2792 = vpop.trf.xlu0
    %v2793 = vpop.trf.xlu0
    %v2794 = vpop.trf.xlu0
    %v2795 = vpop.trf.xlu0
    %v2796 = vpop.trf.xlu0
    %v2797 = vpop.trf.xlu0
    %v2798 = vpop.trf.xlu0
    %v2799 = vpop.trf.xlu0
    %v2800 = vpop.trf.xlu0
    %v2801 = vpop.trf.xlu0
    %v2802 = vpop.trf.xlu0
    %v2803 = vpop.trf.xlu0
    %2804 = vxpose.xlu0.b32.start [1/16] %v2319, 128
    %2805 = vxpose.xlu0.b32.cont [2/16] %v2322, 128
    %2806 = vxpose.xlu0.b32.cont [3/16] 0.0, 128
    %2807 = vxpose.xlu0.b32.cont [4/16] 0.0, 128
    %2808 = vxpose.xlu0.b32.cont [5/16] 0.0, 128
    %2809 = vxpose.xlu0.b32.cont [6/16] 0.0, 128
    %2810 = vxpose.xlu0.b32.cont [7/16] 0.0, 128
    %2811 = vxpose.xlu0.b32.cont [8/16] 0.0, 128
    %2812 = vxpose.xlu0.b32.cont [9/16] 0.0, 128
    %2813 = vxpose.xlu0.b32.cont [10/16] 0.0, 128
    %2814 = vxpose.xlu0.b32.cont [11/16] 0.0, 128
    %2815 = vxpose.xlu0.b32.cont [12/16] 0.0, 128
    %2816 = vxpose.xlu0.b32.cont [13/16] 0.0, 128
    %2817 = vxpose.xlu0.b32.cont [14/16] 0.0, 128
    %2818 = vxpose.xlu0.b32.cont [15/16] 0.0, 128
    %2819 = vxpose.xlu0.b32.end [16/16] 0.0, 128
    %v2820 = vpop.trf.xlu0
    %v2821 = vpop.trf.xlu0
    %v2822 = vpop.trf.xlu0
    %v2823 = vpop.trf.xlu0
    %v2824 = vpop.trf.xlu0
    %v2825 = vpop.trf.xlu0
    %v2826 = vpop.trf.xlu0
    %v2827 = vpop.trf.xlu0
    %v2828 = vpop.trf.xlu0
    %v2829 = vpop.trf.xlu0
    %v2830 = vpop.trf.xlu0
    %v2831 = vpop.trf.xlu0
    %v2832 = vpop.trf.xlu0
    %v2833 = vpop.trf.xlu0
    %v2834 = vpop.trf.xlu0
    %v2835 = vpop.trf.xlu0
    %2836 = vxpose.xlu0.b32.start [1/16] %v2351, 128
    %2837 = vxpose.xlu0.b32.cont [2/16] %v2354, 128
    %2838 = vxpose.xlu0.b32.cont [3/16] 0.0, 128
    %2839 = vxpose.xlu0.b32.cont [4/16] 0.0, 128
    %2840 = vxpose.xlu0.b32.cont [5/16] 0.0, 128
    %2841 = vxpose.xlu0.b32.cont [6/16] 0.0, 128
    %2842 = vxpose.xlu0.b32.cont [7/16] 0.0, 128
    %2843 = vxpose.xlu0.b32.cont [8/16] 0.0, 128
    %2844 = vxpose.xlu0.b32.cont [9/16] 0.0, 128
    %2845 = vxpose.xlu0.b32.cont [10/16] 0.0, 128
    %2846 = vxpose.xlu0.b32.cont [11/16] 0.0, 128
    %2847 = vxpose.xlu0.b32.cont [12/16] 0.0, 128
    %2848 = vxpose.xlu0.b32.cont [13/16] 0.0, 128
    %2849 = vxpose.xlu0.b32.cont [14/16] 0.0, 128
    %2850 = vxpose.xlu0.b32.cont [15/16] 0.0, 128
    %2851 = vxpose.xlu0.b32.end [16/16] 0.0, 128
    %v2852 = vpop.trf.xlu0
    %v2853 = vpop.trf.xlu0
    %v2854 = vpop.trf.xlu0
    %v2855 = vpop.trf.xlu0
    %v2856 = vpop.trf.xlu0
    %v2857 = vpop.trf.xlu0
    %v2858 = vpop.trf.xlu0
    %v2859 = vpop.trf.xlu0
    %v2860 = vpop.trf.xlu0
    %v2861 = vpop.trf.xlu0
    %v2862 = vpop.trf.xlu0
    %v2863 = vpop.trf.xlu0
    %v2864 = vpop.trf.xlu0
    %v2865 = vpop.trf.xlu0
    %v2866 = vpop.trf.xlu0
    %v2867 = vpop.trf.xlu0
    %2868 = vxpose.xlu0.b32.start [1/16] %v2383, 128
    %2869 = vxpose.xlu0.b32.cont [2/16] %v2386, 128
    %2870 = vxpose.xlu0.b32.cont [3/16] 0.0, 128
    %2871 = vxpose.xlu0.b32.cont [4/16] 0.0, 128
    %2872 = vxpose.xlu0.b32.cont [5/16] 0.0, 128
    %2873 = vxpose.xlu0.b32.cont [6/16] 0.0, 128
    %2874 = vxpose.xlu0.b32.cont [7/16] 0.0, 128
    %2875 = vxpose.xlu0.b32.cont [8/16] 0.0, 128
    %2876 = vxpose.xlu0.b32.cont [9/16] 0.0, 128
    %2877 = vxpose.xlu0.b32.cont [10/16] 0.0, 128
    %2878 = vxpose.xlu0.b32.cont [11/16] 0.0, 128
    %2879 = vxpose.xlu0.b32.cont [12/16] 0.0, 128
    %2880 = vxpose.xlu0.b32.cont [13/16] 0.0, 128
    %2881 = vxpose.xlu0.b32.cont [14/16] 0.0, 128
    %2882 = vxpose.xlu0.b32.cont [15/16] 0.0, 128
    %2883 = vxpose.xlu0.b32.end [16/16] 0.0, 128
    %v2884 = vpop.trf.xlu0
    %v2885 = vpop.trf.xlu0
    %v2886 = vpop.trf.xlu0
    %v2887 = vpop.trf.xlu0
    %v2888 = vpop.trf.xlu0
    %v2889 = vpop.trf.xlu0
    %v2890 = vpop.trf.xlu0
    %v2891 = vpop.trf.xlu0
    %v2892 = vpop.trf.xlu0
    %v2893 = vpop.trf.xlu0
    %v2894 = vpop.trf.xlu0
    %v2895 = vpop.trf.xlu0
    %v2896 = vpop.trf.xlu0
    %v2897 = vpop.trf.xlu0
    %v2898 = vpop.trf.xlu0
    %v2899 = vpop.trf.xlu0
    %2900 = vxpose.xlu0.b32.start [1/16] %v2415, 128
    %2901 = vxpose.xlu0.b32.cont [2/16] %v2418, 128
    %2902 = vxpose.xlu0.b32.cont [3/16] 0.0, 128
    %2903 = vxpose.xlu0.b32.cont [4/16] 0.0, 128
    %2904 = vxpose.xlu0.b32.cont [5/16] 0.0, 128
    %2905 = vxpose.xlu0.b32.cont [6/16] 0.0, 128
    %2906 = vxpose.xlu0.b32.cont [7/16] 0.0, 128
    %2907 = vxpose.xlu0.b32.cont [8/16] 0.0, 128
    %2908 = vxpose.xlu0.b32.cont [9/16] 0.0, 128
    %2909 = vxpose.xlu0.b32.cont [10/16] 0.0, 128
    %2910 = vxpose.xlu0.b32.cont [11/16] 0.0, 128
    %2911 = vxpose.xlu0.b32.cont [12/16] 0.0, 128
    %2912 = vxpose.xlu0.b32.cont [13/16] 0.0, 128
    %2913 = vxpose.xlu0.b32.cont [14/16] 0.0, 128
    %2914 = vxpose.xlu0.b32.cont [15/16] 0.0, 128
    %2915 = vxpose.xlu0.b32.end [16/16] 0.0, 128
    %v2916 = vpop.trf.xlu0
    %v2917 = vpop.trf.xlu0
    %v2918 = vpop.trf.xlu0
    %v2919 = vpop.trf.xlu0
    %v2920 = vpop.trf.xlu0
    %v2921 = vpop.trf.xlu0
    %v2922 = vpop.trf.xlu0
    %v2923 = vpop.trf.xlu0
    %v2924 = vpop.trf.xlu0
    %v2925 = vpop.trf.xlu0
    %v2926 = vpop.trf.xlu0
    %v2927 = vpop.trf.xlu0
    %v2928 = vpop.trf.xlu0
    %v2929 = vpop.trf.xlu0
    %v2930 = vpop.trf.xlu0
    %v2931 = vpop.trf.xlu0
    %2932 = vxpose.xlu0.b32.start [1/16] %v2447, 128
    %2933 = vxpose.xlu0.b32.cont [2/16] %v2450, 128
    %2934 = vxpose.xlu0.b32.cont [3/16] 0.0, 128
    %2935 = vxpose.xlu0.b32.cont [4/16] 0.0, 128
    %2936 = vxpose.xlu0.b32.cont [5/16] 0.0, 128
    %2937 = vxpose.xlu0.b32.cont [6/16] 0.0, 128
    %2938 = vxpose.xlu0.b32.cont [7/16] 0.0, 128
    %2939 = vxpose.xlu0.b32.cont [8/16] 0.0, 128
    %2940 = vxpose.xlu0.b32.cont [9/16] 0.0, 128
    %2941 = vxpose.xlu0.b32.cont [10/16] 0.0, 128
    %2942 = vxpose.xlu0.b32.cont [11/16] 0.0, 128
    %2943 = vxpose.xlu0.b32.cont [12/16] 0.0, 128
    %2944 = vxpose.xlu0.b32.cont [13/16] 0.0, 128
    %2945 = vxpose.xlu0.b32.cont [14/16] 0.0, 128
    %2946 = vxpose.xlu0.b32.cont [15/16] 0.0, 128
    %2947 = vxpose.xlu0.b32.end [16/16] 0.0, 128
    %v2948 = vpop.trf.xlu0
    %v2949 = vpop.trf.xlu0
    %v2950 = vpop.trf.xlu0
    %v2951 = vpop.trf.xlu0
    %v2952 = vpop.trf.xlu0
    %v2953 = vpop.trf.xlu0
    %v2954 = vpop.trf.xlu0
    %v2955 = vpop.trf.xlu0
    %v2956 = vpop.trf.xlu0
    %v2957 = vpop.trf.xlu0
    %v2958 = vpop.trf.xlu0
    %v2959 = vpop.trf.xlu0
    %v2960 = vpop.trf.xlu0
    %v2961 = vpop.trf.xlu0
    %v2962 = vpop.trf.xlu0
    %v2963 = vpop.trf.xlu0
    %2964 = vxpose.xlu0.b32.start [1/16] %v2479, 128
    %2965 = vxpose.xlu0.b32.cont [2/16] %v2482, 128
    %2966 = vxpose.xlu0.b32.cont [3/16] 0.0, 128
    %2967 = vxpose.xlu0.b32.cont [4/16] 0.0, 128
    %2968 = vxpose.xlu0.b32.cont [5/16] 0.0, 128
    %2969 = vxpose.xlu0.b32.cont [6/16] 0.0, 128
    %2970 = vxpose.xlu0.b32.cont [7/16] 0.0, 128
    %2971 = vxpose.xlu0.b32.cont [8/16] 0.0, 128
    %2972 = vxpose.xlu0.b32.cont [9/16] 0.0, 128
    %2973 = vxpose.xlu0.b32.cont [10/16] 0.0, 128
    %2974 = vxpose.xlu0.b32.cont [11/16] 0.0, 128
    %2975 = vxpose.xlu0.b32.cont [12/16] 0.0, 128
    %2976 = vxpose.xlu0.b32.cont [13/16] 0.0, 128
    %2977 = vxpose.xlu0.b32.cont [14/16] 0.0, 128
    %2978 = vxpose.xlu0.b32.cont [15/16] 0.0, 128
    %2979 = vxpose.xlu0.b32.end [16/16] 0.0, 128
    %v2980 = vpop.trf.xlu0
    %v2981 = vpop.trf.xlu0
    %v2982 = vpop.trf.xlu0
    %v2983 = vpop.trf.xlu0
    %v2984 = vpop.trf.xlu0
    %v2985 = vpop.trf.xlu0
    %v2986 = vpop.trf.xlu0
    %v2987 = vpop.trf.xlu0
    %v2988 = vpop.trf.xlu0
    %v2989 = vpop.trf.xlu0
    %v2990 = vpop.trf.xlu0
    %v2991 = vpop.trf.xlu0
    %v2992 = vpop.trf.xlu0
    %v2993 = vpop.trf.xlu0
    %v2994 = vpop.trf.xlu0
    %v2995 = vpop.trf.xlu0
    %2996 = vxpose.xlu0.b32.start [1/16] %v2511, 128
    %2997 = vxpose.xlu0.b32.cont [2/16] %v2514, 128
    %2998 = vxpose.xlu0.b32.cont [3/16] 0.0, 128
    %2999 = vxpose.xlu0.b32.cont [4/16] 0.0, 128
    %3000 = vxpose.xlu0.b32.cont [5/16] 0.0, 128
    %3001 = vxpose.xlu0.b32.cont [6/16] 0.0, 128
    %3002 = vxpose.xlu0.b32.cont [7/16] 0.0, 128
    %3003 = vxpose.xlu0.b32.cont [8/16] 0.0, 128
    %3004 = vxpose.xlu0.b32.cont [9/16] 0.0, 128
    %3005 = vxpose.xlu0.b32.cont [10/16] 0.0, 128
    %3006 = vxpose.xlu0.b32.cont [11/16] 0.0, 128
    %3007 = vxpose.xlu0.b32.cont [12/16] 0.0, 128
    %3008 = vxpose.xlu0.b32.cont [13/16] 0.0, 128
    %3009 = vxpose.xlu0.b32.cont [14/16] 0.0, 128
    %3010 = vxpose.xlu0.b32.cont [15/16] 0.0, 128
    %3011 = vxpose.xlu0.b32.end [16/16] 0.0, 128
    %v3012 = vpop.trf.xlu0
    %v3013 = vpop.trf.xlu0
    %v3014 = vpop.trf.xlu0
    %v3015 = vpop.trf.xlu0
    %v3016 = vpop.trf.xlu0
    %v3017 = vpop.trf.xlu0
    %v3018 = vpop.trf.xlu0
    %v3019 = vpop.trf.xlu0
    %v3020 = vpop.trf.xlu0
    %v3021 = vpop.trf.xlu0
    %v3022 = vpop.trf.xlu0
    %v3023 = vpop.trf.xlu0
    %v3024 = vpop.trf.xlu0
    %v3025 = vpop.trf.xlu0
    %v3026 = vpop.trf.xlu0
    %v3027 = vpop.trf.xlu0
    %3028 = vxpose.xlu0.b32.start [1/16] %v2543, 128
    %3029 = vxpose.xlu0.b32.cont [2/16] %v2546, 128
    %3030 = vxpose.xlu0.b32.cont [3/16] 0.0, 128
    %3031 = vxpose.xlu0.b32.cont [4/16] 0.0, 128
    %3032 = vxpose.xlu0.b32.cont [5/16] 0.0, 128
    %3033 = vxpose.xlu0.b32.cont [6/16] 0.0, 128
    %3034 = vxpose.xlu0.b32.cont [7/16] 0.0, 128
    %3035 = vxpose.xlu0.b32.cont [8/16] 0.0, 128
    %3036 = vxpose.xlu0.b32.cont [9/16] 0.0, 128
    %3037 = vxpose.xlu0.b32.cont [10/16] 0.0, 128
    %3038 = vxpose.xlu0.b32.cont [11/16] 0.0, 128
    %3039 = vxpose.xlu0.b32.cont [12/16] 0.0, 128
    %3040 = vxpose.xlu0.b32.cont [13/16] 0.0, 128
    %3041 = vxpose.xlu0.b32.cont [14/16] 0.0, 128
    %3042 = vxpose.xlu0.b32.cont [15/16] 0.0, 128
    %3043 = vxpose.xlu0.b32.end [16/16] 0.0, 128
    %v3044 = vpop.trf.xlu0
    %v3045 = vpop.trf.xlu0
    %v3046 = vpop.trf.xlu0
    %v3047 = vpop.trf.xlu0
    %v3048 = vpop.trf.xlu0
    %v3049 = vpop.trf.xlu0
    %v3050 = vpop.trf.xlu0
    %v3051 = vpop.trf.xlu0
    %v3052 = vpop.trf.xlu0
    %v3053 = vpop.trf.xlu0
    %v3054 = vpop.trf.xlu0
    %v3055 = vpop.trf.xlu0
    %v3056 = vpop.trf.xlu0
    %v3057 = vpop.trf.xlu0
    %v3058 = vpop.trf.xlu0
    %v3059 = vpop.trf.xlu0
    %3060 = vxpose.xlu0.b32.start [1/16] %v2564, 128
    %3061 = vxpose.xlu0.b32.cont [2/16] %v2596, 128
    %3062 = vxpose.xlu0.b32.cont [3/16] %v2628, 128
    %3063 = vxpose.xlu0.b32.cont [4/16] %v2660, 128
    %3064 = vxpose.xlu0.b32.cont [5/16] %v2692, 128
    %3065 = vxpose.xlu0.b32.cont [6/16] %v2724, 128
    %3066 = vxpose.xlu0.b32.cont [7/16] %v2756, 128
    %3067 = vxpose.xlu0.b32.cont [8/16] %v2788, 128
    %3068 = vxpose.xlu0.b32.cont [9/16] %v2820, 128
    %3069 = vxpose.xlu0.b32.cont [10/16] %v2852, 128
    %3070 = vxpose.xlu0.b32.cont [11/16] %v2884, 128
    %3071 = vxpose.xlu0.b32.cont [12/16] %v2916, 128
    %3072 = vxpose.xlu0.b32.cont [13/16] %v2948, 128
    %3073 = vxpose.xlu0.b32.cont [14/16] %v2980, 128
    %3074 = vxpose.xlu0.b32.cont [15/16] %v3012, 128
    %3075 = vxpose.xlu0.b32.end [16/16] %v3044, 128
    %v3076 = vpop.trf.xlu0
    %v3077 = vpop.trf.xlu0
    %v3078 = vpop.trf.xlu0
    %v3079 = vpop.trf.xlu0
    %v3080 = vpop.trf.xlu0
    %v3081 = vpop.trf.xlu0
    %v3082 = vpop.trf.xlu0
    %v3083 = vpop.trf.xlu0
    %v3084 = vpop.trf.xlu0
    %v3085 = vpop.trf.xlu0
    %v3086 = vpop.trf.xlu0
    %v3087 = vpop.trf.xlu0
    %v3088 = vpop.trf.xlu0
    %v3089 = vpop.trf.xlu0
    %v3090 = vpop.trf.xlu0
    %v3091 = vpop.trf.xlu0
    %v3092 = vld [vmem:[#allocation7] sm:$0xff]
    %v3093 = vld [vmem:[#allocation7 + $0x8] sm:$0xff]
    %v3094 = vld [vmem:[#allocation7 + $0x10] sm:$0xff]
    %v3095 = vld [vmem:[#allocation7 + $0x18] sm:$0xff]
    %v3096 = vld [vmem:[#allocation7 + $0x20] sm:$0xff]
    %v3097 = vld [vmem:[#allocation7 + $0x28] sm:$0xff]
    %v3098 = vld [vmem:[#allocation7 + $0x30] sm:$0xff]
    %v3099 = vld [vmem:[#allocation7 + $0x38] sm:$0xff]
    %v3100 = vld [vmem:[#allocation7 + $0x40] sm:$0xff]
    %v3101 = vld [vmem:[#allocation7 + $0x48] sm:$0xff]
    %v3102 = vld [vmem:[#allocation7 + $0x50] sm:$0xff]
    %v3103 = vld [vmem:[#allocation7 + $0x58] sm:$0xff]
    %v3104 = vld [vmem:[#allocation7 + $0x60] sm:$0xff]
    %v3105 = vld [vmem:[#allocation7 + $0x68] sm:$0xff]
    %v3106 = vld [vmem:[#allocation7 + $0x70] sm:$0xff]
    %v3107 = vld [vmem:[#allocation7 + $0x78] sm:$0xff]
    %3108 = vmatpush.msra.mxu0 %v3107
    %3109 = vmatpush.msra.mxu0 %v3106
    %3110 = vmatpush.msra.mxu0 %v3105
    %3111 = vmatpush.msra.mxu0 %v3104
    %3112 = vmatpush.msra.mxu0 %v3103
    %3113 = vmatpush.msra.mxu0 %v3102
    %3114 = vmatpush.msra.mxu0 %v3101
    %3115 = vmatpush.msra.mxu0 %v3100
    %3116 = vmatpush.msra.mxu0 %v3099
    %3117 = vmatpush.msra.mxu0 %v3098
    %3118 = vmatpush.msra.mxu0 %v3097
    %3119 = vmatpush.msra.mxu0 %v3096
    %3120 = vmatpush.msra.mxu0 %v3095
    %3121 = vmatpush.msra.mxu0 %v3094
    %3122 = vmatpush.msra.mxu0 %v3093
    %3123 = vmatpush.msra.mxu0 %v3092
    %3124 = vmatmul.f32.gmra.mxu0 %v3076
    %v3125 = vpop.f32.mrf.mxu0
    %v3126 = vadd.f32 0.0, %v3125
    %3127 = vmatmul.f32.gmra.mxu0 %v3077
    %v3128 = vpop.f32.mrf.mxu0
    %v3129 = vadd.f32 0.0, %v3128
    %3130 = vdwg.mxu0
    %3131 = vst [vmem:[#allocation8] sm:$0xff] %v3126
    %3132 = vst [vmem:[#allocation8 + $0x8] sm:$0xff] %v3129
    // Predicated region
    $region26: #{tpu_custom_call.1} parent=1 // pred_check
      _
    $region27: #{tpu_custom_call.1} parent=1 // pred_check_branch
      %3134 = sbr.rel (0) target = $region29
    $region28: #{tpu_custom_call.1} parent=1 // pred_region
      %3136 = vsyncadd [#allocation4], 0
      %s3137 = sshll.u32 [#allocation8], 4
      %s3138 = int_to_ptr.vmem [resolvable:$true] %s3137
      %s3139 = sshll.u32 %s3, 4
      %s3140 = int_to_ptr.hbm [resolvable:$true] %s3139
      %3145 = dma.vmem_to_hbm [thread:$0]  %s3138, 256, %s3140, [#allocation4], 128, 128, 8
    $region29: #{tpu_custom_call.1} parent=1 // pred_fallthru
      _
    // Predicated region
    $region30: #{tpu_custom_call.1} parent=1 // pred_check
      _
    $region31: #{tpu_custom_call.1} parent=1 // pred_check_branch
      %3147 = sbr.rel (0) target = $region33
    $region32: #{tpu_custom_call.1} parent=1 // pred_region
      %3149 = dma.done [#allocation4], 256
    $region33: #{tpu_custom_call.1} parent=1 // pred_fallthru
      _
    %3150 = vsyncpa [#allocation3], 1
    %3151 = vsyncpa [#allocation6], 1
    %3152 = vsyncpa [#allocation4], 1

</llo_original>
